<compile_context>
chip_gen: v6e
topology: v6e:2x2x1
jax: 0.10.0
libtpu: 0.0.40
codegen_flags: <defaults>
</compile_context>

<pallas_src>
import jax
import jax.numpy as jnp
from jax.experimental import pallas as pl
from jax.experimental.pallas import tpu as pltpu

# ----------------------------- model dims (small) ---------------------------
B = 2            # batch
S = 8            # sequence length
H = 32           # hidden size (stands in for 768)
NH = 4           # attention heads
HD = H // NH     # head dim
F = 64           # FFN inner size
VOCAB = 50
N_LAYERS = 2
NUM_CLASSES = 51
C_PAD = 128      # classifier output padded to a lane-dense width
LN_EPS = 1e-12

# Lane-aligned packed-weight slab layout (per layer / head pseudo-layer).
WSLAB_ROWS = max(H, F)         # 64
WSLAB_COLS = 512
COL_QKV = 0                    # [Wq*scale | Wk | Wv]  -> cols [0, 96)
COL_WO = 128                   # Wo (H,H)              -> cols [128, 160)
COL_W1 = 256                   # W1 (H,F)              -> cols [256, 320)
COL_W2 = 384                   # W2 (F,H)              -> cols [384, 416)
COL_WCLS = 0                   # head: Wcls padded     -> cols [0, 128)
COL_WPRE = 128                 # head: Wpre (H,H)      -> cols [128, 160)


def _layernorm(x, gamma, beta):
    mean = jnp.mean(x, axis=-1, keepdims=True)
    var = jnp.mean(jnp.square(x - mean), axis=-1, keepdims=True)
    return (x - mean) * jax.lax.rsqrt(var + LN_EPS) * gamma + beta


# ----------------------------- fused forward kernel -------------------------
def fused_forward_kernel(x_ref, nb_ref, w_ref, b_ref, out_ref):
    """One batch element per grid step (parallel across TensorCores on v7x)."""
    x = x_ref[0]                       # (S, H) f32 activations
    neg = nb_ref[...]                  # (1, 1, S) additive key-mask bias, f32

    for l in range(N_LAYERS):          # static unroll; all weights VMEM-resident
        # Lane-aligned sub-weight views (bf16) and bias / LN rows (f32).
        wqkv = w_ref[l, :H, COL_QKV:COL_QKV + 3 * H]     # (H, 3H)
        wo = w_ref[l, :H, COL_WO:COL_WO + H]             # (H, H)
        w1 = w_ref[l, :H, COL_W1:COL_W1 + F]             # (H, F)
        w2 = w_ref[l, :F, COL_W2:COL_W2 + H]             # (F, H)
        b_qkv = b_ref[l, 0, :3 * H]
        b_o = b_ref[l, 1, :H]
        ln1_g = b_ref[l, 2, :H]
        ln1_b = b_ref[l, 3, :H]
        b1 = b_ref[l, 4, :F]
        b2 = b_ref[l, 5, :H]
        ln2_g = b_ref[l, 6, :H]
        ln2_b = b_ref[l, 7, :H]

        # Fused QKV projection: one (S, H) x (H, 3H) MXU op, f32 accumulation.
        # (1/sqrt(HD) is pre-folded into the Wq columns / b_q at pack time.)
        qkv = jnp.dot(x.astype(jnp.bfloat16), wqkv,
                      preferred_element_type=jnp.float32) + b_qkv   # (S, 3H)

        # All heads at once: batched (over h) score / context einsums plus a
        # single Wo matmul -- no per-head Python loop or K=8 matmuls.
        q = qkv[:, 0 * H:1 * H].reshape(S, NH, HD).astype(jnp.bfloat16)
        k = qkv[:, 1 * H:2 * H].reshape(S, NH, HD).astype(jnp.bfloat16)
        v = qkv[:, 2 * H:3 * H].reshape(S, NH, HD).astype(jnp.bfloat16)

        s = jnp.einsum("qhd,khd->hqk", q, k,
                       preferred_element_type=jnp.float32)          # (NH, S, S)
        s = s + neg                                                  # key mask
        s = s - jnp.max(s, axis=-1, keepdims=True)
        e = jnp.exp(s)
        p = e * pl.reciprocal(jnp.sum(e, axis=-1, keepdims=True), approx=True)
        ctx = jnp.einsum("hqk,khd->qhd", p.astype(jnp.bfloat16), v,
                         preferred_element_type=jnp.float32)         # (S, NH, HD)
        attn = jnp.dot(ctx.reshape(S, H).astype(jnp.bfloat16), wo,
                       preferred_element_type=jnp.float32) + b_o     # (S, H)

        h1 = _layernorm(x + attn, ln1_g, ln1_b)

        ff = jnp.dot(h1.astype(jnp.bfloat16), w1,
                     preferred_element_type=jnp.float32) + b1
        # TODO(synk): real FlauBERT uses exact (erf) GELU; tanh approximation
        #             kept to match the in-file JAX reference.
        ff = jax.nn.gelu(ff, approximate=True)
        ff = jnp.dot(ff.astype(jnp.bfloat16), w2,
                     preferred_element_type=jnp.float32) + b2

        x = _layernorm(h1 + ff, ln2_g, ln2_b)

    # Classification head on the CLS token (row 0 of this batch element).
    cls = x[0:1, :]                                                  # (1, H)
    w_cls = w_ref[N_LAYERS, :H, COL_WCLS:COL_WCLS + C_PAD]           # (H, 128)
    w_pre = w_ref[N_LAYERS, :H, COL_WPRE:COL_WPRE + H]               # (H, H)
    b_pre = b_ref[N_LAYERS, 0, :H]
    b_cls = b_ref[N_LAYERS, 1, :]

    pooler = jnp.dot(cls.astype(jnp.bfloat16), w_pre,
                     preferred_element_type=jnp.float32) + b_pre
    sig = jax.nn.sigmoid(pooler)
    # nn.Dropout(0.3): identity in eval/inference mode.
    # TODO(synk): training-mode dropout would use pltpu.prng_seed +
    #             pltpu.stateful_bernoulli for the mask.
    logits = jnp.dot(sig.astype(jnp.bfloat16), w_cls,
                     preferred_element_type=jnp.float32) + b_cls     # (1, 128)

    # Full (8, 128) lane-dense tile store (unmasked); wrapper reads row 0.
    out_ref[...] = jnp.broadcast_to(logits.reshape(1, 1, C_PAD), (1, 8, C_PAD))


# ----------------------------- parameter packing (once, at init) ------------
def pack_params(params):
    """Pack all transformer + head weights into 128-lane-aligned slabs.

    Called ONCE at init -- never inside the per-call jitted forward.
    """
    scale = HD ** -0.5
    wslab = jnp.zeros((N_LAYERS + 1, WSLAB_ROWS, WSLAB_COLS), jnp.float32)
    bias = jnp.zeros((N_LAYERS + 1, 8, 128), jnp.float32)
    for l, p in enumerate(params["layers"]):
        wslab = wslab.at[l, :H, COL_QKV + 0 * H:COL_QKV + 1 * H].set(
            p["w_attn"][0] * scale)                          # Wq (scale folded)
        wslab = wslab.at[l, :H, COL_QKV + 1 * H:COL_QKV + 2 * H].set(
            p["w_attn"][1])                                  # Wk
        wslab = wslab.at[l, :H, COL_QKV + 2 * H:COL_QKV + 3 * H].set(
            p["w_attn"][2])                                  # Wv
        wslab = wslab.at[l, :H, COL_WO:COL_WO + H].set(p["w_attn"][3])
        wslab = wslab.at[l, :H, COL_W1:COL_W1 + F].set(p["w_ffn1"])
        wslab = wslab.at[l, :F, COL_W2:COL_W2 + H].set(p["w_ffn2"])
        bias = bias.at[l, 0, 0 * H:1 * H].set(p["b_attn"][0] * scale)
        bias = bias.at[l, 0, 1 * H:2 * H].set(p["b_attn"][1])
        bias = bias.at[l, 0, 2 * H:3 * H].set(p["b_attn"][2])
        bias = bias.at[l, 1, :H].set(p["b_attn"][3])
        bias = bias.at[l, 2, :H].set(p["ln_g"][0])
        bias = bias.at[l, 3, :H].set(p["ln_b"][0])
        bias = bias.at[l, 4, :F].set(p["b_ffn1"][0])
        bias = bias.at[l, 5, :H].set(p["b_ffn2"][0])
        bias = bias.at[l, 6, :H].set(p["ln_g"][1])
        bias = bias.at[l, 7, :H].set(p["ln_b"][1])
    # Head (pre_classifier + linear) as a pseudo-layer.
    wslab = wslab.at[N_LAYERS, :H, COL_WCLS:COL_WCLS + NUM_CLASSES].set(
        params["w_cls"])
    wslab = wslab.at[N_LAYERS, :H, COL_WPRE:COL_WPRE + H].set(params["w_pre"])
    bias = bias.at[N_LAYERS, 0, :H].set(params["b_pre"][0])
    bias = bias.at[N_LAYERS, 1, :NUM_CLASSES].set(params["b_cls"][0])

    return (params["tok_emb"], params["pos_emb"], params["emb_ln_g"],
            params["emb_ln_b"], wslab.astype(jnp.bfloat16), bias)


# ----------------------------- parameters (deterministic) -------------------
def init_params(key):
    std = 0.02

    def rnd(k, shape):
        return jax.random.normal(k, shape, jnp.float32) * std

    ks = iter(jax.random.split(key, 64))
    params = {
        "tok_emb": rnd(next(ks), (VOCAB, H)),
        "pos_emb": rnd(next(ks), (S, H)),
        "emb_ln_g": 1.0 + rnd(next(ks), (H,)),
        "emb_ln_b": rnd(next(ks), (H,)),
        "layers": [],
        "w_pre": rnd(next(ks), (H, H)),
        "b_pre": rnd(next(ks), (1, H)),
        "w_cls": rnd(next(ks), (H, NUM_CLASSES)),
        "b_cls": rnd(next(ks), (1, NUM_CLASSES)),
    }
    for _ in range(N_LAYERS):
        params["layers"].append({
            "w_attn": rnd(next(ks), (4, H, H)),
            "b_attn": rnd(next(ks), (4, H)),
            "ln_g": 1.0 + rnd(next(ks), (2, H)),
            "ln_b": rnd(next(ks), (2, H)),
            "w_ffn1": rnd(next(ks), (H, F)),
            "b_ffn1": rnd(next(ks), (1, F)),
            "w_ffn2": rnd(next(ks), (F, H)),
            "b_ffn2": rnd(next(ks), (1, H)),
        })
    return params


# ----------------------------- full forward (Pallas) ------------------------
@jax.jit
def flaubert_class_forward(packed, input_ids, attn_mask):
    tok_emb, pos_emb, emb_ln_g, emb_ln_b, wslab, bias_slab = packed

    # Embedding gather + embedding layernorm + mask bias: cheap XLA glue.
    x = tok_emb[input_ids] + pos_emb[None, :, :]
    x = _layernorm(x, emb_ln_g, emb_ln_b)                        # (B, S, H) f32
    neg_bias = ((attn_mask.astype(jnp.float32) - 1.0) * 1e9).reshape(B, 1, S)

    out_pad = pl.pallas_call(
        fused_forward_kernel,
        out_shape=jax.ShapeDtypeStruct((B, 8, C_PAD), jnp.float32),
        grid=(B,),
        in_specs=[
            pl.BlockSpec((1, S, H), lambda b: (b, 0, 0)),        # activations
            pl.BlockSpec((1, 1, S), lambda b: (b, 0, 0)),        # mask bias
            pl.BlockSpec((N_LAYERS + 1, WSLAB_ROWS, WSLAB_COLS),
                         lambda b: (0, 0, 0)),                   # weights (bf16)
            pl.BlockSpec((N_LAYERS + 1, 8, 128), lambda b: (0, 0, 0)),  # biases/LN
        ],
        out_specs=pl.BlockSpec((1, 8, C_PAD), lambda b: (b, 0, 0)),
        compiler_params=pltpu.CompilerParams(
            dimension_semantics=("parallel",)),                  # 2 TCs on v7x
    )(x, neg_bias, wslab, bias_slab)
    return out_pad[:, 0, :NUM_CLASSES]


# ----------------------------- pure-JAX reference (f32) ---------------------
def reference_forward(params, input_ids, attn_mask):
    x = params["tok_emb"][input_ids] + params["pos_emb"][None, :, :]
    x = _layernorm(x, params["emb_ln_g"], params["emb_ln_b"])
    neg = (attn_mask.astype(jnp.float32) - 1.0) * 1e9            # (B, S)
    for p in params["layers"]:
        q = x @ p["w_attn"][0] + p["b_attn"][0]
        k = x @ p["w_attn"][1] + p["b_attn"][1]
        v = x @ p["w_attn"][2] + p["b_attn"][2]
        q = q.reshape(B, S, NH, HD)
        k = k.reshape(B, S, NH, HD)
        v = v.reshape(B, S, NH, HD)
        s = jnp.einsum("bqhd,bkhd->bhqk", q, k) / jnp.sqrt(jnp.float32(HD))
        s = s + neg[:, None, None, :]
        pr = jax.nn.softmax(s, axis=-1)
        ctx = jnp.einsum("bhqk,bkhd->bqhd", pr, v).reshape(B, S, H)
        attn = ctx @ p["w_attn"][3] + p["b_attn"][3]
        h1 = _layernorm(x + attn, p["ln_g"][0], p["ln_b"][0])
        ff = jax.nn.gelu(h1 @ p["w_ffn1"] + p["b_ffn1"][0], approximate=True)
        ff = ff @ p["w_ffn2"] + p["b_ffn2"][0]
        x = _layernorm(h1 + ff, p["ln_g"][1], p["ln_b"][1])
    cls_tok = x[:, 0]
    pooler = jax.nn.sigmoid(cls_tok @ params["w_pre"] + params["b_pre"][0])
    return pooler @ params["w_cls"] + params["b_cls"][0]


# ----------------------------- main ------------------------------------------
if __name__ == "__main__":
    key = jax.random.PRNGKey(0)
    k_param, k_ids = jax.random.split(key)
    params = init_params(k_param)
    packed = pack_params(params)           # packed ONCE, outside the jitted call

    input_ids = jax.random.randint(k_ids, (B, S), 0, VOCAB, dtype=jnp.int32)
    attn_mask = jnp.ones((B, S), jnp.int32).at[1, -2:].set(0)  # pad last 2 of seq 1

    out = flaubert_class_forward(packed, input_ids, attn_mask)
    out = jax.block_until_ready(out)
    assert out.shape == (B, NUM_CLASSES), out.shape

    ref = reference_forward(params, input_ids, attn_mask)
    # bf16 MXU operands + approx reciprocal vs f32 reference: relaxed tolerance.
    if not jnp.allclose(out, ref, atol=2e-3, rtol=2e-2):
        max_err = jnp.max(jnp.abs(out - ref))
        raise AssertionError(
            f"Pallas output does not match JAX reference (max abs err {max_err})")

    print("KERNEL_OK")
</pallas_src>

<mosaic_0001>
module attributes {stable_mosaic.version = 11 : i64} {
  func.func @fused_forward_kernel(%arg0: i32, %arg1: memref<1x8x32xf32, #tpu.memory_space<vmem>>, %arg2: memref<1x1x8xf32, #tpu.memory_space<vmem>>, %arg3: memref<3x64x512xbf16, #tpu.memory_space<vmem>>, %arg4: memref<3x8x128xf32, #tpu.memory_space<vmem>>, %arg5: memref<1x8x128xf32, #tpu.memory_space<vmem>>) attributes {dimension_semantics = [#tpu.dimension_semantics<parallel>], iteration_bounds = array<i64: 2>, scalar_prefetch = 0 : i64, scratch_operands = 0 : i64, tpu.core_type = #tpu.core_type<tc>, window_params = [{transform_indices = @transform_0, window_bounds = array<i64: 1, 8, 32>}, {transform_indices = @transform_1, window_bounds = array<i64: 1, 1, 8>}, {pipeline_mode = #tpu.pipeline_mode<synchronous>, transform_indices = @transform_2, window_bounds = array<i64: 3, 64, 512>}, {pipeline_mode = #tpu.pipeline_mode<synchronous>, transform_indices = @transform_3, window_bounds = array<i64: 3, 8, 128>}, {transform_indices = @transform_4, window_bounds = array<i64: 1, 8, 128>}]} {
    %c0 = arith.constant 0 : index
    %c0_0 = arith.constant 0 : index
    %c0_1 = arith.constant 0 : index
    %0 = vector.load %arg1[%c0, %c0_0, %c0_1] : memref<1x8x32xf32, #tpu.memory_space<vmem>>, vector<1x8x32xf32>
    %1 = vector.shape_cast %0 : vector<1x8x32xf32> to vector<8x32xf32>
    %c0_2 = arith.constant 0 : index
    %c0_3 = arith.constant 0 : index
    %c0_4 = arith.constant 0 : index
    %2 = vector.load %arg2[%c0_2, %c0_3, %c0_4] : memref<1x1x8xf32, #tpu.memory_space<vmem>>, vector<1x1x8xf32>
    %c0_5 = arith.constant 0 : index
    %c0_6 = arith.constant 0 : index
    %c0_7 = arith.constant 0 : index
    %3 = vector.load %arg3[%c0_5, %c0_6, %c0_7] : memref<3x64x512xbf16, #tpu.memory_space<vmem>>, vector<1x32x96xbf16>
    %4 = vector.shape_cast %3 : vector<1x32x96xbf16> to vector<32x96xbf16>
    %c0_8 = arith.constant 0 : index
    %c0_9 = arith.constant 0 : index
    %c128 = arith.constant 128 : index
    %5 = vector.load %arg3[%c0_8, %c0_9, %c128] : memref<3x64x512xbf16, #tpu.memory_space<vmem>>, vector<1x32x32xbf16>
    %6 = vector.shape_cast %5 : vector<1x32x32xbf16> to vector<32x32xbf16>
    %c0_10 = arith.constant 0 : index
    %c0_11 = arith.constant 0 : index
    %c256 = arith.constant 256 : index
    %7 = vector.load %arg3[%c0_10, %c0_11, %c256] : memref<3x64x512xbf16, #tpu.memory_space<vmem>>, vector<1x32x64xbf16>
    %8 = vector.shape_cast %7 : vector<1x32x64xbf16> to vector<32x64xbf16>
    %c0_12 = arith.constant 0 : index
    %c0_13 = arith.constant 0 : index
    %c384 = arith.constant 384 : index
    %9 = vector.load %arg3[%c0_12, %c0_13, %c384] : memref<3x64x512xbf16, #tpu.memory_space<vmem>>, vector<1x64x32xbf16>
    %10 = vector.shape_cast %9 : vector<1x64x32xbf16> to vector<64x32xbf16>
    %c0_14 = arith.constant 0 : index
    %c0_15 = arith.constant 0 : index
    %c0_16 = arith.constant 0 : index
    %11 = vector.load %arg4[%c0_14, %c0_15, %c0_16] : memref<3x8x128xf32, #tpu.memory_space<vmem>>, vector<1x1x96xf32>
    %12 = vector.shape_cast %11 : vector<1x1x96xf32> to vector<96xf32>
    %c0_17 = arith.constant 0 : index
    %c1 = arith.constant 1 : index
    %c0_18 = arith.constant 0 : index
    %13 = vector.load %arg4[%c0_17, %c1, %c0_18] : memref<3x8x128xf32, #tpu.memory_space<vmem>>, vector<1x1x32xf32>
    %14 = vector.shape_cast %13 : vector<1x1x32xf32> to vector<32xf32>
    %c0_19 = arith.constant 0 : index
    %c2 = arith.constant 2 : index
    %c0_20 = arith.constant 0 : index
    %15 = vector.load %arg4[%c0_19, %c2, %c0_20] : memref<3x8x128xf32, #tpu.memory_space<vmem>>, vector<1x1x32xf32>
    %16 = vector.shape_cast %15 : vector<1x1x32xf32> to vector<32xf32>
    %c0_21 = arith.constant 0 : index
    %c3 = arith.constant 3 : index
    %c0_22 = arith.constant 0 : index
    %17 = vector.load %arg4[%c0_21, %c3, %c0_22] : memref<3x8x128xf32, #tpu.memory_space<vmem>>, vector<1x1x32xf32>
    %18 = vector.shape_cast %17 : vector<1x1x32xf32> to vector<32xf32>
    %c0_23 = arith.constant 0 : index
    %c4 = arith.constant 4 : index
    %c0_24 = arith.constant 0 : index
    %19 = vector.load %arg4[%c0_23, %c4, %c0_24] : memref<3x8x128xf32, #tpu.memory_space<vmem>>, vector<1x1x64xf32>
    %20 = vector.shape_cast %19 : vector<1x1x64xf32> to vector<64xf32>
    %c0_25 = arith.constant 0 : index
    %c5 = arith.constant 5 : index
    %c0_26 = arith.constant 0 : index
    %21 = vector.load %arg4[%c0_25, %c5, %c0_26] : memref<3x8x128xf32, #tpu.memory_space<vmem>>, vector<1x1x32xf32>
    %22 = vector.shape_cast %21 : vector<1x1x32xf32> to vector<32xf32>
    %c0_27 = arith.constant 0 : index
    %c6 = arith.constant 6 : index
    %c0_28 = arith.constant 0 : index
    %23 = vector.load %arg4[%c0_27, %c6, %c0_28] : memref<3x8x128xf32, #tpu.memory_space<vmem>>, vector<1x1x32xf32>
    %24 = vector.shape_cast %23 : vector<1x1x32xf32> to vector<32xf32>
    %c0_29 = arith.constant 0 : index
    %c7 = arith.constant 7 : index
    %c0_30 = arith.constant 0 : index
    %25 = vector.load %arg4[%c0_29, %c7, %c0_30] : memref<3x8x128xf32, #tpu.memory_space<vmem>>, vector<1x1x32xf32>
    %26 = vector.shape_cast %25 : vector<1x1x32xf32> to vector<32xf32>
    %27 = arith.truncf %1 : vector<8x32xf32> to vector<8x32xbf16>
    %cst = arith.constant dense<0.000000e+00> : vector<8x96xf32>
    %28 = tpu.matmul %27, %4, %cst {dimension_numbers = #tpu.dot_dimension_numbers<[1], [0], [0], [1], [0, 0, 1, 1], [], []>} : vector<8x32xbf16>, vector<32x96xbf16>, vector<8x96xf32> -> vector<8x96xf32>
    %29 = vector.shape_cast %12 : vector<96xf32> to vector<1x96xf32>
    %30 = vector.broadcast %29 : vector<1x96xf32> to vector<8x96xf32>
    %31 = arith.addf %28, %30 : vector<8x96xf32>
    %32 = vector.extract_strided_slice %31 {offsets = [0, 0], sizes = [8, 32], strides = [1, 1]} : vector<8x96xf32> to vector<8x32xf32>
    %33 = vector.shape_cast %32 : vector<8x32xf32> to vector<8x4x8xf32>
    %34 = arith.truncf %33 : vector<8x4x8xf32> to vector<8x4x8xbf16>
    %35 = vector.extract_strided_slice %31 {offsets = [0, 32], sizes = [8, 32], strides = [1, 1]} : vector<8x96xf32> to vector<8x32xf32>
    %36 = vector.shape_cast %35 : vector<8x32xf32> to vector<8x4x8xf32>
    %37 = arith.truncf %36 : vector<8x4x8xf32> to vector<8x4x8xbf16>
    %38 = vector.extract_strided_slice %31 {offsets = [0, 64], sizes = [8, 32], strides = [1, 1]} : vector<8x96xf32> to vector<8x32xf32>
    %39 = vector.shape_cast %38 : vector<8x32xf32> to vector<8x4x8xf32>
    %40 = arith.truncf %39 : vector<8x4x8xf32> to vector<8x4x8xbf16>
    "tpu.trace_start"() <{level = 10 : i32, message = "qhd,khd->hqk"}> : () -> ()
    %cst_31 = arith.constant dense<0.000000e+00> : vector<4x8x8xf32>
    %41 = tpu.matmul %34, %37, %cst_31 {dimension_numbers = #tpu.dot_dimension_numbers<[2], [2], [0], [0], [0, 1, 0, 0, 1, 0], [1], [1]>} : vector<8x4x8xbf16>, vector<8x4x8xbf16>, vector<4x8x8xf32> -> vector<4x8x8xf32>
    "tpu.trace_stop"() : () -> ()
    %42 = vector.broadcast %2 : vector<1x1x8xf32> to vector<4x8x8xf32>
    %43 = arith.addf %41, %42 : vector<4x8x8xf32>
    %cst_32 = arith.constant dense<0xFF800000> : vector<4x8xf32>
    %44 = vector.multi_reduction <maximumf>, %43, %cst_32 [2] : vector<4x8x8xf32> to vector<4x8xf32>
    %45 = vector.shape_cast %44 : vector<4x8xf32> to vector<4x8x1xf32>
    %46 = vector.broadcast %45 : vector<4x8x1xf32> to vector<4x8x8xf32>
    %47 = arith.subf %43, %46 : vector<4x8x8xf32>
    %48 = math.exp %47 : vector<4x8x8xf32>
    %cst_33 = arith.constant dense<0.000000e+00> : vector<4x8xf32>
    %49 = vector.multi_reduction <add>, %48, %cst_33 [2] : vector<4x8x8xf32> to vector<4x8xf32>
    %50 = vector.shape_cast %49 : vector<4x8xf32> to vector<4x8x1xf32>
    %51 = tpu.reciprocal %50 {approx = true} : vector<4x8x1xf32> -> vector<4x8x1xf32>
    %52 = vector.broadcast %51 : vector<4x8x1xf32> to vector<4x8x8xf32>
    %53 = arith.mulf %48, %52 : vector<4x8x8xf32>
    %54 = arith.truncf %53 : vector<4x8x8xf32> to vector<4x8x8xbf16>
    "tpu.trace_start"() <{level = 10 : i32, message = "hqk,khd->qhd"}> : () -> ()
    %cst_34 = arith.constant dense<0.000000e+00> : vector<4x8x8xf32>
    %55 = tpu.matmul %40, %54, %cst_34 {dimension_numbers = #tpu.dot_dimension_numbers<[0], [2], [2], [1], [0, 1, 0, 2, 1, 1], [1], [0]>} : vector<8x4x8xbf16>, vector<4x8x8xbf16>, vector<4x8x8xf32> -> vector<4x8x8xf32>
    %56 = tpu.transpose %55, [2, 0, 1] : vector<4x8x8xf32> -> vector<8x4x8xf32>
    "tpu.trace_stop"() : () -> ()
    %57 = vector.shape_cast %56 : vector<8x4x8xf32> to vector<8x32xf32>
    %58 = arith.truncf %57 : vector<8x32xf32> to vector<8x32xbf16>
    %cst_35 = arith.constant dense<0.000000e+00> : vector<8x32xf32>
    %59 = tpu.matmul %58, %6, %cst_35 {dimension_numbers = #tpu.dot_dimension_numbers<[1], [0], [0], [1], [0, 0, 1, 1], [], []>} : vector<8x32xbf16>, vector<32x32xbf16>, vector<8x32xf32> -> vector<8x32xf32>
    %60 = vector.shape_cast %14 : vector<32xf32> to vector<1x32xf32>
    %61 = vector.broadcast %60 : vector<1x32xf32> to vector<8x32xf32>
    %62 = arith.addf %59, %61 : vector<8x32xf32>
    %63 = arith.addf %1, %62 : vector<8x32xf32>
    %cst_36 = arith.constant dense<0.000000e+00> : vector<8xf32>
    %64 = vector.multi_reduction <add>, %63, %cst_36 [1] : vector<8x32xf32> to vector<8xf32>
    %65 = vector.shape_cast %64 : vector<8xf32> to vector<8x1xf32>
    %cst_37 = arith.constant 3.200000e+01 : f32
    %66 = vector.broadcast %cst_37 : f32 to vector<8x1xf32>
    %67 = arith.divf %65, %66 : vector<8x1xf32>
    %68 = vector.broadcast %67 : vector<8x1xf32> to vector<8x32xf32>
    %69 = arith.subf %63, %68 : vector<8x32xf32>
    %70 = arith.mulf %69, %69 : vector<8x32xf32>
    %cst_38 = arith.constant dense<0.000000e+00> : vector<8xf32>
    %71 = vector.multi_reduction <add>, %70, %cst_38 [1] : vector<8x32xf32> to vector<8xf32>
    %72 = vector.shape_cast %71 : vector<8xf32> to vector<8x1xf32>
    %cst_39 = arith.constant 3.200000e+01 : f32
    %73 = vector.broadcast %cst_39 : f32 to vector<8x1xf32>
    %74 = arith.divf %72, %73 : vector<8x1xf32>
    %75 = vector.broadcast %67 : vector<8x1xf32> to vector<8x32xf32>
    %76 = arith.subf %63, %75 : vector<8x32xf32>
    %cst_40 = arith.constant 9.99999996E-13 : f32
    %77 = vector.broadcast %cst_40 : f32 to vector<8x1xf32>
    %78 = arith.addf %74, %77 : vector<8x1xf32>
    %79 = math.rsqrt %78 : vector<8x1xf32>
    %80 = vector.broadcast %79 : vector<8x1xf32> to vector<8x32xf32>
    %81 = arith.mulf %76, %80 : vector<8x32xf32>
    %82 = vector.shape_cast %16 : vector<32xf32> to vector<1x32xf32>
    %83 = vector.broadcast %82 : vector<1x32xf32> to vector<8x32xf32>
    %84 = arith.mulf %81, %83 : vector<8x32xf32>
    %85 = vector.shape_cast %18 : vector<32xf32> to vector<1x32xf32>
    %86 = vector.broadcast %85 : vector<1x32xf32> to vector<8x32xf32>
    %87 = arith.addf %84, %86 : vector<8x32xf32>
    %88 = arith.truncf %87 : vector<8x32xf32> to vector<8x32xbf16>
    %cst_41 = arith.constant dense<0.000000e+00> : vector<8x64xf32>
    %89 = tpu.matmul %88, %8, %cst_41 {dimension_numbers = #tpu.dot_dimension_numbers<[1], [0], [0], [1], [0, 0, 1, 1], [], []>} : vector<8x32xbf16>, vector<32x64xbf16>, vector<8x64xf32> -> vector<8x64xf32>
    %90 = vector.shape_cast %20 : vector<64xf32> to vector<1x64xf32>
    %91 = vector.broadcast %90 : vector<1x64xf32> to vector<8x64xf32>
    %92 = arith.addf %89, %91 : vector<8x64xf32>
    %93 = arith.mulf %92, %92 : vector<8x64xf32>
    %94 = arith.mulf %92, %93 : vector<8x64xf32>
    %cst_42 = arith.constant 4.471500e-02 : f32
    %95 = vector.broadcast %cst_42 : f32 to vector<8x64xf32>
    %96 = arith.mulf %95, %94 : vector<8x64xf32>
    %97 = arith.addf %92, %96 : vector<8x64xf32>
    %cst_43 = arith.constant 0.797884583 : f32
    %98 = vector.broadcast %cst_43 : f32 to vector<8x64xf32>
    %99 = arith.mulf %98, %97 : vector<8x64xf32>
    %100 = math.tanh %99 : vector<8x64xf32>
    %cst_44 = arith.constant 1.000000e+00 : f32
    %101 = vector.broadcast %cst_44 : f32 to vector<8x64xf32>
    %102 = arith.addf %101, %100 : vector<8x64xf32>
    %cst_45 = arith.constant 5.000000e-01 : f32
    %103 = vector.broadcast %cst_45 : f32 to vector<8x64xf32>
    %104 = arith.mulf %103, %102 : vector<8x64xf32>
    %105 = arith.mulf %92, %104 : vector<8x64xf32>
    %106 = arith.truncf %105 : vector<8x64xf32> to vector<8x64xbf16>
    %cst_46 = arith.constant dense<0.000000e+00> : vector<8x32xf32>
    %107 = tpu.matmul %106, %10, %cst_46 {dimension_numbers = #tpu.dot_dimension_numbers<[1], [0], [0], [1], [0, 0, 1, 1], [], []>} : vector<8x64xbf16>, vector<64x32xbf16>, vector<8x32xf32> -> vector<8x32xf32>
    %108 = vector.shape_cast %22 : vector<32xf32> to vector<1x32xf32>
    %109 = vector.broadcast %108 : vector<1x32xf32> to vector<8x32xf32>
    %110 = arith.addf %107, %109 : vector<8x32xf32>
    %111 = arith.addf %87, %110 : vector<8x32xf32>
    %cst_47 = arith.constant dense<0.000000e+00> : vector<8xf32>
    %112 = vector.multi_reduction <add>, %111, %cst_47 [1] : vector<8x32xf32> to vector<8xf32>
    %113 = vector.shape_cast %112 : vector<8xf32> to vector<8x1xf32>
    %cst_48 = arith.constant 3.200000e+01 : f32
    %114 = vector.broadcast %cst_48 : f32 to vector<8x1xf32>
    %115 = arith.divf %113, %114 : vector<8x1xf32>
    %116 = vector.broadcast %115 : vector<8x1xf32> to vector<8x32xf32>
    %117 = arith.subf %111, %116 : vector<8x32xf32>
    %118 = arith.mulf %117, %117 : vector<8x32xf32>
    %cst_49 = arith.constant dense<0.000000e+00> : vector<8xf32>
    %119 = vector.multi_reduction <add>, %118, %cst_49 [1] : vector<8x32xf32> to vector<8xf32>
    %120 = vector.shape_cast %119 : vector<8xf32> to vector<8x1xf32>
    %cst_50 = arith.constant 3.200000e+01 : f32
    %121 = vector.broadcast %cst_50 : f32 to vector<8x1xf32>
    %122 = arith.divf %120, %121 : vector<8x1xf32>
    %123 = vector.broadcast %115 : vector<8x1xf32> to vector<8x32xf32>
    %124 = arith.subf %111, %123 : vector<8x32xf32>
    %cst_51 = arith.constant 9.99999996E-13 : f32
    %125 = vector.broadcast %cst_51 : f32 to vector<8x1xf32>
    %126 = arith.addf %122, %125 : vector<8x1xf32>
    %127 = math.rsqrt %126 : vector<8x1xf32>
    %128 = vector.broadcast %127 : vector<8x1xf32> to vector<8x32xf32>
    %129 = arith.mulf %124, %128 : vector<8x32xf32>
    %130 = vector.shape_cast %24 : vector<32xf32> to vector<1x32xf32>
    %131 = vector.broadcast %130 : vector<1x32xf32> to vector<8x32xf32>
    %132 = arith.mulf %129, %131 : vector<8x32xf32>
    %133 = vector.shape_cast %26 : vector<32xf32> to vector<1x32xf32>
    %134 = vector.broadcast %133 : vector<1x32xf32> to vector<8x32xf32>
    %135 = arith.addf %132, %134 : vector<8x32xf32>
    %c1_52 = arith.constant 1 : index
    %c0_53 = arith.constant 0 : index
    %c0_54 = arith.constant 0 : index
    %136 = vector.load %arg3[%c1_52, %c0_53, %c0_54] : memref<3x64x512xbf16, #tpu.memory_space<vmem>>, vector<1x32x96xbf16>
    %137 = vector.shape_cast %136 : vector<1x32x96xbf16> to vector<32x96xbf16>
    %c1_55 = arith.constant 1 : index
    %c0_56 = arith.constant 0 : index
    %c128_57 = arith.constant 128 : index
    %138 = vector.load %arg3[%c1_55, %c0_56, %c128_57] : memref<3x64x512xbf16, #tpu.memory_space<vmem>>, vector<1x32x32xbf16>
    %139 = vector.shape_cast %138 : vector<1x32x32xbf16> to vector<32x32xbf16>
    %c1_58 = arith.constant 1 : index
    %c0_59 = arith.constant 0 : index
    %c256_60 = arith.constant 256 : index
    %140 = vector.load %arg3[%c1_58, %c0_59, %c256_60] : memref<3x64x512xbf16, #tpu.memory_space<vmem>>, vector<1x32x64xbf16>
    %141 = vector.shape_cast %140 : vector<1x32x64xbf16> to vector<32x64xbf16>
    %c1_61 = arith.constant 1 : index
    %c0_62 = arith.constant 0 : index
    %c384_63 = arith.constant 384 : index
    %142 = vector.load %arg3[%c1_61, %c0_62, %c384_63] : memref<3x64x512xbf16, #tpu.memory_space<vmem>>, vector<1x64x32xbf16>
    %143 = vector.shape_cast %142 : vector<1x64x32xbf16> to vector<64x32xbf16>
    %c1_64 = arith.constant 1 : index
    %c0_65 = arith.constant 0 : index
    %c0_66 = arith.constant 0 : index
    %144 = vector.load %arg4[%c1_64, %c0_65, %c0_66] : memref<3x8x128xf32, #tpu.memory_space<vmem>>, vector<1x1x96xf32>
    %145 = vector.shape_cast %144 : vector<1x1x96xf32> to vector<96xf32>
    %c1_67 = arith.constant 1 : index
    %c1_68 = arith.constant 1 : index
    %c0_69 = arith.constant 0 : index
    %146 = vector.load %arg4[%c1_67, %c1_68, %c0_69] : memref<3x8x128xf32, #tpu.memory_space<vmem>>, vector<1x1x32xf32>
    %147 = vector.shape_cast %146 : vector<1x1x32xf32> to vector<32xf32>
    %c1_70 = arith.constant 1 : index
    %c2_71 = arith.constant 2 : index
    %c0_72 = arith.constant 0 : index
    %148 = vector.load %arg4[%c1_70, %c2_71, %c0_72] : memref<3x8x128xf32, #tpu.memory_space<vmem>>, vector<1x1x32xf32>
    %149 = vector.shape_cast %148 : vector<1x1x32xf32> to vector<32xf32>
    %c1_73 = arith.constant 1 : index
    %c3_74 = arith.constant 3 : index
    %c0_75 = arith.constant 0 : index
    %150 = vector.load %arg4[%c1_73, %c3_74, %c0_75] : memref<3x8x128xf32, #tpu.memory_space<vmem>>, vector<1x1x32xf32>
    %151 = vector.shape_cast %150 : vector<1x1x32xf32> to vector<32xf32>
    %c1_76 = arith.constant 1 : index
    %c4_77 = arith.constant 4 : index
    %c0_78 = arith.constant 0 : index
    %152 = vector.load %arg4[%c1_76, %c4_77, %c0_78] : memref<3x8x128xf32, #tpu.memory_space<vmem>>, vector<1x1x64xf32>
    %153 = vector.shape_cast %152 : vector<1x1x64xf32> to vector<64xf32>
    %c1_79 = arith.constant 1 : index
    %c5_80 = arith.constant 5 : index
    %c0_81 = arith.constant 0 : index
    %154 = vector.load %arg4[%c1_79, %c5_80, %c0_81] : memref<3x8x128xf32, #tpu.memory_space<vmem>>, vector<1x1x32xf32>
    %155 = vector.shape_cast %154 : vector<1x1x32xf32> to vector<32xf32>
    %c1_82 = arith.constant 1 : index
    %c6_83 = arith.constant 6 : index
    %c0_84 = arith.constant 0 : index
    %156 = vector.load %arg4[%c1_82, %c6_83, %c0_84] : memref<3x8x128xf32, #tpu.memory_space<vmem>>, vector<1x1x32xf32>
    %157 = vector.shape_cast %156 : vector<1x1x32xf32> to vector<32xf32>
    %c1_85 = arith.constant 1 : index
    %c7_86 = arith.constant 7 : index
    %c0_87 = arith.constant 0 : index
    %158 = vector.load %arg4[%c1_85, %c7_86, %c0_87] : memref<3x8x128xf32, #tpu.memory_space<vmem>>, vector<1x1x32xf32>
    %159 = vector.shape_cast %158 : vector<1x1x32xf32> to vector<32xf32>
    %160 = arith.truncf %135 : vector<8x32xf32> to vector<8x32xbf16>
    %cst_88 = arith.constant dense<0.000000e+00> : vector<8x96xf32>
    %161 = tpu.matmul %160, %137, %cst_88 {dimension_numbers = #tpu.dot_dimension_numbers<[1], [0], [0], [1], [0, 0, 1, 1], [], []>} : vector<8x32xbf16>, vector<32x96xbf16>, vector<8x96xf32> -> vector<8x96xf32>
    %162 = vector.shape_cast %145 : vector<96xf32> to vector<1x96xf32>
    %163 = vector.broadcast %162 : vector<1x96xf32> to vector<8x96xf32>
    %164 = arith.addf %161, %163 : vector<8x96xf32>
    %165 = vector.extract_strided_slice %164 {offsets = [0, 0], sizes = [8, 32], strides = [1, 1]} : vector<8x96xf32> to vector<8x32xf32>
    %166 = vector.shape_cast %165 : vector<8x32xf32> to vector<8x4x8xf32>
    %167 = arith.truncf %166 : vector<8x4x8xf32> to vector<8x4x8xbf16>
    %168 = vector.extract_strided_slice %164 {offsets = [0, 32], sizes = [8, 32], strides = [1, 1]} : vector<8x96xf32> to vector<8x32xf32>
    %169 = vector.shape_cast %168 : vector<8x32xf32> to vector<8x4x8xf32>
    %170 = arith.truncf %169 : vector<8x4x8xf32> to vector<8x4x8xbf16>
    %171 = vector.extract_strided_slice %164 {offsets = [0, 64], sizes = [8, 32], strides = [1, 1]} : vector<8x96xf32> to vector<8x32xf32>
    %172 = vector.shape_cast %171 : vector<8x32xf32> to vector<8x4x8xf32>
    %173 = arith.truncf %172 : vector<8x4x8xf32> to vector<8x4x8xbf16>
    "tpu.trace_start"() <{level = 10 : i32, message = "qhd,khd->hqk"}> : () -> ()
    %cst_89 = arith.constant dense<0.000000e+00> : vector<4x8x8xf32>
    %174 = tpu.matmul %167, %170, %cst_89 {dimension_numbers = #tpu.dot_dimension_numbers<[2], [2], [0], [0], [0, 1, 0, 0, 1, 0], [1], [1]>} : vector<8x4x8xbf16>, vector<8x4x8xbf16>, vector<4x8x8xf32> -> vector<4x8x8xf32>
    "tpu.trace_stop"() : () -> ()
    %175 = vector.broadcast %2 : vector<1x1x8xf32> to vector<4x8x8xf32>
    %176 = arith.addf %174, %175 : vector<4x8x8xf32>
    %cst_90 = arith.constant dense<0xFF800000> : vector<4x8xf32>
    %177 = vector.multi_reduction <maximumf>, %176, %cst_90 [2] : vector<4x8x8xf32> to vector<4x8xf32>
    %178 = vector.shape_cast %177 : vector<4x8xf32> to vector<4x8x1xf32>
    %179 = vector.broadcast %178 : vector<4x8x1xf32> to vector<4x8x8xf32>
    %180 = arith.subf %176, %179 : vector<4x8x8xf32>
    %181 = math.exp %180 : vector<4x8x8xf32>
    %cst_91 = arith.constant dense<0.000000e+00> : vector<4x8xf32>
    %182 = vector.multi_reduction <add>, %181, %cst_91 [2] : vector<4x8x8xf32> to vector<4x8xf32>
    %183 = vector.shape_cast %182 : vector<4x8xf32> to vector<4x8x1xf32>
    %184 = tpu.reciprocal %183 {approx = true} : vector<4x8x1xf32> -> vector<4x8x1xf32>
    %185 = vector.broadcast %184 : vector<4x8x1xf32> to vector<4x8x8xf32>
    %186 = arith.mulf %181, %185 : vector<4x8x8xf32>
    %187 = arith.truncf %186 : vector<4x8x8xf32> to vector<4x8x8xbf16>
    "tpu.trace_start"() <{level = 10 : i32, message = "hqk,khd->qhd"}> : () -> ()
    %cst_92 = arith.constant dense<0.000000e+00> : vector<4x8x8xf32>
    %188 = tpu.matmul %173, %187, %cst_92 {dimension_numbers = #tpu.dot_dimension_numbers<[0], [2], [2], [1], [0, 1, 0, 2, 1, 1], [1], [0]>} : vector<8x4x8xbf16>, vector<4x8x8xbf16>, vector<4x8x8xf32> -> vector<4x8x8xf32>
    %189 = tpu.transpose %188, [2, 0, 1] : vector<4x8x8xf32> -> vector<8x4x8xf32>
    "tpu.trace_stop"() : () -> ()
    %190 = vector.shape_cast %189 : vector<8x4x8xf32> to vector<8x32xf32>
    %191 = arith.truncf %190 : vector<8x32xf32> to vector<8x32xbf16>
    %cst_93 = arith.constant dense<0.000000e+00> : vector<8x32xf32>
    %192 = tpu.matmul %191, %139, %cst_93 {dimension_numbers = #tpu.dot_dimension_numbers<[1], [0], [0], [1], [0, 0, 1, 1], [], []>} : vector<8x32xbf16>, vector<32x32xbf16>, vector<8x32xf32> -> vector<8x32xf32>
    %193 = vector.shape_cast %147 : vector<32xf32> to vector<1x32xf32>
    %194 = vector.broadcast %193 : vector<1x32xf32> to vector<8x32xf32>
    %195 = arith.addf %192, %194 : vector<8x32xf32>
    %196 = arith.addf %135, %195 : vector<8x32xf32>
    %cst_94 = arith.constant dense<0.000000e+00> : vector<8xf32>
    %197 = vector.multi_reduction <add>, %196, %cst_94 [1] : vector<8x32xf32> to vector<8xf32>
    %198 = vector.shape_cast %197 : vector<8xf32> to vector<8x1xf32>
    %cst_95 = arith.constant 3.200000e+01 : f32
    %199 = vector.broadcast %cst_95 : f32 to vector<8x1xf32>
    %200 = arith.divf %198, %199 : vector<8x1xf32>
    %201 = vector.broadcast %200 : vector<8x1xf32> to vector<8x32xf32>
    %202 = arith.subf %196, %201 : vector<8x32xf32>
    %203 = arith.mulf %202, %202 : vector<8x32xf32>
    %cst_96 = arith.constant dense<0.000000e+00> : vector<8xf32>
    %204 = vector.multi_reduction <add>, %203, %cst_96 [1] : vector<8x32xf32> to vector<8xf32>
    %205 = vector.shape_cast %204 : vector<8xf32> to vector<8x1xf32>
    %cst_97 = arith.constant 3.200000e+01 : f32
    %206 = vector.broadcast %cst_97 : f32 to vector<8x1xf32>
    %207 = arith.divf %205, %206 : vector<8x1xf32>
    %208 = vector.broadcast %200 : vector<8x1xf32> to vector<8x32xf32>
    %209 = arith.subf %196, %208 : vector<8x32xf32>
    %cst_98 = arith.constant 9.99999996E-13 : f32
    %210 = vector.broadcast %cst_98 : f32 to vector<8x1xf32>
    %211 = arith.addf %207, %210 : vector<8x1xf32>
    %212 = math.rsqrt %211 : vector<8x1xf32>
    %213 = vector.broadcast %212 : vector<8x1xf32> to vector<8x32xf32>
    %214 = arith.mulf %209, %213 : vector<8x32xf32>
    %215 = vector.shape_cast %149 : vector<32xf32> to vector<1x32xf32>
    %216 = vector.broadcast %215 : vector<1x32xf32> to vector<8x32xf32>
    %217 = arith.mulf %214, %216 : vector<8x32xf32>
    %218 = vector.shape_cast %151 : vector<32xf32> to vector<1x32xf32>
    %219 = vector.broadcast %218 : vector<1x32xf32> to vector<8x32xf32>
    %220 = arith.addf %217, %219 : vector<8x32xf32>
    %221 = arith.truncf %220 : vector<8x32xf32> to vector<8x32xbf16>
    %cst_99 = arith.constant dense<0.000000e+00> : vector<8x64xf32>
    %222 = tpu.matmul %221, %141, %cst_99 {dimension_numbers = #tpu.dot_dimension_numbers<[1], [0], [0], [1], [0, 0, 1, 1], [], []>} : vector<8x32xbf16>, vector<32x64xbf16>, vector<8x64xf32> -> vector<8x64xf32>
    %223 = vector.shape_cast %153 : vector<64xf32> to vector<1x64xf32>
    %224 = vector.broadcast %223 : vector<1x64xf32> to vector<8x64xf32>
    %225 = arith.addf %222, %224 : vector<8x64xf32>
    %226 = arith.mulf %225, %225 : vector<8x64xf32>
    %227 = arith.mulf %225, %226 : vector<8x64xf32>
    %cst_100 = arith.constant 4.471500e-02 : f32
    %228 = vector.broadcast %cst_100 : f32 to vector<8x64xf32>
    %229 = arith.mulf %228, %227 : vector<8x64xf32>
    %230 = arith.addf %225, %229 : vector<8x64xf32>
    %cst_101 = arith.constant 0.797884583 : f32
    %231 = vector.broadcast %cst_101 : f32 to vector<8x64xf32>
    %232 = arith.mulf %231, %230 : vector<8x64xf32>
    %233 = math.tanh %232 : vector<8x64xf32>
    %cst_102 = arith.constant 1.000000e+00 : f32
    %234 = vector.broadcast %cst_102 : f32 to vector<8x64xf32>
    %235 = arith.addf %234, %233 : vector<8x64xf32>
    %cst_103 = arith.constant 5.000000e-01 : f32
    %236 = vector.broadcast %cst_103 : f32 to vector<8x64xf32>
    %237 = arith.mulf %236, %235 : vector<8x64xf32>
    %238 = arith.mulf %225, %237 : vector<8x64xf32>
    %239 = arith.truncf %238 : vector<8x64xf32> to vector<8x64xbf16>
    %cst_104 = arith.constant dense<0.000000e+00> : vector<8x32xf32>
    %240 = tpu.matmul %239, %143, %cst_104 {dimension_numbers = #tpu.dot_dimension_numbers<[1], [0], [0], [1], [0, 0, 1, 1], [], []>} : vector<8x64xbf16>, vector<64x32xbf16>, vector<8x32xf32> -> vector<8x32xf32>
    %241 = vector.shape_cast %155 : vector<32xf32> to vector<1x32xf32>
    %242 = vector.broadcast %241 : vector<1x32xf32> to vector<8x32xf32>
    %243 = arith.addf %240, %242 : vector<8x32xf32>
    %244 = arith.addf %220, %243 : vector<8x32xf32>
    %cst_105 = arith.constant dense<0.000000e+00> : vector<8xf32>
    %245 = vector.multi_reduction <add>, %244, %cst_105 [1] : vector<8x32xf32> to vector<8xf32>
    %246 = vector.shape_cast %245 : vector<8xf32> to vector<8x1xf32>
    %cst_106 = arith.constant 3.200000e+01 : f32
    %247 = vector.broadcast %cst_106 : f32 to vector<8x1xf32>
    %248 = arith.divf %246, %247 : vector<8x1xf32>
    %249 = vector.broadcast %248 : vector<8x1xf32> to vector<8x32xf32>
    %250 = arith.subf %244, %249 : vector<8x32xf32>
    %251 = arith.mulf %250, %250 : vector<8x32xf32>
    %cst_107 = arith.constant dense<0.000000e+00> : vector<8xf32>
    %252 = vector.multi_reduction <add>, %251, %cst_107 [1] : vector<8x32xf32> to vector<8xf32>
    %253 = vector.shape_cast %252 : vector<8xf32> to vector<8x1xf32>
    %cst_108 = arith.constant 3.200000e+01 : f32
    %254 = vector.broadcast %cst_108 : f32 to vector<8x1xf32>
    %255 = arith.divf %253, %254 : vector<8x1xf32>
    %256 = vector.broadcast %248 : vector<8x1xf32> to vector<8x32xf32>
    %257 = arith.subf %244, %256 : vector<8x32xf32>
    %cst_109 = arith.constant 9.99999996E-13 : f32
    %258 = vector.broadcast %cst_109 : f32 to vector<8x1xf32>
    %259 = arith.addf %255, %258 : vector<8x1xf32>
    %260 = math.rsqrt %259 : vector<8x1xf32>
    %261 = vector.broadcast %260 : vector<8x1xf32> to vector<8x32xf32>
    %262 = arith.mulf %257, %261 : vector<8x32xf32>
    %263 = vector.shape_cast %157 : vector<32xf32> to vector<1x32xf32>
    %264 = vector.broadcast %263 : vector<1x32xf32> to vector<8x32xf32>
    %265 = arith.mulf %262, %264 : vector<8x32xf32>
    %266 = vector.shape_cast %159 : vector<32xf32> to vector<1x32xf32>
    %267 = vector.broadcast %266 : vector<1x32xf32> to vector<8x32xf32>
    %268 = arith.addf %265, %267 : vector<8x32xf32>
    %269 = vector.extract_strided_slice %268 {offsets = [0, 0], sizes = [1, 32], strides = [1, 1]} : vector<8x32xf32> to vector<1x32xf32>
    %c2_110 = arith.constant 2 : index
    %c0_111 = arith.constant 0 : index
    %c0_112 = arith.constant 0 : index
    %270 = vector.load %arg3[%c2_110, %c0_111, %c0_112] : memref<3x64x512xbf16, #tpu.memory_space<vmem>>, vector<1x32x128xbf16>
    %271 = vector.shape_cast %270 : vector<1x32x128xbf16> to vector<32x128xbf16>
    %c2_113 = arith.constant 2 : index
    %c0_114 = arith.constant 0 : index
    %c128_115 = arith.constant 128 : index
    %272 = vector.load %arg3[%c2_113, %c0_114, %c128_115] : memref<3x64x512xbf16, #tpu.memory_space<vmem>>, vector<1x32x32xbf16>
    %273 = vector.shape_cast %272 : vector<1x32x32xbf16> to vector<32x32xbf16>
    %c2_116 = arith.constant 2 : index
    %c0_117 = arith.constant 0 : index
    %c0_118 = arith.constant 0 : index
    %274 = vector.load %arg4[%c2_116, %c0_117, %c0_118] : memref<3x8x128xf32, #tpu.memory_space<vmem>>, vector<1x1x32xf32>
    %275 = vector.shape_cast %274 : vector<1x1x32xf32> to vector<32xf32>
    %c2_119 = arith.constant 2 : index
    %c1_120 = arith.constant 1 : index
    %c0_121 = arith.constant 0 : index
    %276 = vector.load %arg4[%c2_119, %c1_120, %c0_121] : memref<3x8x128xf32, #tpu.memory_space<vmem>>, vector<1x1x128xf32>
    %277 = vector.shape_cast %276 : vector<1x1x128xf32> to vector<128xf32>
    %278 = arith.truncf %269 : vector<1x32xf32> to vector<1x32xbf16>
    %cst_122 = arith.constant dense<0.000000e+00> : vector<1x32xf32>
    %279 = tpu.matmul %278, %273, %cst_122 {dimension_numbers = #tpu.dot_dimension_numbers<[1], [0], [0], [1], [0, 0, 1, 1], [], []>} : vector<1x32xbf16>, vector<32x32xbf16>, vector<1x32xf32> -> vector<1x32xf32>
    %280 = vector.shape_cast %275 : vector<32xf32> to vector<1x32xf32>
    %281 = arith.addf %279, %280 : vector<1x32xf32>
    %282 = arith.negf %281 : vector<1x32xf32>
    %283 = math.exp %282 : vector<1x32xf32>
    %cst_123 = arith.constant 1.000000e+00 : f32
    %284 = vector.broadcast %cst_123 : f32 to vector<1x32xf32>
    %285 = arith.addf %284, %283 : vector<1x32xf32>
    %286 = arith.divf %284, %285 : vector<1x32xf32>
    %287 = arith.truncf %286 : vector<1x32xf32> to vector<1x32xbf16>
    %cst_124 = arith.constant dense<0.000000e+00> : vector<1x128xf32>
    %288 = tpu.matmul %287, %271, %cst_124 {dimension_numbers = #tpu.dot_dimension_numbers<[1], [0], [0], [1], [0, 0, 1, 1], [], []>} : vector<1x32xbf16>, vector<32x128xbf16>, vector<1x128xf32> -> vector<1x128xf32>
    %289 = vector.shape_cast %277 : vector<128xf32> to vector<1x128xf32>
    %290 = arith.addf %288, %289 : vector<1x128xf32>
    %291 = vector.shape_cast %290 : vector<1x128xf32> to vector<1x1x128xf32>
    %292 = vector.shape_cast %291 : vector<1x1x128xf32> to vector<1x1x128xf32>
    %293 = vector.broadcast %292 : vector<1x1x128xf32> to vector<1x8x128xf32>
    %c0_125 = arith.constant 0 : index
    %c0_126 = arith.constant 0 : index
    %c0_127 = arith.constant 0 : index
    %294 = vector.load %arg5[%c0_125, %c0_126, %c0_127] : memref<1x8x128xf32, #tpu.memory_space<vmem>>, vector<1x8x128xf32>
    tpu.vector_store %arg5[%c0_125, %c0_126, %c0_127], %293 {strides = array<i32>} : memref<1x8x128xf32, #tpu.memory_space<vmem>>, vector<1x8x128xf32>,
    return
  }
  func.func @transform_0(%arg0: i32) -> (i32, i32, i32) {
    %c0_i32 = arith.constant 0 : i32
    %c0_i32_0 = arith.constant 0 : i32
    %c0_i32_1 = arith.constant 0 : i32
    return %arg0, %c0_i32, %c0_i32_0 : i32, i32, i32
  }
  func.func @transform_1(%arg0: i32) -> (i32, i32, i32) {
    %c0_i32 = arith.constant 0 : i32
    %c0_i32_0 = arith.constant 0 : i32
    %c0_i32_1 = arith.constant 0 : i32
    return %arg0, %c0_i32, %c0_i32_0 : i32, i32, i32
  }
  func.func @transform_2(%arg0: i32) -> (i32, i32, i32) {
    %c0_i32 = arith.constant 0 : i32
    %c0_i32_0 = arith.constant 0 : i32
    %c0_i32_1 = arith.constant 0 : i32
    %c0_i32_2 = arith.constant 0 : i32
    return %c0_i32, %c0_i32_0, %c0_i32_1 : i32, i32, i32
  }
  func.func @transform_3(%arg0: i32) -> (i32, i32, i32) {
    %c0_i32 = arith.constant 0 : i32
    %c0_i32_0 = arith.constant 0 : i32
    %c0_i32_1 = arith.constant 0 : i32
    %c0_i32_2 = arith.constant 0 : i32
    return %c0_i32, %c0_i32_0, %c0_i32_1 : i32, i32, i32
  }
  func.func @transform_4(%arg0: i32) -> (i32, i32, i32) {
    %c0_i32 = arith.constant 0 : i32
    %c0_i32_0 = arith.constant 0 : i32
    %c0_i32_1 = arith.constant 0 : i32
    return %arg0, %c0_i32, %c0_i32_0 : i32, i32, i32
  }
}

</mosaic_0001>

<llo_original>
// kernel: flaubert_class_forward.1
$region0: #{flaubert_class_forward.1}
  #allocation0 [shape = 'u32[]', space=smem, size = 0x4, offset = 0x4, fixed_abs, tag = 'smem constant byte address 0x4 - core index']
  #allocation1 [shape = 'u32[144,128]{1,0:T(1,128)}', space=vmem, size = 0x12000, scoped, tag = 'internal scratch']
  %s0 = inlined_call_operand.vmem [shape: f32[2,8,32], index: 0, kind: input, shape index: {}]
  %s1 = inlined_call_operand.vmem [shape: f32[2,1,8], index: 1, kind: input, shape index: {}]
  %s2 = inlined_call_operand.hbm [shape: bf16[3,64,512], index: 2, kind: input, shape index: {}]
  %s3 = inlined_call_operand.vmem [shape: f32[3,8,128], index: 3, kind: input, shape index: {}]
  %s4 = inlined_call_operand.vmem [shape: f32[2,8,128], index: 4, kind: output, shape index: {}]
  %s5 = sld [smem:[#allocation0]]
  $region53: #{flaubert_class_forward.1} parent=0
    _
  %s7 = ssub.s32 1, %s5
  %s8 = scalar_select 0, %s7, %s5
  $region1: #{flaubert_class_forward.1} parent=0
    #allocation2 [shape = 'u8[196608]{0}', space=vmem, size = 0x30000, scoped, tag = 'input window, operand 2, single buffered']
    #allocation3 [shape = 's32[2]{0}', space=sflag, size = 0x8, scoped, tag = 'scoped memory for flaubert_class_forward.1']
    %9 = vsyncpa [#allocation3], 0
    loop: start=0, step=1, limit=4
    $region2: #{flaubert_class_forward.1} parent=1 // loop_pre_header
      _
    $region3: #{flaubert_class_forward.1} parent=1 // loop_header
      %s11 = sphi 0, %s15
      %p12 = scmp.ge.s32.totalorder %s11, 4
      %s21 = sphi 0, %s23
      %s24 = sphi 0, %s21
      %s25 = sphi 0, %s24
      %s41 = sphi 0, %s25
      %s47 = sphi 0, %s49
      %s50 = sphi 0, %s47
      %s51 = sphi 0, %s50
      %s67 = sphi 0, %s51
      %s71 = sphi 0, %s71
      %s73 = sphi 0, %s71
      %s74 = sphi 0, %s73
      %s88 = sphi 0, %s74
      %s92 = sphi 0, %s92
      %s94 = sphi 0, %s92
      %s95 = sphi 0, %s94
      %s109 = sphi 0, %s95
      %s115 = sphi 0, %s117
      %s118 = sphi 0, %s115
      %s119 = sphi 0, %s118
      %s135 = sphi 0, %s119
    $region4: #{flaubert_class_forward.1} parent=1 // loop_header_branch
      %14 = sbr.rel (%p12) target = $region8
    $region5: #{flaubert_class_forward.1} parent=1 // loop_body
      %s16 = ssub.s32 %s11, 1
      %s17 = ssub.s32 %s11, 2
      %s18 = sadd.s32 %s11, 1
      %s19 = ssub.s32 %s11, %s18
      %p20 = scmp.eq.s32.totalorder %s19, 0
      %s22 = sadd.s32 %s21, 1
      %s23 = scalar_select %p20, %s21, %s22
      %p26 = pneg %p20
      %p27 = scmp.eq.s32.totalorder %s11, 1
      %p28 = por %p26, %p27
      %p29 = scmp.ne.s32.totalorder %s21, %s24
      %p30 = scmp.eq.s32.totalorder %s11, 0
      %p31 = por %p29, %p30
      %p32 = scmp.ne.s32.totalorder %s21, %s24
      %p33 = scmp.eq.s32.totalorder %s16, 1
      %p34 = por %p32, %p33
      %p35 = scmp.ne.s32.totalorder %s24, %s25
      %p36 = scmp.eq.s32.totalorder %s16, 0
      %p37 = por %p35, %p36
      %p38 = scmp.ne.s32.totalorder %s24, %s25
      %p39 = scmp.eq.s32.totalorder %s17, 1
      %p40 = por %p38, %p39
      %p42 = scmp.ne.s32.totalorder %s25, %s41
      %p43 = scmp.eq.s32.totalorder %s17, 0
      %p44 = por %p42, %p43
      %s45 = ssub.s32 %s11, %s18
      %p46 = scmp.eq.s32.totalorder %s45, 0
      %s48 = sadd.s32 %s47, 1
      %s49 = scalar_select %p46, %s47, %s48
      %p52 = pneg %p46
      %p53 = scmp.eq.s32.totalorder %s11, 1
      %p54 = por %p52, %p53
      %p55 = scmp.ne.s32.totalorder %s47, %s50
      %p56 = scmp.eq.s32.totalorder %s11, 0
      %p57 = por %p55, %p56
      %p58 = scmp.ne.s32.totalorder %s47, %s50
      %p59 = scmp.eq.s32.totalorder %s16, 1
      %p60 = por %p58, %p59
      %p61 = scmp.ne.s32.totalorder %s50, %s51
      %p62 = scmp.eq.s32.totalorder %s16, 0
      %p63 = por %p61, %p62
      %p64 = scmp.ne.s32.totalorder %s50, %s51
      %p65 = scmp.eq.s32.totalorder %s17, 1
      %p66 = por %p64, %p65
      %p68 = scmp.ne.s32.totalorder %s51, %s67
      %p69 = scmp.eq.s32.totalorder %s17, 0
      %p70 = por %p68, %p69
      %s72 = sadd.s32 %s71, 1
      %p75 = scmp.eq.s32.totalorder %s11, 1
      %p76 = scmp.ne.s32.totalorder %s71, %s73
      %p77 = scmp.eq.s32.totalorder %s11, 0
      %p78 = por %p76, %p77
      %p79 = scmp.ne.s32.totalorder %s71, %s73
      %p80 = scmp.eq.s32.totalorder %s16, 1
      %p81 = por %p79, %p80
      %p82 = scmp.ne.s32.totalorder %s73, %s74
      %p83 = scmp.eq.s32.totalorder %s16, 0
      %p84 = por %p82, %p83
      %p85 = scmp.ne.s32.totalorder %s73, %s74
      %p86 = scmp.eq.s32.totalorder %s17, 1
      %p87 = por %p85, %p86
      %p89 = scmp.ne.s32.totalorder %s74, %s88
      %p90 = scmp.eq.s32.totalorder %s17, 0
      %p91 = por %p89, %p90
      %s93 = sadd.s32 %s92, 1
      %p96 = scmp.eq.s32.totalorder %s11, 1
      %p97 = scmp.ne.s32.totalorder %s92, %s94
      %p98 = scmp.eq.s32.totalorder %s11, 0
      %p99 = por %p97, %p98
      %p100 = scmp.ne.s32.totalorder %s92, %s94
      %p101 = scmp.eq.s32.totalorder %s16, 1
      %p102 = por %p100, %p101
      %p103 = scmp.ne.s32.totalorder %s94, %s95
      %p104 = scmp.eq.s32.totalorder %s16, 0
      %p105 = por %p103, %p104
      %p106 = scmp.ne.s32.totalorder %s94, %s95
      %p107 = scmp.eq.s32.totalorder %s17, 1
      %p108 = por %p106, %p107
      %p110 = scmp.ne.s32.totalorder %s95, %s109
      %p111 = scmp.eq.s32.totalorder %s17, 0
      %p112 = por %p110, %p111
      %s113 = ssub.s32 %s11, %s18
      %p114 = scmp.eq.s32.totalorder %s113, 0
      %s116 = sadd.s32 %s115, 1
      %s117 = scalar_select %p114, %s115, %s116
      %p120 = pneg %p114
      %p121 = scmp.eq.s32.totalorder %s11, 1
      %p122 = por %p120, %p121
      %p123 = scmp.ne.s32.totalorder %s115, %s118
      %p124 = scmp.eq.s32.totalorder %s11, 0
      %p125 = por %p123, %p124
      %p126 = scmp.ne.s32.totalorder %s115, %s118
      %p127 = scmp.eq.s32.totalorder %s16, 1
      %p128 = por %p126, %p127
      %p129 = scmp.ne.s32.totalorder %s118, %s119
      %p130 = scmp.eq.s32.totalorder %s16, 0
      %p131 = por %p129, %p130
      %p132 = scmp.ne.s32.totalorder %s118, %s119
      %p133 = scmp.eq.s32.totalorder %s17, 1
      %p134 = por %p132, %p133
      %p136 = scmp.ne.s32.totalorder %s119, %s135
      %p137 = scmp.eq.s32.totalorder %s17, 0
      %p138 = por %p136, %p137
      %p139 = scmp.le.s32.totalorder 1, %s11
      %p140 = scmp.lt.s32.totalorder %s11, 3
      %p141 = pnand %p139, %p140
      %p142 = pneg %p141
      // Predicated region
      $region9: #{flaubert_class_forward.1} parent=5 // pred_check
        _
      $region10: #{flaubert_class_forward.1} parent=5 // pred_check_branch
        %144 = sbr.rel (%p141) target = $region12
      $region11: #{flaubert_class_forward.1} parent=5 // pred_region
        %s145 = ssub.s32 %s11, 1
        // Predicated region
        $region13: #{flaubert_class_forward.1} parent=11 // pred_check
          %p146 = pneg %p84
        $region14: #{flaubert_class_forward.1} parent=11 // pred_check_branch
          %148 = sbr.rel (%p146) target = $region16
        $region15: #{flaubert_class_forward.1} parent=11 // pred_region
          %s150 = ssub.s32 6144, 6144
          %151 = vsyncadd [#allocation3], %s150
          %s152 = sshll.u32 [#allocation2], 4
          %s153 = int_to_ptr.vmem [resolvable:$true] %s152
          %158 = dma.hbm_to_vmem [thread:$0]  %s2, 6144, %s153, [#allocation3], 256, 256, 16
        $region16: #{flaubert_class_forward.1} parent=11 // pred_fallthru
          _
        // Predicated region
        $region17: #{flaubert_class_forward.1} parent=11 // pred_check
          %p159 = pneg %p105
        $region18: #{flaubert_class_forward.1} parent=11 // pred_check_branch
          %161 = sbr.rel (%p159) target = $region20
        $region19: #{flaubert_class_forward.1} parent=11 // pred_region
          _
        $region20: #{flaubert_class_forward.1} parent=11 // pred_fallthru
          _
      $region12: #{flaubert_class_forward.1} parent=5 // pred_fallthru
        _
      %p162 = scmp.lt.s32.totalorder %s11, 2
      // Predicated region
      $region21: #{flaubert_class_forward.1} parent=5 // pred_check
        %p163 = pneg %p162
      $region22: #{flaubert_class_forward.1} parent=5 // pred_check_branch
        %165 = sbr.rel (%p163) target = $region24
      $region23: #{flaubert_class_forward.1} parent=5 // pred_region
        // Predicated region
        $region25: #{flaubert_class_forward.1} parent=23 // pred_check
          %p166 = pneg %p31
        $region26: #{flaubert_class_forward.1} parent=23 // pred_check_branch
          %168 = sbr.rel (%p166) target = $region28
        $region27: #{flaubert_class_forward.1} parent=23 // pred_region
          %p169 = scmp.lt.s32.totalorder %s11, 1
          %s170 = scalar_select %p169, %s11, 1
          %s171 = smul.addr %s170, 8
          %s172 = scalar_lea.vmem %s0, %s171
        $region28: #{flaubert_class_forward.1} parent=23 // pred_fallthru
          _
        // Predicated region
        $region29: #{flaubert_class_forward.1} parent=23 // pred_check
          %p173 = pneg %p57
        $region30: #{flaubert_class_forward.1} parent=23 // pred_check_branch
          %175 = sbr.rel (%p173) target = $region32
        $region31: #{flaubert_class_forward.1} parent=23 // pred_region
          %p176 = scmp.lt.s32.totalorder %s11, 1
          %s177 = scalar_select %p176, %s11, 1
          %s178 = scalar_lea.vmem %s1, %s177
        $region32: #{flaubert_class_forward.1} parent=23 // pred_fallthru
          _
      $region24: #{flaubert_class_forward.1} parent=5 // pred_fallthru
        _
      %p179 = scmp.le.s32.totalorder 1, %s11
      %p180 = scmp.lt.s32.totalorder %s11, 3
      %p181 = pnand %p179, %p180
      %p182 = pneg %p181
      // Predicated region
      $region33: #{flaubert_class_forward.1} parent=5 // pred_check
        _
      $region34: #{flaubert_class_forward.1} parent=5 // pred_check_branch
        %184 = sbr.rel (%p181) target = $region36
      $region35: #{flaubert_class_forward.1} parent=5 // pred_region
        %s185 = ssub.s32 %s11, 1
        // Predicated region
        $region37: #{flaubert_class_forward.1} parent=35 // pred_check
          %p186 = pneg %p84
        $region38: #{flaubert_class_forward.1} parent=35 // pred_check_branch
          %188 = sbr.rel (%p186) target = $region40
        $region39: #{flaubert_class_forward.1} parent=35 // pred_region
          %189 = dma.done [#allocation3], 6144
        $region40: #{flaubert_class_forward.1} parent=35 // pred_fallthru
          _
        %p190 = scmp.lt.s32.totalorder %s16, 1
        %s191 = scalar_select %p190, %s16, 1
        %s192 = smul.addr %s191, 8
        %s193 = scalar_lea.vmem %s0, %s192
        %p194 = pneg %p37
        %p195 = pneg %p34
        %p196 = scmp.lt.s32.totalorder %s16, 1
        %s197 = scalar_select %p196, %s16, 1
        %s198 = scalar_lea.vmem %s1, %s197
        %p199 = pneg %p63
        %p200 = pneg %p60
        %p201 = pneg %p84
        %p202 = pneg %p81
        %p203 = pneg %p105
        %p204 = pneg %p102
        %p205 = pneg %p131
        %p206 = pneg %p128
        %p207 = scmp.lt.s32.totalorder %s16, 1
        %s208 = scalar_select %p207, %s16, 1
        %s209 = smul.addr %s208, 8
        %s210 = scalar_lea.vmem %s4, %s209
        %p211 = scmp.lt.s32.totalorder %s16, 1
        %s212 = scalar_select %p211, %s16, 1
        %s213 = smul.addr %s212, 8
        %s214 = scalar_lea.vmem %s0, %s213
        %p215 = scmp.lt.s32.totalorder %s16, 1
        %s216 = scalar_select %p215, %s16, 1
        %s217 = scalar_lea.vmem %s1, %s216
        %p218 = scmp.lt.s32.totalorder %s16, 1
        %s219 = scalar_select %p218, %s16, 1
        %s220 = smul.addr %s219, 8
        %s221 = scalar_lea.vmem %s4, %s220
        %v223 = vld [vmem:[%s214] sm:$0xff]
        %v224 = vld [vmem:[%s217] sm:$0x1]
        %v225 = vld [vmem:[#allocation2] sm:$0xf]
        %v226 = vld [vmem:[#allocation2 + $0x10] sm:$0xf]
        %v227 = vld [vmem:[#allocation2 + $0x20] sm:$0xf]
        %v228 = vld [vmem:[#allocation2 + $0x30] sm:$0xf]
        %v229 = vld [vmem:[#allocation2 + $0x4] sm:$0xf]
        %v230 = vld [vmem:[#allocation2 + $0x14] sm:$0xf]
        %v231 = vld [vmem:[#allocation2 + $0x24] sm:$0xf]
        %v232 = vld [vmem:[#allocation2 + $0x34] sm:$0xf]
        %v233 = vld [vmem:[#allocation2 + $0x8] sm:$0xf]
        %v234 = vld [vmem:[#allocation2 + $0x18] sm:$0xf]
        %v235 = vld [vmem:[#allocation2 + $0x28] sm:$0xf]
        %v236 = vld [vmem:[#allocation2 + $0x38] sm:$0xf]
        %v237 = vld [vmem:[#allocation2 + $0xc] sm:$0xf]
        %v238 = vld [vmem:[#allocation2 + $0x1c] sm:$0xf]
        %v239 = vld [vmem:[#allocation2 + $0x2c] sm:$0xf]
        %v240 = vld [vmem:[#allocation2 + $0x3c] sm:$0xf]
        %v241 = vld [vmem:[#allocation2 + $0x4c] sm:$0xf]
        %v242 = vld [vmem:[#allocation2 + $0x5c] sm:$0xf]
        %v243 = vld [vmem:[#allocation2 + $0x6c] sm:$0xf]
        %v244 = vld [vmem:[#allocation2 + $0x7c] sm:$0xf]
        %v245 = vld [vmem:[%s3] sm:$0x1]
        %v246 = vld [vmem:[%s3 + $0x1] sm:$0x1]
        %v247 = vld [vmem:[%s3 + $0x2] sm:$0x1]
        %v248 = vld [vmem:[%s3 + $0x3] sm:$0x1]
        %v249 = vld [vmem:[%s3 + $0x4] sm:$0x1]
        %v250 = vld [vmem:[%s3 + $0x5] sm:$0x1]
        %v251 = vld [vmem:[%s3 + $0x6] sm:$0x1]
        %v252 = vld [vmem:[%s3 + $0x7] sm:$0x1]
        %v253 = vpack.c.bf16 %v223, %v223
        %v254 = vlaneseq
        %v255 = vshrl.u32 %v254, 7
        %v256 = vsub.s32 0, %v255
        %v257 = vrot.slane %v245, %v256
        %v262 = vunpack.c.l.b16 %v225
        %v263 = vunpack.c.l.b16 %v226
        %v264 = vunpack.c.l.b16 %v227
        %v265 = vunpack.c.l.b16 %v228
        %v266 = vpack.c.b16 %v263, %v262
        %v267 = vpack.c.b16 %v265, %v264
        %vm270 = vcmask 261120
        %v272 = vsel %vm270, %v253, 0
        %274 = vmatprep.subr.bf16.mxu0 0
        %275 = vmatpush1.bf16.msra.mxu0 0
        %276 = vmatprep.subr.bf16.mxu0 0
        %277 = vmatpush1.bf16.msra.mxu0 0
        %278 = vmatprep.subr.bf16.mxu0 0
        %279 = vmatpush1.bf16.msra.mxu0 0
        %280 = vmatprep.subr.bf16.mxu0 0
        %281 = vmatpush1.bf16.msra.mxu0 0
        %282 = vmatprep.subr.bf16.mxu0 0
        %283 = vmatpush1.bf16.msra.mxu0 0
        %284 = vmatprep.subr.bf16.mxu0 0
        %285 = vmatpush1.bf16.msra.mxu0 0
        %286 = vmatprep.subr.bf16.mxu0 0
        %287 = vmatpush1.bf16.msra.mxu0 %v267
        %288 = vmatprep.subr.bf16.mxu0 0
        %289 = vmatpush1.bf16.msra.mxu0 %v266
        %290 = vmatprep.subr.bf16.mxu0 0
        %291 = vmatpush2.bf16.msra.mxu0 0
        %292 = vmatprep.subr.bf16.mxu0 0
        %293 = vmatpush2.bf16.msra.mxu0 0
        %294 = vmatprep.subr.bf16.mxu0 0
        %295 = vmatpush2.bf16.msra.mxu0 0
        %296 = vmatprep.subr.bf16.mxu0 0
        %297 = vmatpush2.bf16.msra.mxu0 0
        %298 = vmatprep.subr.bf16.mxu0 0
        %299 = vmatpush2.bf16.msra.mxu0 0
        %300 = vmatprep.subr.bf16.mxu0 0
        %301 = vmatpush2.bf16.msra.mxu0 0
        %302 = vmatprep.subr.bf16.mxu0 0
        %303 = vmatpush2.bf16.msra.mxu0 0
        %304 = vmatprep.subr.bf16.mxu0 0
        %305 = vmatpush2.bf16.msra.mxu0 0
        %306 = vmatprep.mubr.bf16.mxu0 0
        %307 = vmatmul.mubr.bf16.gmra.mxu0 %v272
        %v308 = vpop.f32.mrf.mxu0
        %v309 = vadd.f32 %v257, %v308
        %v310 = vpop.f32.mrf.mxu0
        %v311 = vpop.f32.mrf.mxu0
        %v312 = vpop.f32.mrf.mxu0
        %313 = vdwg.mxu0
        %315 = vrot.lane.b32.xlu0 %v309, 120
        %v316 = vpop.permute.xlu0 %315
        %318 = vrot.lane.b32.xlu0 %v309, 112
        %v319 = vpop.permute.xlu0 %318
        %321 = vrot.lane.b32.xlu0 %v309, 104
        %v322 = vpop.permute.xlu0 %321
        %v324 = vcombine.low %v309, %v319
        %v325 = vcombine.high %v309, %v319
        %v327 = vunpack.c.l.s4 1983009808
        %v328 = vunpack.c.0.s8 %v327
        %v329 = vlaneseq
        %v330 = vshrl.u32 %v329, 7
        %v331 = vsub.s32 %v328, %v330
        %v332 = vrot.slane %v324, %v331
        %v334 = vunpack.c.l.s4 1983009808
        %v335 = vunpack.c.0.s8 %v334
        %v336 = vlaneseq
        %v337 = vshrl.u32 %v336, 7
        %v338 = vsub.s32 %v335, %v337
        %v339 = vrot.slane %v325, %v338
        %v340 = vcombine.low %v316, %v322
        %v341 = vcombine.high %v316, %v322
        %v343 = vunpack.c.l.s4 1983009808
        %v344 = vunpack.c.0.s8 %v343
        %v345 = vlaneseq
        %v346 = vshrl.u32 %v345, 7
        %v347 = vsub.s32 %v344, %v346
        %v348 = vrot.slane %v340, %v347
        %v350 = vunpack.c.l.s4 1983009808
        %v351 = vunpack.c.0.s8 %v350
        %v352 = vlaneseq
        %v353 = vshrl.u32 %v352, 7
        %v354 = vsub.s32 %v351, %v353
        %v355 = vrot.slane %v341, %v354
        %v356 = vcombine.low %v332, %v348
        %v357 = vcombine.high %v332, %v348
        %v359 = vunpack.c.l.s4 1934713408
        %v360 = vunpack.c.0.s8 %v359
        %v361 = vlaneseq
        %v362 = vshrl.u32 %v361, 7
        %v363 = vsub.s32 %v360, %v362
        %v364 = vrot.slane %v356, %v363
        %v366 = vunpack.c.l.s4 1934713408
        %v367 = vunpack.c.0.s8 %v366
        %v368 = vlaneseq
        %v369 = vshrl.u32 %v368, 7
        %v370 = vsub.s32 %v367, %v369
        %v371 = vrot.slane %v357, %v370
        %v372 = vcombine.low %v339, %v355
        %v373 = vcombine.high %v339, %v355
        %v375 = vunpack.c.l.s4 1934713408
        %v376 = vunpack.c.0.s8 %v375
        %v377 = vlaneseq
        %v378 = vshrl.u32 %v377, 7
        %v379 = vsub.s32 %v376, %v378
        %v380 = vrot.slane %v372, %v379
        %v382 = vunpack.c.l.s4 1934713408
        %v383 = vunpack.c.0.s8 %v382
        %v384 = vlaneseq
        %v385 = vshrl.u32 %v384, 7
        %v386 = vsub.s32 %v383, %v385
        %v387 = vrot.slane %v373, %v386
        %v388 = vcombine.high %v364, 0.0
        %v389 = vcombine.high %v371, 0.0
        %v390 = vcombine.high %v380, 0.0
        %v391 = vcombine.high %v387, 0.0
        %v392 = vpack.c.bf16 %v364, %v364
        %v393 = vpack.c.bf16 %v388, %v388
        %v394 = vpack.c.bf16 %v371, %v371
        %v395 = vpack.c.bf16 %v389, %v389
        %v396 = vpack.c.bf16 %v380, %v380
        %v397 = vpack.c.bf16 %v390, %v390
        %v398 = vpack.c.bf16 %v387, %v387
        %v399 = vpack.c.bf16 %v391, %v391
        %400 = vrot.lane.b32.xlu0 %v309, 96
        %v401 = vpop.permute.xlu0 %400
        %402 = vrot.lane.b32.xlu0 %v316, 96
        %v403 = vpop.permute.xlu0 %402
        %404 = vrot.lane.b32.xlu0 %v319, 96
        %v405 = vpop.permute.xlu0 %404
        %406 = vrot.lane.b32.xlu0 %v322, 96
        %v407 = vpop.permute.xlu0 %406
        %v412 = vcombine.low %v401, %v405
        %v413 = vcombine.high %v401, %v405
        %v415 = vunpack.c.l.s4 1983009808
        %v416 = vunpack.c.0.s8 %v415
        %v417 = vlaneseq
        %v418 = vshrl.u32 %v417, 7
        %v419 = vsub.s32 %v416, %v418
        %v420 = vrot.slane %v412, %v419
        %v422 = vunpack.c.l.s4 1983009808
        %v423 = vunpack.c.0.s8 %v422
        %v424 = vlaneseq
        %v425 = vshrl.u32 %v424, 7
        %v426 = vsub.s32 %v423, %v425
        %v427 = vrot.slane %v413, %v426
        %v428 = vcombine.low %v403, %v407
        %v429 = vcombine.high %v403, %v407
        %v431 = vunpack.c.l.s4 1983009808
        %v432 = vunpack.c.0.s8 %v431
        %v433 = vlaneseq
        %v434 = vshrl.u32 %v433, 7
        %v435 = vsub.s32 %v432, %v434
        %v436 = vrot.slane %v428, %v435
        %v438 = vunpack.c.l.s4 1983009808
        %v439 = vunpack.c.0.s8 %v438
        %v440 = vlaneseq
        %v441 = vshrl.u32 %v440, 7
        %v442 = vsub.s32 %v439, %v441
        %v443 = vrot.slane %v429, %v442
        %v444 = vcombine.low %v420, %v436
        %v445 = vcombine.high %v420, %v436
        %v447 = vunpack.c.l.s4 1934713408
        %v448 = vunpack.c.0.s8 %v447
        %v449 = vlaneseq
        %v450 = vshrl.u32 %v449, 7
        %v451 = vsub.s32 %v448, %v450
        %v452 = vrot.slane %v444, %v451
        %v454 = vunpack.c.l.s4 1934713408
        %v455 = vunpack.c.0.s8 %v454
        %v456 = vlaneseq
        %v457 = vshrl.u32 %v456, 7
        %v458 = vsub.s32 %v455, %v457
        %v459 = vrot.slane %v445, %v458
        %v460 = vcombine.low %v427, %v443
        %v461 = vcombine.high %v427, %v443
        %v463 = vunpack.c.l.s4 1934713408
        %v464 = vunpack.c.0.s8 %v463
        %v465 = vlaneseq
        %v466 = vshrl.u32 %v465, 7
        %v467 = vsub.s32 %v464, %v466
        %v468 = vrot.slane %v460, %v467
        %v470 = vunpack.c.l.s4 1934713408
        %v471 = vunpack.c.0.s8 %v470
        %v472 = vlaneseq
        %v473 = vshrl.u32 %v472, 7
        %v474 = vsub.s32 %v471, %v473
        %v475 = vrot.slane %v461, %v474
        %v476 = vcombine.high %v452, 0.0
        %v477 = vcombine.high %v459, 0.0
        %v478 = vcombine.high %v468, 0.0
        %v479 = vcombine.high %v475, 0.0
        %v480 = vpack.c.bf16 %v452, %v452
        %v481 = vpack.c.bf16 %v476, %v476
        %v482 = vpack.c.bf16 %v459, %v459
        %v483 = vpack.c.bf16 %v477, %v477
        %v484 = vpack.c.bf16 %v468, %v468
        %v485 = vpack.c.bf16 %v478, %v478
        %v486 = vpack.c.bf16 %v475, %v475
        %v487 = vpack.c.bf16 %v479, %v479
        %488 = vrot.lane.b32.xlu0 %v309, 64
        %v489 = vpop.permute.xlu0 %488
        %490 = vrot.lane.b32.xlu0 %v316, 64
        %v491 = vpop.permute.xlu0 %490
        %492 = vrot.lane.b32.xlu0 %v319, 64
        %v493 = vpop.permute.xlu0 %492
        %494 = vrot.lane.b32.xlu0 %v322, 64
        %v495 = vpop.permute.xlu0 %494
        %v500 = vcombine.low %v489, %v493
        %v501 = vcombine.high %v489, %v493
        %v503 = vunpack.c.l.s4 1983009808
        %v504 = vunpack.c.0.s8 %v503
        %v505 = vlaneseq
        %v506 = vshrl.u32 %v505, 7
        %v507 = vsub.s32 %v504, %v506
        %v508 = vrot.slane %v500, %v507
        %v510 = vunpack.c.l.s4 1983009808
        %v511 = vunpack.c.0.s8 %v510
        %v512 = vlaneseq
        %v513 = vshrl.u32 %v512, 7
        %v514 = vsub.s32 %v511, %v513
        %v515 = vrot.slane %v501, %v514
        %v516 = vcombine.low %v491, %v495
        %v517 = vcombine.high %v491, %v495
        %v519 = vunpack.c.l.s4 1983009808
        %v520 = vunpack.c.0.s8 %v519
        %v521 = vlaneseq
        %v522 = vshrl.u32 %v521, 7
        %v523 = vsub.s32 %v520, %v522
        %v524 = vrot.slane %v516, %v523
        %v526 = vunpack.c.l.s4 1983009808
        %v527 = vunpack.c.0.s8 %v526
        %v528 = vlaneseq
        %v529 = vshrl.u32 %v528, 7
        %v530 = vsub.s32 %v527, %v529
        %v531 = vrot.slane %v517, %v530
        %v532 = vcombine.low %v508, %v524
        %v533 = vcombine.high %v508, %v524
        %v535 = vunpack.c.l.s4 1934713408
        %v536 = vunpack.c.0.s8 %v535
        %v537 = vlaneseq
        %v538 = vshrl.u32 %v537, 7
        %v539 = vsub.s32 %v536, %v538
        %v540 = vrot.slane %v532, %v539
        %v542 = vunpack.c.l.s4 1934713408
        %v543 = vunpack.c.0.s8 %v542
        %v544 = vlaneseq
        %v545 = vshrl.u32 %v544, 7
        %v546 = vsub.s32 %v543, %v545
        %v547 = vrot.slane %v533, %v546
        %v548 = vcombine.low %v515, %v531
        %v549 = vcombine.high %v515, %v531
        %v551 = vunpack.c.l.s4 1934713408
        %v552 = vunpack.c.0.s8 %v551
        %v553 = vlaneseq
        %v554 = vshrl.u32 %v553, 7
        %v555 = vsub.s32 %v552, %v554
        %v556 = vrot.slane %v548, %v555
        %v558 = vunpack.c.l.s4 1934713408
        %v559 = vunpack.c.0.s8 %v558
        %v560 = vlaneseq
        %v561 = vshrl.u32 %v560, 7
        %v562 = vsub.s32 %v559, %v561
        %v563 = vrot.slane %v549, %v562
        %v564 = vcombine.high %v540, 0.0
        %v565 = vcombine.high %v547, 0.0
        %v566 = vcombine.high %v556, 0.0
        %v567 = vcombine.high %v563, 0.0
        %v568 = vpack.c.bf16 %v540, %v540
        %v569 = vpack.c.bf16 %v564, %v564
        %v570 = vpack.c.bf16 %v547, %v547
        %v571 = vpack.c.bf16 %v565, %v565
        %v572 = vpack.c.bf16 %v556, %v556
        %v573 = vpack.c.bf16 %v566, %v566
        %v574 = vpack.c.bf16 %v563, %v563
        %v575 = vpack.c.bf16 %v567, %v567
        %v577 = vlaneseq
        %v578 = vshrl.u32 %v577, 7
        %v579 = vsub.s32 0, %v578
        %v580 = vrot.slane %v224, %v579
        %v582 = vcombine.low %v392, %v396
        %v584 = vunpack.c.l.s4 1983009808
        %v585 = vunpack.c.0.s8 %v584
        %v586 = vlaneseq
        %v587 = vshrl.u32 %v586, 7
        %v588 = vsub.s32 %v585, %v587
        %v589 = vrot.slane %v582, %v588
        %v590 = vcombine.low %v394, %v398
        %v592 = vunpack.c.l.s4 1983009808
        %v593 = vunpack.c.0.s8 %v592
        %v594 = vlaneseq
        %v595 = vshrl.u32 %v594, 7
        %v596 = vsub.s32 %v593, %v595
        %v597 = vrot.slane %v590, %v596
        %v598 = vcombine.low %v589, %v597
        %v600 = vunpack.c.l.s4 1934713408
        %v601 = vunpack.c.0.s8 %v600
        %v602 = vlaneseq
        %v603 = vshrl.u32 %v602, 7
        %v604 = vsub.s32 %v601, %v603
        %v605 = vrot.slane %v598, %v604
        %v606 = vcombine.high %v605, 0
        %v607 = vcombine.low %v393, %v397
        %v609 = vunpack.c.l.s4 1983009808
        %v610 = vunpack.c.0.s8 %v609
        %v611 = vlaneseq
        %v612 = vshrl.u32 %v611, 7
        %v613 = vsub.s32 %v610, %v612
        %v614 = vrot.slane %v607, %v613
        %v615 = vcombine.low %v395, %v399
        %v617 = vunpack.c.l.s4 1983009808
        %v618 = vunpack.c.0.s8 %v617
        %v619 = vlaneseq
        %v620 = vshrl.u32 %v619, 7
        %v621 = vsub.s32 %v618, %v620
        %v622 = vrot.slane %v615, %v621
        %v623 = vcombine.low %v614, %v622
        %v625 = vunpack.c.l.s4 1934713408
        %v626 = vunpack.c.0.s8 %v625
        %v627 = vlaneseq
        %v628 = vshrl.u32 %v627, 7
        %v629 = vsub.s32 %v626, %v628
        %v630 = vrot.slane %v623, %v629
        %v631 = vcombine.high %v630, 0
        %v634 = vpack.i.b16 %v630, %v605
        %v635 = vshrl.u32 %v605, 16
        %v636 = vshrl.u32 %v630, 16
        %v637 = vpack.i.b16 %v636, %v635
        %v640 = vpack.i.b16 %v631, %v606
        %v641 = vshrl.u32 %v606, 16
        %v642 = vshrl.u32 %v631, 16
        %v643 = vpack.i.b16 %v642, %v641
        %644 = vxpose.xlu0.c.b16.start [1/8] %v480, 128
        %645 = vxpose.xlu0.c.b16.cont [2/8] 0, 128
        %646 = vxpose.xlu0.c.b16.cont [3/8] 0, 128
        %647 = vxpose.xlu0.c.b16.cont [4/8] 0, 128
        %648 = vxpose.xlu0.c.b16.cont [5/8] 0, 128
        %649 = vxpose.xlu0.c.b16.cont [6/8] 0, 128
        %650 = vxpose.xlu0.c.b16.cont [7/8] 0, 128
        %651 = vxpose.xlu0.c.b16.end [8/8] 0, 128
        %v652 = vpop.trf.xlu0
        %v653 = vpop.trf.xlu0
        %v654 = vpop.trf.xlu0
        %v655 = vpop.trf.xlu0
        %v656 = vpop.trf.xlu0
        %v657 = vpop.trf.xlu0
        %v658 = vpop.trf.xlu0
        %v659 = vpop.trf.xlu0
        %660 = vxpose.xlu0.c.b16.start [1/8] %v481, 128
        %661 = vxpose.xlu0.c.b16.cont [2/8] 0, 128
        %662 = vxpose.xlu0.c.b16.cont [3/8] 0, 128
        %663 = vxpose.xlu0.c.b16.cont [4/8] 0, 128
        %664 = vxpose.xlu0.c.b16.cont [5/8] 0, 128
        %665 = vxpose.xlu0.c.b16.cont [6/8] 0, 128
        %666 = vxpose.xlu0.c.b16.cont [7/8] 0, 128
        %667 = vxpose.xlu0.c.b16.end [8/8] 0, 128
        %v668 = vpop.trf.xlu0
        %v669 = vpop.trf.xlu0
        %v670 = vpop.trf.xlu0
        %v671 = vpop.trf.xlu0
        %v672 = vpop.trf.xlu0
        %v673 = vpop.trf.xlu0
        %v674 = vpop.trf.xlu0
        %v675 = vpop.trf.xlu0
        %676 = vxpose.xlu0.c.b16.start [1/8] %v482, 128
        %677 = vxpose.xlu0.c.b16.cont [2/8] 0, 128
        %678 = vxpose.xlu0.c.b16.cont [3/8] 0, 128
        %679 = vxpose.xlu0.c.b16.cont [4/8] 0, 128
        %680 = vxpose.xlu0.c.b16.cont [5/8] 0, 128
        %681 = vxpose.xlu0.c.b16.cont [6/8] 0, 128
        %682 = vxpose.xlu0.c.b16.cont [7/8] 0, 128
        %683 = vxpose.xlu0.c.b16.end [8/8] 0, 128
        %v684 = vpop.trf.xlu0
        %v685 = vpop.trf.xlu0
        %v686 = vpop.trf.xlu0
        %v687 = vpop.trf.xlu0
        %v688 = vpop.trf.xlu0
        %v689 = vpop.trf.xlu0
        %v690 = vpop.trf.xlu0
        %v691 = vpop.trf.xlu0
        %692 = vxpose.xlu0.c.b16.start [1/8] %v483, 128
        %693 = vxpose.xlu0.c.b16.cont [2/8] 0, 128
        %694 = vxpose.xlu0.c.b16.cont [3/8] 0, 128
        %695 = vxpose.xlu0.c.b16.cont [4/8] 0, 128
        %696 = vxpose.xlu0.c.b16.cont [5/8] 0, 128
        %697 = vxpose.xlu0.c.b16.cont [6/8] 0, 128
        %698 = vxpose.xlu0.c.b16.cont [7/8] 0, 128
        %699 = vxpose.xlu0.c.b16.end [8/8] 0, 128
        %v700 = vpop.trf.xlu0
        %v701 = vpop.trf.xlu0
        %v702 = vpop.trf.xlu0
        %v703 = vpop.trf.xlu0
        %v704 = vpop.trf.xlu0
        %v705 = vpop.trf.xlu0
        %v706 = vpop.trf.xlu0
        %v707 = vpop.trf.xlu0
        %708 = vxpose.xlu0.c.b16.start [1/8] %v484, 128
        %709 = vxpose.xlu0.c.b16.cont [2/8] 0, 128
        %710 = vxpose.xlu0.c.b16.cont [3/8] 0, 128
        %711 = vxpose.xlu0.c.b16.cont [4/8] 0, 128
        %712 = vxpose.xlu0.c.b16.cont [5/8] 0, 128
        %713 = vxpose.xlu0.c.b16.cont [6/8] 0, 128
        %714 = vxpose.xlu0.c.b16.cont [7/8] 0, 128
        %715 = vxpose.xlu0.c.b16.end [8/8] 0, 128
        %v716 = vpop.trf.xlu0
        %v717 = vpop.trf.xlu0
        %v718 = vpop.trf.xlu0
        %v719 = vpop.trf.xlu0
        %v720 = vpop.trf.xlu0
        %v721 = vpop.trf.xlu0
        %v722 = vpop.trf.xlu0
        %v723 = vpop.trf.xlu0
        %724 = vxpose.xlu0.c.b16.start [1/8] %v485, 128
        %725 = vxpose.xlu0.c.b16.cont [2/8] 0, 128
        %726 = vxpose.xlu0.c.b16.cont [3/8] 0, 128
        %727 = vxpose.xlu0.c.b16.cont [4/8] 0, 128
        %728 = vxpose.xlu0.c.b16.cont [5/8] 0, 128
        %729 = vxpose.xlu0.c.b16.cont [6/8] 0, 128
        %730 = vxpose.xlu0.c.b16.cont [7/8] 0, 128
        %731 = vxpose.xlu0.c.b16.end [8/8] 0, 128
        %v732 = vpop.trf.xlu0
        %v733 = vpop.trf.xlu0
        %v734 = vpop.trf.xlu0
        %v735 = vpop.trf.xlu0
        %v736 = vpop.trf.xlu0
        %v737 = vpop.trf.xlu0
        %v738 = vpop.trf.xlu0
        %v739 = vpop.trf.xlu0
        %740 = vxpose.xlu0.c.b16.start [1/8] %v486, 128
        %741 = vxpose.xlu0.c.b16.cont [2/8] 0, 128
        %742 = vxpose.xlu0.c.b16.cont [3/8] 0, 128
        %743 = vxpose.xlu0.c.b16.cont [4/8] 0, 128
        %744 = vxpose.xlu0.c.b16.cont [5/8] 0, 128
        %745 = vxpose.xlu0.c.b16.cont [6/8] 0, 128
        %746 = vxpose.xlu0.c.b16.cont [7/8] 0, 128
        %747 = vxpose.xlu0.c.b16.end [8/8] 0, 128
        %v748 = vpop.trf.xlu0
        %v749 = vpop.trf.xlu0
        %v750 = vpop.trf.xlu0
        %v751 = vpop.trf.xlu0
        %v752 = vpop.trf.xlu0
        %v753 = vpop.trf.xlu0
        %v754 = vpop.trf.xlu0
        %v755 = vpop.trf.xlu0
        %756 = vxpose.xlu0.c.b16.start [1/8] %v487, 128
        %757 = vxpose.xlu0.c.b16.cont [2/8] 0, 128
        %758 = vxpose.xlu0.c.b16.cont [3/8] 0, 128
        %759 = vxpose.xlu0.c.b16.cont [4/8] 0, 128
        %760 = vxpose.xlu0.c.b16.cont [5/8] 0, 128
        %761 = vxpose.xlu0.c.b16.cont [6/8] 0, 128
        %762 = vxpose.xlu0.c.b16.cont [7/8] 0, 128
        %763 = vxpose.xlu0.c.b16.end [8/8] 0, 128
        %v764 = vpop.trf.xlu0
        %v765 = vpop.trf.xlu0
        %v766 = vpop.trf.xlu0
        %v767 = vpop.trf.xlu0
        %v768 = vpop.trf.xlu0
        %v769 = vpop.trf.xlu0
        %v770 = vpop.trf.xlu0
        %v771 = vpop.trf.xlu0
        %v772 = vcombine.low %v652, %v716
        %v774 = vunpack.c.l.s4 1983009808
        %v775 = vunpack.c.0.s8 %v774
        %v776 = vlaneseq
        %v777 = vshrl.u32 %v776, 7
        %v778 = vsub.s32 %v775, %v777
        %v779 = vrot.slane %v772, %v778
        %v780 = vcombine.low %v684, %v748
        %v782 = vunpack.c.l.s4 1983009808
        %v783 = vunpack.c.0.s8 %v782
        %v784 = vlaneseq
        %v785 = vshrl.u32 %v784, 7
        %v786 = vsub.s32 %v783, %v785
        %v787 = vrot.slane %v780, %v786
        %v788 = vcombine.low %v779, %v787
        %v789 = vcombine.high %v779, %v787
        %v791 = vunpack.c.l.s4 1934713408
        %v792 = vunpack.c.0.s8 %v791
        %v793 = vlaneseq
        %v794 = vshrl.u32 %v793, 7
        %v795 = vsub.s32 %v792, %v794
        %v796 = vrot.slane %v788, %v795
        %v798 = vunpack.c.l.s4 1934713408
        %v799 = vunpack.c.0.s8 %v798
        %v800 = vlaneseq
        %v801 = vshrl.u32 %v800, 7
        %v802 = vsub.s32 %v799, %v801
        %v803 = vrot.slane %v789, %v802
        %v804 = vcombine.high %v796, 0
        %v805 = vcombine.high %v803, 0
        %v806 = vcombine.low %v668, %v732
        %v808 = vunpack.c.l.s4 1983009808
        %v809 = vunpack.c.0.s8 %v808
        %v810 = vlaneseq
        %v811 = vshrl.u32 %v810, 7
        %v812 = vsub.s32 %v809, %v811
        %v813 = vrot.slane %v806, %v812
        %v814 = vcombine.low %v700, %v764
        %v816 = vunpack.c.l.s4 1983009808
        %v817 = vunpack.c.0.s8 %v816
        %v818 = vlaneseq
        %v819 = vshrl.u32 %v818, 7
        %v820 = vsub.s32 %v817, %v819
        %v821 = vrot.slane %v814, %v820
        %v822 = vcombine.low %v813, %v821
        %v823 = vcombine.high %v813, %v821
        %v825 = vunpack.c.l.s4 1934713408
        %v826 = vunpack.c.0.s8 %v825
        %v827 = vlaneseq
        %v828 = vshrl.u32 %v827, 7
        %v829 = vsub.s32 %v826, %v828
        %v830 = vrot.slane %v822, %v829
        %v832 = vunpack.c.l.s4 1934713408
        %v833 = vunpack.c.0.s8 %v832
        %v834 = vlaneseq
        %v835 = vshrl.u32 %v834, 7
        %v836 = vsub.s32 %v833, %v835
        %v837 = vrot.slane %v823, %v836
        %v838 = vcombine.high %v830, 0
        %v839 = vcombine.high %v837, 0
        %v842 = vpack.i.b16 %v830, %v796
        %v844 = vshrl.u32 %v796, 16
        %v845 = vshrl.u32 %v830, 16
        %v846 = vpack.i.b16 %v845, %v844
        %v850 = vpack.i.b16 %v838, %v804
        %v852 = vshrl.u32 %v804, 16
        %v853 = vshrl.u32 %v838, 16
        %v854 = vpack.i.b16 %v853, %v852
        %v858 = vpack.i.b16 %v837, %v803
        %v860 = vshrl.u32 %v803, 16
        %v861 = vshrl.u32 %v837, 16
        %v862 = vpack.i.b16 %v861, %v860
        %v866 = vpack.i.b16 %v839, %v805
        %v868 = vshrl.u32 %v805, 16
        %v869 = vshrl.u32 %v839, 16
        %v870 = vpack.i.b16 %v869, %v868
        %872 = vxpose.xlu0.c.b16.start [1/8] %v842, 128
        %873 = vxpose.xlu0.c.b16.cont [2/8] 0, 128
        %874 = vxpose.xlu0.c.b16.cont [3/8] 0, 128
        %875 = vxpose.xlu0.c.b16.cont [4/8] 0, 128
        %876 = vxpose.xlu0.c.b16.cont [5/8] 0, 128
        %877 = vxpose.xlu0.c.b16.cont [6/8] 0, 128
        %878 = vxpose.xlu0.c.b16.cont [7/8] 0, 128
        %879 = vxpose.xlu0.c.b16.end [8/8] 0, 128
        %v880 = vpop.trf.xlu0
        %v881 = vpop.trf.xlu0
        %v882 = vpop.trf.xlu0
        %v883 = vpop.trf.xlu0
        %v884 = vpop.trf.xlu0
        %v885 = vpop.trf.xlu0
        %v886 = vpop.trf.xlu0
        %v887 = vpop.trf.xlu0
        %888 = vxpose.xlu0.c.b16.start [1/8] %v846, 128
        %889 = vxpose.xlu0.c.b16.cont [2/8] 0, 128
        %890 = vxpose.xlu0.c.b16.cont [3/8] 0, 128
        %891 = vxpose.xlu0.c.b16.cont [4/8] 0, 128
        %892 = vxpose.xlu0.c.b16.cont [5/8] 0, 128
        %893 = vxpose.xlu0.c.b16.cont [6/8] 0, 128
        %894 = vxpose.xlu0.c.b16.cont [7/8] 0, 128
        %895 = vxpose.xlu0.c.b16.end [8/8] 0, 128
        %v896 = vpop.trf.xlu0
        %v897 = vpop.trf.xlu0
        %v898 = vpop.trf.xlu0
        %v899 = vpop.trf.xlu0
        %v900 = vpop.trf.xlu0
        %v901 = vpop.trf.xlu0
        %v902 = vpop.trf.xlu0
        %v903 = vpop.trf.xlu0
        %904 = vxpose.xlu0.c.b16.start [1/8] %v850, 128
        %905 = vxpose.xlu0.c.b16.cont [2/8] 0, 128
        %906 = vxpose.xlu0.c.b16.cont [3/8] 0, 128
        %907 = vxpose.xlu0.c.b16.cont [4/8] 0, 128
        %908 = vxpose.xlu0.c.b16.cont [5/8] 0, 128
        %909 = vxpose.xlu0.c.b16.cont [6/8] 0, 128
        %910 = vxpose.xlu0.c.b16.cont [7/8] 0, 128
        %911 = vxpose.xlu0.c.b16.end [8/8] 0, 128
        %v912 = vpop.trf.xlu0
        %v913 = vpop.trf.xlu0
        %v914 = vpop.trf.xlu0
        %v915 = vpop.trf.xlu0
        %v916 = vpop.trf.xlu0
        %v917 = vpop.trf.xlu0
        %v918 = vpop.trf.xlu0
        %v919 = vpop.trf.xlu0
        %920 = vxpose.xlu0.c.b16.start [1/8] %v854, 128
        %921 = vxpose.xlu0.c.b16.cont [2/8] 0, 128
        %922 = vxpose.xlu0.c.b16.cont [3/8] 0, 128
        %923 = vxpose.xlu0.c.b16.cont [4/8] 0, 128
        %924 = vxpose.xlu0.c.b16.cont [5/8] 0, 128
        %925 = vxpose.xlu0.c.b16.cont [6/8] 0, 128
        %926 = vxpose.xlu0.c.b16.cont [7/8] 0, 128
        %927 = vxpose.xlu0.c.b16.end [8/8] 0, 128
        %v928 = vpop.trf.xlu0
        %v929 = vpop.trf.xlu0
        %v930 = vpop.trf.xlu0
        %v931 = vpop.trf.xlu0
        %v932 = vpop.trf.xlu0
        %v933 = vpop.trf.xlu0
        %v934 = vpop.trf.xlu0
        %v935 = vpop.trf.xlu0
        %936 = vxpose.xlu0.c.b16.start [1/8] %v858, 128
        %937 = vxpose.xlu0.c.b16.cont [2/8] 0, 128
        %938 = vxpose.xlu0.c.b16.cont [3/8] 0, 128
        %939 = vxpose.xlu0.c.b16.cont [4/8] 0, 128
        %940 = vxpose.xlu0.c.b16.cont [5/8] 0, 128
        %941 = vxpose.xlu0.c.b16.cont [6/8] 0, 128
        %942 = vxpose.xlu0.c.b16.cont [7/8] 0, 128
        %943 = vxpose.xlu0.c.b16.end [8/8] 0, 128
        %v944 = vpop.trf.xlu0
        %v945 = vpop.trf.xlu0
        %v946 = vpop.trf.xlu0
        %v947 = vpop.trf.xlu0
        %v948 = vpop.trf.xlu0
        %v949 = vpop.trf.xlu0
        %v950 = vpop.trf.xlu0
        %v951 = vpop.trf.xlu0
        %952 = vxpose.xlu0.c.b16.start [1/8] %v862, 128
        %953 = vxpose.xlu0.c.b16.cont [2/8] 0, 128
        %954 = vxpose.xlu0.c.b16.cont [3/8] 0, 128
        %955 = vxpose.xlu0.c.b16.cont [4/8] 0, 128
        %956 = vxpose.xlu0.c.b16.cont [5/8] 0, 128
        %957 = vxpose.xlu0.c.b16.cont [6/8] 0, 128
        %958 = vxpose.xlu0.c.b16.cont [7/8] 0, 128
        %959 = vxpose.xlu0.c.b16.end [8/8] 0, 128
        %v960 = vpop.trf.xlu0
        %v961 = vpop.trf.xlu0
        %v962 = vpop.trf.xlu0
        %v963 = vpop.trf.xlu0
        %v964 = vpop.trf.xlu0
        %v965 = vpop.trf.xlu0
        %v966 = vpop.trf.xlu0
        %v967 = vpop.trf.xlu0
        %968 = vxpose.xlu0.c.b16.start [1/8] %v866, 128
        %969 = vxpose.xlu0.c.b16.cont [2/8] 0, 128
        %970 = vxpose.xlu0.c.b16.cont [3/8] 0, 128
        %971 = vxpose.xlu0.c.b16.cont [4/8] 0, 128
        %972 = vxpose.xlu0.c.b16.cont [5/8] 0, 128
        %973 = vxpose.xlu0.c.b16.cont [6/8] 0, 128
        %974 = vxpose.xlu0.c.b16.cont [7/8] 0, 128
        %975 = vxpose.xlu0.c.b16.end [8/8] 0, 128
        %v976 = vpop.trf.xlu0
        %v977 = vpop.trf.xlu0
        %v978 = vpop.trf.xlu0
        %v979 = vpop.trf.xlu0
        %v980 = vpop.trf.xlu0
        %v981 = vpop.trf.xlu0
        %v982 = vpop.trf.xlu0
        %v983 = vpop.trf.xlu0
        %984 = vxpose.xlu0.c.b16.start [1/8] %v870, 128
        %985 = vxpose.xlu0.c.b16.cont [2/8] 0, 128
        %986 = vxpose.xlu0.c.b16.cont [3/8] 0, 128
        %987 = vxpose.xlu0.c.b16.cont [4/8] 0, 128
        %988 = vxpose.xlu0.c.b16.cont [5/8] 0, 128
        %989 = vxpose.xlu0.c.b16.cont [6/8] 0, 128
        %990 = vxpose.xlu0.c.b16.cont [7/8] 0, 128
        %991 = vxpose.xlu0.c.b16.end [8/8] 0, 128
        %v992 = vpop.trf.xlu0
        %v993 = vpop.trf.xlu0
        %v994 = vpop.trf.xlu0
        %v995 = vpop.trf.xlu0
        %v996 = vpop.trf.xlu0
        %v997 = vpop.trf.xlu0
        %v998 = vpop.trf.xlu0
        %v999 = vpop.trf.xlu0
        %v1000 = vcombine.low %v880, %v944
        %v1002 = vunpack.c.l.s4 1983009808
        %v1003 = vunpack.c.0.s8 %v1002
        %v1004 = vlaneseq
        %v1005 = vshrl.u32 %v1004, 7
        %v1006 = vsub.s32 %v1003, %v1005
        %v1007 = vrot.slane %v1000, %v1006
        %v1008 = vcombine.low %v912, %v976
        %v1010 = vunpack.c.l.s4 1983009808
        %v1011 = vunpack.c.0.s8 %v1010
        %v1012 = vlaneseq
        %v1013 = vshrl.u32 %v1012, 7
        %v1014 = vsub.s32 %v1011, %v1013
        %v1015 = vrot.slane %v1008, %v1014
        %v1016 = vcombine.low %v1007, %v1015
        %v1018 = vunpack.c.l.s4 1934713408
        %v1019 = vunpack.c.0.s8 %v1018
        %v1020 = vlaneseq
        %v1021 = vshrl.u32 %v1020, 7
        %v1022 = vsub.s32 %v1019, %v1021
        %v1023 = vrot.slane %v1016, %v1022
        %v1024 = vcombine.high %v1023, 0
        %v1025 = vcombine.low %v896, %v960
        %v1027 = vunpack.c.l.s4 1983009808
        %v1028 = vunpack.c.0.s8 %v1027
        %v1029 = vlaneseq
        %v1030 = vshrl.u32 %v1029, 7
        %v1031 = vsub.s32 %v1028, %v1030
        %v1032 = vrot.slane %v1025, %v1031
        %v1033 = vcombine.low %v928, %v992
        %v1035 = vunpack.c.l.s4 1983009808
        %v1036 = vunpack.c.0.s8 %v1035
        %v1037 = vlaneseq
        %v1038 = vshrl.u32 %v1037, 7
        %v1039 = vsub.s32 %v1036, %v1038
        %v1040 = vrot.slane %v1033, %v1039
        %v1041 = vcombine.low %v1032, %v1040
        %v1043 = vunpack.c.l.s4 1934713408
        %v1044 = vunpack.c.0.s8 %v1043
        %v1045 = vlaneseq
        %v1046 = vshrl.u32 %v1045, 7
        %v1047 = vsub.s32 %v1044, %v1046
        %v1048 = vrot.slane %v1041, %v1047
        %v1049 = vcombine.high %v1048, 0
        %v1052 = vpack.i.b16 %v1048, %v1023
        %v1053 = vshrl.u32 %v1023, 16
        %v1054 = vshrl.u32 %v1048, 16
        %v1055 = vpack.i.b16 %v1054, %v1053
        %v1058 = vpack.i.b16 %v1049, %v1024
        %v1059 = vshrl.u32 %v1024, 16
        %v1060 = vshrl.u32 %v1049, 16
        %v1061 = vpack.i.b16 %v1060, %v1059
        %vm1062 = vcmask 64512
        %v1064 = vsel %vm1062, %v634, 0
        %vm1066 = vcmask 1043456
        %v1068 = vsel %vm1066, %v1052, 0
        %1070 = vmatprep.subr.bf16.mxu0 0
        %1071 = vmatpush1.bf16.msra.mxu0 0
        %1072 = vmatprep.subr.bf16.mxu0 0
        %1073 = vmatpush1.bf16.msra.mxu0 0
        %1074 = vmatprep.subr.bf16.mxu0 0
        %1075 = vmatpush1.bf16.msra.mxu0 0
        %1076 = vmatprep.subr.bf16.mxu0 0
        %1077 = vmatpush1.bf16.msra.mxu0 0
        %1078 = vmatprep.subr.bf16.mxu0 0
        %1079 = vmatpush1.bf16.msra.mxu0 0
        %1080 = vmatprep.subr.bf16.mxu0 0
        %1081 = vmatpush1.bf16.msra.mxu0 0
        %1082 = vmatprep.subr.bf16.mxu0 0
        %1083 = vmatpush1.bf16.msra.mxu0 0
        %1084 = vmatprep.subr.bf16.mxu0 0
        %1085 = vmatpush1.bf16.msra.mxu0 %v1068
        %1086 = vmatprep.subr.bf16.mxu0 0
        %1087 = vmatpush2.bf16.msra.mxu0 0
        %1088 = vmatprep.subr.bf16.mxu0 0
        %1089 = vmatpush2.bf16.msra.mxu0 0
        %1090 = vmatprep.subr.bf16.mxu0 0
        %1091 = vmatpush2.bf16.msra.mxu0 0
        %1092 = vmatprep.subr.bf16.mxu0 0
        %1093 = vmatpush2.bf16.msra.mxu0 0
        %1094 = vmatprep.subr.bf16.mxu0 0
        %1095 = vmatpush2.bf16.msra.mxu0 0
        %1096 = vmatprep.subr.bf16.mxu0 0
        %1097 = vmatpush2.bf16.msra.mxu0 0
        %1098 = vmatprep.subr.bf16.mxu0 0
        %1099 = vmatpush2.bf16.msra.mxu0 0
        %1100 = vmatprep.subr.bf16.mxu0 0
        %1101 = vmatpush2.bf16.msra.mxu0 0
        %1102 = vmatprep.mubr.bf16.mxu0 0
        %1103 = vmatmul.mubr.bf16.gmra.mxu0 %v1064
        %v1104 = vpop.f32.mrf.mxu0
        %v1105 = vadd.f32 %v580, %v1104
        %v1106 = vpop.f32.mrf.mxu0
        %v1107 = vpop.f32.mrf.mxu0
        %v1108 = vpop.f32.mrf.mxu0
        %1109 = vdwg.mxu0
        %v1111 = vsel %vm1062, %v637, 0
        %v1114 = vsel %vm1066, %v1055, 0
        %1116 = vmatprep.subr.bf16.mxu0 0
        %1117 = vmatpush1.bf16.msra.mxu0 0
        %1118 = vmatprep.subr.bf16.mxu0 0
        %1119 = vmatpush1.bf16.msra.mxu0 0
        %1120 = vmatprep.subr.bf16.mxu0 0
        %1121 = vmatpush1.bf16.msra.mxu0 0
        %1122 = vmatprep.subr.bf16.mxu0 0
        %1123 = vmatpush1.bf16.msra.mxu0 0
        %1124 = vmatprep.subr.bf16.mxu0 0
        %1125 = vmatpush1.bf16.msra.mxu0 0
        %1126 = vmatprep.subr.bf16.mxu0 0
        %1127 = vmatpush1.bf16.msra.mxu0 0
        %1128 = vmatprep.subr.bf16.mxu0 0
        %1129 = vmatpush1.bf16.msra.mxu0 0
        %1130 = vmatprep.subr.bf16.mxu0 0
        %1131 = vmatpush1.bf16.msra.mxu0 %v1114
        %1132 = vmatprep.subr.bf16.mxu0 0
        %1133 = vmatpush2.bf16.msra.mxu0 0
        %1134 = vmatprep.subr.bf16.mxu0 0
        %1135 = vmatpush2.bf16.msra.mxu0 0
        %1136 = vmatprep.subr.bf16.mxu0 0
        %1137 = vmatpush2.bf16.msra.mxu0 0
        %1138 = vmatprep.subr.bf16.mxu0 0
        %1139 = vmatpush2.bf16.msra.mxu0 0
        %1140 = vmatprep.subr.bf16.mxu0 0
        %1141 = vmatpush2.bf16.msra.mxu0 0
        %1142 = vmatprep.subr.bf16.mxu0 0
        %1143 = vmatpush2.bf16.msra.mxu0 0
        %1144 = vmatprep.subr.bf16.mxu0 0
        %1145 = vmatpush2.bf16.msra.mxu0 0
        %1146 = vmatprep.subr.bf16.mxu0 0
        %1147 = vmatpush2.bf16.msra.mxu0 0
        %1148 = vmatprep.mubr.bf16.mxu0 0
        %1149 = vmatmul.mubr.bf16.gmra.mxu0 %v1111
        %v1150 = vpop.f32.mrf.mxu0
        %v1151 = vadd.f32 %v580, %v1150
        %v1152 = vpop.f32.mrf.mxu0
        %v1153 = vpop.f32.mrf.mxu0
        %v1154 = vpop.f32.mrf.mxu0
        %1155 = vdwg.mxu0
        %v1157 = vsel %vm1062, %v640, 0
        %v1160 = vsel %vm1066, %v1058, 0
        %1162 = vmatprep.subr.bf16.mxu0 0
        %1163 = vmatpush1.bf16.msra.mxu0 0
        %1164 = vmatprep.subr.bf16.mxu0 0
        %1165 = vmatpush1.bf16.msra.mxu0 0
        %1166 = vmatprep.subr.bf16.mxu0 0
        %1167 = vmatpush1.bf16.msra.mxu0 0
        %1168 = vmatprep.subr.bf16.mxu0 0
        %1169 = vmatpush1.bf16.msra.mxu0 0
        %1170 = vmatprep.subr.bf16.mxu0 0
        %1171 = vmatpush1.bf16.msra.mxu0 0
        %1172 = vmatprep.subr.bf16.mxu0 0
        %1173 = vmatpush1.bf16.msra.mxu0 0
        %1174 = vmatprep.subr.bf16.mxu0 0
        %1175 = vmatpush1.bf16.msra.mxu0 0
        %1176 = vmatprep.subr.bf16.mxu0 0
        %1177 = vmatpush1.bf16.msra.mxu0 %v1160
        %1178 = vmatprep.subr.bf16.mxu0 0
        %1179 = vmatpush2.bf16.msra.mxu0 0
        %1180 = vmatprep.subr.bf16.mxu0 0
        %1181 = vmatpush2.bf16.msra.mxu0 0
        %1182 = vmatprep.subr.bf16.mxu0 0
        %1183 = vmatpush2.bf16.msra.mxu0 0
        %1184 = vmatprep.subr.bf16.mxu0 0
        %1185 = vmatpush2.bf16.msra.mxu0 0
        %1186 = vmatprep.subr.bf16.mxu0 0
        %1187 = vmatpush2.bf16.msra.mxu0 0
        %1188 = vmatprep.subr.bf16.mxu0 0
        %1189 = vmatpush2.bf16.msra.mxu0 0
        %1190 = vmatprep.subr.bf16.mxu0 0
        %1191 = vmatpush2.bf16.msra.mxu0 0
        %1192 = vmatprep.subr.bf16.mxu0 0
        %1193 = vmatpush2.bf16.msra.mxu0 0
        %1194 = vmatprep.mubr.bf16.mxu0 0
        %1195 = vmatmul.mubr.bf16.gmra.mxu0 %v1157
        %v1196 = vpop.f32.mrf.mxu0
        %v1197 = vadd.f32 %v580, %v1196
        %v1198 = vpop.f32.mrf.mxu0
        %v1199 = vpop.f32.mrf.mxu0
        %v1200 = vpop.f32.mrf.mxu0
        %1201 = vdwg.mxu0
        %v1203 = vsel %vm1062, %v643, 0
        %v1206 = vsel %vm1066, %v1061, 0
        %1208 = vmatprep.subr.bf16.mxu0 0
        %1209 = vmatpush1.bf16.msra.mxu0 0
        %1210 = vmatprep.subr.bf16.mxu0 0
        %1211 = vmatpush1.bf16.msra.mxu0 0
        %1212 = vmatprep.subr.bf16.mxu0 0
        %1213 = vmatpush1.bf16.msra.mxu0 0
        %1214 = vmatprep.subr.bf16.mxu0 0
        %1215 = vmatpush1.bf16.msra.mxu0 0
        %1216 = vmatprep.subr.bf16.mxu0 0
        %1217 = vmatpush1.bf16.msra.mxu0 0
        %1218 = vmatprep.subr.bf16.mxu0 0
        %1219 = vmatpush1.bf16.msra.mxu0 0
        %1220 = vmatprep.subr.bf16.mxu0 0
        %1221 = vmatpush1.bf16.msra.mxu0 0
        %1222 = vmatprep.subr.bf16.mxu0 0
        %1223 = vmatpush1.bf16.msra.mxu0 %v1206
        %1224 = vmatprep.subr.bf16.mxu0 0
        %1225 = vmatpush2.bf16.msra.mxu0 0
        %1226 = vmatprep.subr.bf16.mxu0 0
        %1227 = vmatpush2.bf16.msra.mxu0 0
        %1228 = vmatprep.subr.bf16.mxu0 0
        %1229 = vmatpush2.bf16.msra.mxu0 0
        %1230 = vmatprep.subr.bf16.mxu0 0
        %1231 = vmatpush2.bf16.msra.mxu0 0
        %1232 = vmatprep.subr.bf16.mxu0 0
        %1233 = vmatpush2.bf16.msra.mxu0 0
        %1234 = vmatprep.subr.bf16.mxu0 0
        %1235 = vmatpush2.bf16.msra.mxu0 0
        %1236 = vmatprep.subr.bf16.mxu0 0
        %1237 = vmatpush2.bf16.msra.mxu0 0
        %1238 = vmatprep.subr.bf16.mxu0 0
        %1239 = vmatpush2.bf16.msra.mxu0 0
        %1240 = vmatprep.mubr.bf16.mxu0 0
        %1241 = vmatmul.mubr.bf16.gmra.mxu0 %v1203
        %v1242 = vpop.f32.mrf.mxu0
        %v1243 = vadd.f32 %v580, %v1242
        %v1244 = vpop.f32.mrf.mxu0
        %v1245 = vpop.f32.mrf.mxu0
        %v1246 = vpop.f32.mrf.mxu0
        %1247 = vdwg.mxu0
        %v1248 = vsel %vm1062, %v1105, -inf
        %1249 = vmax.xlane.f32.xlu0 %v1248
        %v1250 = vpop.xlane.xlu0 %1249
        %v1251 = vsel %vm1062, %v1151, -inf
        %1252 = vmax.xlane.f32.xlu0 %v1251
        %v1253 = vpop.xlane.xlu0 %1252
        %v1254 = vsel %vm1062, %v1197, -inf
        %1255 = vmax.xlane.f32.xlu0 %v1254
        %v1256 = vpop.xlane.xlu0 %1255
        %v1257 = vsel %vm1062, %v1243, -inf
        %1258 = vmax.xlane.f32.xlu0 %v1257
        %v1259 = vpop.xlane.xlu0 %1258
        %v1260 = vsub.f32 %v1105, %v1250
        %v1261 = vsub.f32 %v1151, %v1253
        %v1262 = vsub.f32 %v1197, %v1256
        %v1263 = vsub.f32 %v1243, %v1259
        %v1264 = vmul.f32 %v1260, 1.442695
        %v1265 = vpow.pop %v1264
        %v1266 = vmul.f32 %v1261, 1.442695
        %v1267 = vpow.pop %v1266
        %v1268 = vmul.f32 %v1262, 1.442695
        %v1269 = vpow.pop %v1268
        %v1270 = vmul.f32 %v1263, 1.442695
        %v1271 = vpow.pop %v1270
        %v1272 = vsel %vm1062, %v1265, 0.0
        %1273 = vadd.xlane.f32.xlu0 %v1272
        %v1274 = vpop.xlane.xlu0 %1273
        %v1275 = vsel %vm1062, %v1267, 0.0
        %1276 = vadd.xlane.f32.xlu0 %v1275
        %v1277 = vpop.xlane.xlu0 %1276
        %v1278 = vsel %vm1062, %v1269, 0.0
        %1279 = vadd.xlane.f32.xlu0 %v1278
        %v1280 = vpop.xlane.xlu0 %1279
        %v1281 = vsel %vm1062, %v1271, 0.0
        %1282 = vadd.xlane.f32.xlu0 %v1281
        %v1283 = vpop.xlane.xlu0 %1282
        %v1284 = vrcp.pop %v1274
        %v1285 = vrcp.pop %v1277
        %v1286 = vrcp.pop %v1280
        %v1287 = vrcp.pop %v1283
        %v1288 = vmul.f32 %v1265, %v1284
        %v1289 = vmul.f32 %v1267, %v1285
        %v1290 = vmul.f32 %v1269, %v1286
        %v1291 = vmul.f32 %v1271, %v1287
        %v1292 = vpack.c.bf16 %v1288, %v1288
        %v1293 = vpack.c.bf16 %v1289, %v1289
        %v1294 = vpack.c.bf16 %v1290, %v1290
        %v1295 = vpack.c.bf16 %v1291, %v1291
        %1296 = vxpose.xlu0.c.b16.start [1/8] %v568, 128
        %1297 = vxpose.xlu0.c.b16.cont [2/8] 0, 128
        %1298 = vxpose.xlu0.c.b16.cont [3/8] 0, 128
        %1299 = vxpose.xlu0.c.b16.cont [4/8] 0, 128
        %1300 = vxpose.xlu0.c.b16.cont [5/8] 0, 128
        %1301 = vxpose.xlu0.c.b16.cont [6/8] 0, 128
        %1302 = vxpose.xlu0.c.b16.cont [7/8] 0, 128
        %1303 = vxpose.xlu0.c.b16.end [8/8] 0, 128
        %v1304 = vpop.trf.xlu0
        %v1305 = vpop.trf.xlu0
        %v1306 = vpop.trf.xlu0
        %v1307 = vpop.trf.xlu0
        %v1308 = vpop.trf.xlu0
        %v1309 = vpop.trf.xlu0
        %v1310 = vpop.trf.xlu0
        %v1311 = vpop.trf.xlu0
        %1312 = vxpose.xlu0.c.b16.start [1/8] %v569, 128
        %1313 = vxpose.xlu0.c.b16.cont [2/8] 0, 128
        %1314 = vxpose.xlu0.c.b16.cont [3/8] 0, 128
        %1315 = vxpose.xlu0.c.b16.cont [4/8] 0, 128
        %1316 = vxpose.xlu0.c.b16.cont [5/8] 0, 128
        %1317 = vxpose.xlu0.c.b16.cont [6/8] 0, 128
        %1318 = vxpose.xlu0.c.b16.cont [7/8] 0, 128
        %1319 = vxpose.xlu0.c.b16.end [8/8] 0, 128
        %v1320 = vpop.trf.xlu0
        %v1321 = vpop.trf.xlu0
        %v1322 = vpop.trf.xlu0
        %v1323 = vpop.trf.xlu0
        %v1324 = vpop.trf.xlu0
        %v1325 = vpop.trf.xlu0
        %v1326 = vpop.trf.xlu0
        %v1327 = vpop.trf.xlu0
        %1328 = vxpose.xlu0.c.b16.start [1/8] %v570, 128
        %1329 = vxpose.xlu0.c.b16.cont [2/8] 0, 128
        %1330 = vxpose.xlu0.c.b16.cont [3/8] 0, 128
        %1331 = vxpose.xlu0.c.b16.cont [4/8] 0, 128
        %1332 = vxpose.xlu0.c.b16.cont [5/8] 0, 128
        %1333 = vxpose.xlu0.c.b16.cont [6/8] 0, 128
        %1334 = vxpose.xlu0.c.b16.cont [7/8] 0, 128
        %1335 = vxpose.xlu0.c.b16.end [8/8] 0, 128
        %v1336 = vpop.trf.xlu0
        %v1337 = vpop.trf.xlu0
        %v1338 = vpop.trf.xlu0
        %v1339 = vpop.trf.xlu0
        %v1340 = vpop.trf.xlu0
        %v1341 = vpop.trf.xlu0
        %v1342 = vpop.trf.xlu0
        %v1343 = vpop.trf.xlu0
        %1344 = vxpose.xlu0.c.b16.start [1/8] %v571, 128
        %1345 = vxpose.xlu0.c.b16.cont [2/8] 0, 128
        %1346 = vxpose.xlu0.c.b16.cont [3/8] 0, 128
        %1347 = vxpose.xlu0.c.b16.cont [4/8] 0, 128
        %1348 = vxpose.xlu0.c.b16.cont [5/8] 0, 128
        %1349 = vxpose.xlu0.c.b16.cont [6/8] 0, 128
        %1350 = vxpose.xlu0.c.b16.cont [7/8] 0, 128
        %1351 = vxpose.xlu0.c.b16.end [8/8] 0, 128
        %v1352 = vpop.trf.xlu0
        %v1353 = vpop.trf.xlu0
        %v1354 = vpop.trf.xlu0
        %v1355 = vpop.trf.xlu0
        %v1356 = vpop.trf.xlu0
        %v1357 = vpop.trf.xlu0
        %v1358 = vpop.trf.xlu0
        %v1359 = vpop.trf.xlu0
        %1360 = vxpose.xlu0.c.b16.start [1/8] %v572, 128
        %1361 = vxpose.xlu0.c.b16.cont [2/8] 0, 128
        %1362 = vxpose.xlu0.c.b16.cont [3/8] 0, 128
        %1363 = vxpose.xlu0.c.b16.cont [4/8] 0, 128
        %1364 = vxpose.xlu0.c.b16.cont [5/8] 0, 128
        %1365 = vxpose.xlu0.c.b16.cont [6/8] 0, 128
        %1366 = vxpose.xlu0.c.b16.cont [7/8] 0, 128
        %1367 = vxpose.xlu0.c.b16.end [8/8] 0, 128
        %v1368 = vpop.trf.xlu0
        %v1369 = vpop.trf.xlu0
        %v1370 = vpop.trf.xlu0
        %v1371 = vpop.trf.xlu0
        %v1372 = vpop.trf.xlu0
        %v1373 = vpop.trf.xlu0
        %v1374 = vpop.trf.xlu0
        %v1375 = vpop.trf.xlu0
        %1376 = vxpose.xlu0.c.b16.start [1/8] %v573, 128
        %1377 = vxpose.xlu0.c.b16.cont [2/8] 0, 128
        %1378 = vxpose.xlu0.c.b16.cont [3/8] 0, 128
        %1379 = vxpose.xlu0.c.b16.cont [4/8] 0, 128
        %1380 = vxpose.xlu0.c.b16.cont [5/8] 0, 128
        %1381 = vxpose.xlu0.c.b16.cont [6/8] 0, 128
        %1382 = vxpose.xlu0.c.b16.cont [7/8] 0, 128
        %1383 = vxpose.xlu0.c.b16.end [8/8] 0, 128
        %v1384 = vpop.trf.xlu0
        %v1385 = vpop.trf.xlu0
        %v1386 = vpop.trf.xlu0
        %v1387 = vpop.trf.xlu0
        %v1388 = vpop.trf.xlu0
        %v1389 = vpop.trf.xlu0
        %v1390 = vpop.trf.xlu0
        %v1391 = vpop.trf.xlu0
        %1392 = vxpose.xlu0.c.b16.start [1/8] %v574, 128
        %1393 = vxpose.xlu0.c.b16.cont [2/8] 0, 128
        %1394 = vxpose.xlu0.c.b16.cont [3/8] 0, 128
        %1395 = vxpose.xlu0.c.b16.cont [4/8] 0, 128
        %1396 = vxpose.xlu0.c.b16.cont [5/8] 0, 128
        %1397 = vxpose.xlu0.c.b16.cont [6/8] 0, 128
        %1398 = vxpose.xlu0.c.b16.cont [7/8] 0, 128
        %1399 = vxpose.xlu0.c.b16.end [8/8] 0, 128
        %v1400 = vpop.trf.xlu0
        %v1401 = vpop.trf.xlu0
        %v1402 = vpop.trf.xlu0
        %v1403 = vpop.trf.xlu0
        %v1404 = vpop.trf.xlu0
        %v1405 = vpop.trf.xlu0
        %v1406 = vpop.trf.xlu0
        %v1407 = vpop.trf.xlu0
        %1408 = vxpose.xlu0.c.b16.start [1/8] %v575, 128
        %1409 = vxpose.xlu0.c.b16.cont [2/8] 0, 128
        %1410 = vxpose.xlu0.c.b16.cont [3/8] 0, 128
        %1411 = vxpose.xlu0.c.b16.cont [4/8] 0, 128
        %1412 = vxpose.xlu0.c.b16.cont [5/8] 0, 128
        %1413 = vxpose.xlu0.c.b16.cont [6/8] 0, 128
        %1414 = vxpose.xlu0.c.b16.cont [7/8] 0, 128
        %1415 = vxpose.xlu0.c.b16.end [8/8] 0, 128
        %v1416 = vpop.trf.xlu0
        %v1417 = vpop.trf.xlu0
        %v1418 = vpop.trf.xlu0
        %v1419 = vpop.trf.xlu0
        %v1420 = vpop.trf.xlu0
        %v1421 = vpop.trf.xlu0
        %v1422 = vpop.trf.xlu0
        %v1423 = vpop.trf.xlu0
        %v1424 = vcombine.low %v1304, %v1368
        %v1426 = vunpack.c.l.s4 1983009808
        %v1427 = vunpack.c.0.s8 %v1426
        %v1428 = vlaneseq
        %v1429 = vshrl.u32 %v1428, 7
        %v1430 = vsub.s32 %v1427, %v1429
        %v1431 = vrot.slane %v1424, %v1430
        %v1432 = vcombine.low %v1336, %v1400
        %v1434 = vunpack.c.l.s4 1983009808
        %v1435 = vunpack.c.0.s8 %v1434
        %v1436 = vlaneseq
        %v1437 = vshrl.u32 %v1436, 7
        %v1438 = vsub.s32 %v1435, %v1437
        %v1439 = vrot.slane %v1432, %v1438
        %v1440 = vcombine.low %v1431, %v1439
        %v1441 = vcombine.high %v1431, %v1439
        %v1443 = vunpack.c.l.s4 1934713408
        %v1444 = vunpack.c.0.s8 %v1443
        %v1445 = vlaneseq
        %v1446 = vshrl.u32 %v1445, 7
        %v1447 = vsub.s32 %v1444, %v1446
        %v1448 = vrot.slane %v1440, %v1447
        %v1450 = vunpack.c.l.s4 1934713408
        %v1451 = vunpack.c.0.s8 %v1450
        %v1452 = vlaneseq
        %v1453 = vshrl.u32 %v1452, 7
        %v1454 = vsub.s32 %v1451, %v1453
        %v1455 = vrot.slane %v1441, %v1454
        %v1456 = vcombine.high %v1448, 0
        %v1457 = vcombine.high %v1455, 0
        %v1458 = vcombine.low %v1320, %v1384
        %v1460 = vunpack.c.l.s4 1983009808
        %v1461 = vunpack.c.0.s8 %v1460
        %v1462 = vlaneseq
        %v1463 = vshrl.u32 %v1462, 7
        %v1464 = vsub.s32 %v1461, %v1463
        %v1465 = vrot.slane %v1458, %v1464
        %v1466 = vcombine.low %v1352, %v1416
        %v1468 = vunpack.c.l.s4 1983009808
        %v1469 = vunpack.c.0.s8 %v1468
        %v1470 = vlaneseq
        %v1471 = vshrl.u32 %v1470, 7
        %v1472 = vsub.s32 %v1469, %v1471
        %v1473 = vrot.slane %v1466, %v1472
        %v1474 = vcombine.low %v1465, %v1473
        %v1475 = vcombine.high %v1465, %v1473
        %v1477 = vunpack.c.l.s4 1934713408
        %v1478 = vunpack.c.0.s8 %v1477
        %v1479 = vlaneseq
        %v1480 = vshrl.u32 %v1479, 7
        %v1481 = vsub.s32 %v1478, %v1480
        %v1482 = vrot.slane %v1474, %v1481
        %v1484 = vunpack.c.l.s4 1934713408
        %v1485 = vunpack.c.0.s8 %v1484
        %v1486 = vlaneseq
        %v1487 = vshrl.u32 %v1486, 7
        %v1488 = vsub.s32 %v1485, %v1487
        %v1489 = vrot.slane %v1475, %v1488
        %v1490 = vcombine.high %v1482, 0
        %v1491 = vcombine.high %v1489, 0
        %v1494 = vpack.i.b16 %v1482, %v1448
        %v1496 = vshrl.u32 %v1448, 16
        %v1497 = vshrl.u32 %v1482, 16
        %v1498 = vpack.i.b16 %v1497, %v1496
        %v1502 = vpack.i.b16 %v1490, %v1456
        %v1504 = vshrl.u32 %v1456, 16
        %v1505 = vshrl.u32 %v1490, 16
        %v1506 = vpack.i.b16 %v1505, %v1504
        %v1510 = vpack.i.b16 %v1489, %v1455
        %v1512 = vshrl.u32 %v1455, 16
        %v1513 = vshrl.u32 %v1489, 16
        %v1514 = vpack.i.b16 %v1513, %v1512
        %v1518 = vpack.i.b16 %v1491, %v1457
        %v1520 = vshrl.u32 %v1457, 16
        %v1521 = vshrl.u32 %v1491, 16
        %v1522 = vpack.i.b16 %v1521, %v1520
        %1524 = vxpose.xlu0.c.b16.start [1/8] %v1494, 128
        %1525 = vxpose.xlu0.c.b16.cont [2/8] 0, 128
        %1526 = vxpose.xlu0.c.b16.cont [3/8] 0, 128
        %1527 = vxpose.xlu0.c.b16.cont [4/8] 0, 128
        %1528 = vxpose.xlu0.c.b16.cont [5/8] 0, 128
        %1529 = vxpose.xlu0.c.b16.cont [6/8] 0, 128
        %1530 = vxpose.xlu0.c.b16.cont [7/8] 0, 128
        %1531 = vxpose.xlu0.c.b16.end [8/8] 0, 128
        %v1532 = vpop.trf.xlu0
        %v1533 = vpop.trf.xlu0
        %v1534 = vpop.trf.xlu0
        %v1535 = vpop.trf.xlu0
        %v1536 = vpop.trf.xlu0
        %v1537 = vpop.trf.xlu0
        %v1538 = vpop.trf.xlu0
        %v1539 = vpop.trf.xlu0
        %1540 = vxpose.xlu0.c.b16.start [1/8] %v1498, 128
        %1541 = vxpose.xlu0.c.b16.cont [2/8] 0, 128
        %1542 = vxpose.xlu0.c.b16.cont [3/8] 0, 128
        %1543 = vxpose.xlu0.c.b16.cont [4/8] 0, 128
        %1544 = vxpose.xlu0.c.b16.cont [5/8] 0, 128
        %1545 = vxpose.xlu0.c.b16.cont [6/8] 0, 128
        %1546 = vxpose.xlu0.c.b16.cont [7/8] 0, 128
        %1547 = vxpose.xlu0.c.b16.end [8/8] 0, 128
        %v1548 = vpop.trf.xlu0
        %v1549 = vpop.trf.xlu0
        %v1550 = vpop.trf.xlu0
        %v1551 = vpop.trf.xlu0
        %v1552 = vpop.trf.xlu0
        %v1553 = vpop.trf.xlu0
        %v1554 = vpop.trf.xlu0
        %v1555 = vpop.trf.xlu0
        %1556 = vxpose.xlu0.c.b16.start [1/8] %v1502, 128
        %1557 = vxpose.xlu0.c.b16.cont [2/8] 0, 128
        %1558 = vxpose.xlu0.c.b16.cont [3/8] 0, 128
        %1559 = vxpose.xlu0.c.b16.cont [4/8] 0, 128
        %1560 = vxpose.xlu0.c.b16.cont [5/8] 0, 128
        %1561 = vxpose.xlu0.c.b16.cont [6/8] 0, 128
        %1562 = vxpose.xlu0.c.b16.cont [7/8] 0, 128
        %1563 = vxpose.xlu0.c.b16.end [8/8] 0, 128
        %v1564 = vpop.trf.xlu0
        %v1565 = vpop.trf.xlu0
        %v1566 = vpop.trf.xlu0
        %v1567 = vpop.trf.xlu0
        %v1568 = vpop.trf.xlu0
        %v1569 = vpop.trf.xlu0
        %v1570 = vpop.trf.xlu0
        %v1571 = vpop.trf.xlu0
        %1572 = vxpose.xlu0.c.b16.start [1/8] %v1506, 128
        %1573 = vxpose.xlu0.c.b16.cont [2/8] 0, 128
        %1574 = vxpose.xlu0.c.b16.cont [3/8] 0, 128
        %1575 = vxpose.xlu0.c.b16.cont [4/8] 0, 128
        %1576 = vxpose.xlu0.c.b16.cont [5/8] 0, 128
        %1577 = vxpose.xlu0.c.b16.cont [6/8] 0, 128
        %1578 = vxpose.xlu0.c.b16.cont [7/8] 0, 128
        %1579 = vxpose.xlu0.c.b16.end [8/8] 0, 128
        %v1580 = vpop.trf.xlu0
        %v1581 = vpop.trf.xlu0
        %v1582 = vpop.trf.xlu0
        %v1583 = vpop.trf.xlu0
        %v1584 = vpop.trf.xlu0
        %v1585 = vpop.trf.xlu0
        %v1586 = vpop.trf.xlu0
        %v1587 = vpop.trf.xlu0
        %1588 = vxpose.xlu0.c.b16.start [1/8] %v1510, 128
        %1589 = vxpose.xlu0.c.b16.cont [2/8] 0, 128
        %1590 = vxpose.xlu0.c.b16.cont [3/8] 0, 128
        %1591 = vxpose.xlu0.c.b16.cont [4/8] 0, 128
        %1592 = vxpose.xlu0.c.b16.cont [5/8] 0, 128
        %1593 = vxpose.xlu0.c.b16.cont [6/8] 0, 128
        %1594 = vxpose.xlu0.c.b16.cont [7/8] 0, 128
        %1595 = vxpose.xlu0.c.b16.end [8/8] 0, 128
        %v1596 = vpop.trf.xlu0
        %v1597 = vpop.trf.xlu0
        %v1598 = vpop.trf.xlu0
        %v1599 = vpop.trf.xlu0
        %v1600 = vpop.trf.xlu0
        %v1601 = vpop.trf.xlu0
        %v1602 = vpop.trf.xlu0
        %v1603 = vpop.trf.xlu0
        %1604 = vxpose.xlu0.c.b16.start [1/8] %v1514, 128
        %1605 = vxpose.xlu0.c.b16.cont [2/8] 0, 128
        %1606 = vxpose.xlu0.c.b16.cont [3/8] 0, 128
        %1607 = vxpose.xlu0.c.b16.cont [4/8] 0, 128
        %1608 = vxpose.xlu0.c.b16.cont [5/8] 0, 128
        %1609 = vxpose.xlu0.c.b16.cont [6/8] 0, 128
        %1610 = vxpose.xlu0.c.b16.cont [7/8] 0, 128
        %1611 = vxpose.xlu0.c.b16.end [8/8] 0, 128
        %v1612 = vpop.trf.xlu0
        %v1613 = vpop.trf.xlu0
        %v1614 = vpop.trf.xlu0
        %v1615 = vpop.trf.xlu0
        %v1616 = vpop.trf.xlu0
        %v1617 = vpop.trf.xlu0
        %v1618 = vpop.trf.xlu0
        %v1619 = vpop.trf.xlu0
        %1620 = vxpose.xlu0.c.b16.start [1/8] %v1518, 128
        %1621 = vxpose.xlu0.c.b16.cont [2/8] 0, 128
        %1622 = vxpose.xlu0.c.b16.cont [3/8] 0, 128
        %1623 = vxpose.xlu0.c.b16.cont [4/8] 0, 128
        %1624 = vxpose.xlu0.c.b16.cont [5/8] 0, 128
        %1625 = vxpose.xlu0.c.b16.cont [6/8] 0, 128
        %1626 = vxpose.xlu0.c.b16.cont [7/8] 0, 128
        %1627 = vxpose.xlu0.c.b16.end [8/8] 0, 128
        %v1628 = vpop.trf.xlu0
        %v1629 = vpop.trf.xlu0
        %v1630 = vpop.trf.xlu0
        %v1631 = vpop.trf.xlu0
        %v1632 = vpop.trf.xlu0
        %v1633 = vpop.trf.xlu0
        %v1634 = vpop.trf.xlu0
        %v1635 = vpop.trf.xlu0
        %1636 = vxpose.xlu0.c.b16.start [1/8] %v1522, 128
        %1637 = vxpose.xlu0.c.b16.cont [2/8] 0, 128
        %1638 = vxpose.xlu0.c.b16.cont [3/8] 0, 128
        %1639 = vxpose.xlu0.c.b16.cont [4/8] 0, 128
        %1640 = vxpose.xlu0.c.b16.cont [5/8] 0, 128
        %1641 = vxpose.xlu0.c.b16.cont [6/8] 0, 128
        %1642 = vxpose.xlu0.c.b16.cont [7/8] 0, 128
        %1643 = vxpose.xlu0.c.b16.end [8/8] 0, 128
        %v1644 = vpop.trf.xlu0
        %v1645 = vpop.trf.xlu0
        %v1646 = vpop.trf.xlu0
        %v1647 = vpop.trf.xlu0
        %v1648 = vpop.trf.xlu0
        %v1649 = vpop.trf.xlu0
        %v1650 = vpop.trf.xlu0
        %v1651 = vpop.trf.xlu0
        %v1652 = vcombine.low %v1532, %v1596
        %v1654 = vunpack.c.l.s4 1983009808
        %v1655 = vunpack.c.0.s8 %v1654
        %v1656 = vlaneseq
        %v1657 = vshrl.u32 %v1656, 7
        %v1658 = vsub.s32 %v1655, %v1657
        %v1659 = vrot.slane %v1652, %v1658
        %v1660 = vcombine.low %v1564, %v1628
        %v1662 = vunpack.c.l.s4 1983009808
        %v1663 = vunpack.c.0.s8 %v1662
        %v1664 = vlaneseq
        %v1665 = vshrl.u32 %v1664, 7
        %v1666 = vsub.s32 %v1663, %v1665
        %v1667 = vrot.slane %v1660, %v1666
        %v1668 = vcombine.low %v1659, %v1667
        %v1670 = vunpack.c.l.s4 1934713408
        %v1671 = vunpack.c.0.s8 %v1670
        %v1672 = vlaneseq
        %v1673 = vshrl.u32 %v1672, 7
        %v1674 = vsub.s32 %v1671, %v1673
        %v1675 = vrot.slane %v1668, %v1674
        %v1676 = vcombine.high %v1675, 0
        %v1677 = vcombine.low %v1548, %v1612
        %v1679 = vunpack.c.l.s4 1983009808
        %v1680 = vunpack.c.0.s8 %v1679
        %v1681 = vlaneseq
        %v1682 = vshrl.u32 %v1681, 7
        %v1683 = vsub.s32 %v1680, %v1682
        %v1684 = vrot.slane %v1677, %v1683
        %v1685 = vcombine.low %v1580, %v1644
        %v1687 = vunpack.c.l.s4 1983009808
        %v1688 = vunpack.c.0.s8 %v1687
        %v1689 = vlaneseq
        %v1690 = vshrl.u32 %v1689, 7
        %v1691 = vsub.s32 %v1688, %v1690
        %v1692 = vrot.slane %v1685, %v1691
        %v1693 = vcombine.low %v1684, %v1692
        %v1695 = vunpack.c.l.s4 1934713408
        %v1696 = vunpack.c.0.s8 %v1695
        %v1697 = vlaneseq
        %v1698 = vshrl.u32 %v1697, 7
        %v1699 = vsub.s32 %v1696, %v1698
        %v1700 = vrot.slane %v1693, %v1699
        %v1701 = vcombine.high %v1700, 0
        %v1704 = vpack.i.b16 %v1700, %v1675
        %v1705 = vshrl.u32 %v1675, 16
        %v1706 = vshrl.u32 %v1700, 16
        %v1707 = vpack.i.b16 %v1706, %v1705
        %v1710 = vpack.i.b16 %v1701, %v1676
        %v1711 = vshrl.u32 %v1676, 16
        %v1712 = vshrl.u32 %v1701, 16
        %v1713 = vpack.i.b16 %v1712, %v1711
        %v1715 = vsel %vm1062, %v1704, 0
        %v1718 = vsel %vm1062, %v1292, 0
        %1720 = vmatprep.subr.bf16.mxu0 0
        %1721 = vmatpush1.bf16.xpose.msra.mxu0 0
        %1722 = vmatprep.subr.bf16.mxu0 0
        %1723 = vmatpush1.bf16.xpose.msra.mxu0 0
        %1724 = vmatprep.subr.bf16.mxu0 0
        %1725 = vmatpush1.bf16.xpose.msra.mxu0 0
        %1726 = vmatprep.subr.bf16.mxu0 0
        %1727 = vmatpush1.bf16.xpose.msra.mxu0 0
        %1728 = vmatprep.subr.bf16.mxu0 0
        %1729 = vmatpush1.bf16.xpose.msra.mxu0 0
        %1730 = vmatprep.subr.bf16.mxu0 0
        %1731 = vmatpush1.bf16.xpose.msra.mxu0 0
        %1732 = vmatprep.subr.bf16.mxu0 0
        %1733 = vmatpush1.bf16.xpose.msra.mxu0 0
        %1734 = vmatprep.subr.bf16.mxu0 0
        %1735 = vmatpush1.bf16.xpose.msra.mxu0 %v1718
        %1736 = vmatprep.subr.bf16.mxu0 0
        %1737 = vmatpush2.bf16.xpose.msra.mxu0 0
        %1738 = vmatprep.subr.bf16.mxu0 0
        %1739 = vmatpush2.bf16.xpose.msra.mxu0 0
        %1740 = vmatprep.subr.bf16.mxu0 0
        %1741 = vmatpush2.bf16.xpose.msra.mxu0 0
        %1742 = vmatprep.subr.bf16.mxu0 0
        %1743 = vmatpush2.bf16.xpose.msra.mxu0 0
        %1744 = vmatprep.subr.bf16.mxu0 0
        %1745 = vmatpush2.bf16.xpose.msra.mxu0 0
        %1746 = vmatprep.subr.bf16.mxu0 0
        %1747 = vmatpush2.bf16.xpose.msra.mxu0 0
        %1748 = vmatprep.subr.bf16.mxu0 0
        %1749 = vmatpush2.bf16.xpose.msra.mxu0 0
        %1750 = vmatprep.subr.bf16.mxu0 0
        %1751 = vmatpush2.bf16.xpose.msra.mxu0 0
        %1752 = vmatprep.mubr.bf16.mxu0 0
        %1753 = vmatmul.mubr.bf16.gmra.mxu0 %v1715
        %v1754 = vpop.f32.mrf.mxu0
        %v1755 = vadd.f32 0.0, %v1754
        %v1756 = vpop.f32.mrf.mxu0
        %v1757 = vpop.f32.mrf.mxu0
        %v1758 = vpop.f32.mrf.mxu0
        %1759 = vdwg.mxu0
        %v1761 = vsel %vm1062, %v1707, 0
        %v1764 = vsel %vm1062, %v1293, 0
        %1766 = vmatprep.subr.bf16.mxu0 0
        %1767 = vmatpush1.bf16.xpose.msra.mxu0 0
        %1768 = vmatprep.subr.bf16.mxu0 0
        %1769 = vmatpush1.bf16.xpose.msra.mxu0 0
        %1770 = vmatprep.subr.bf16.mxu0 0
        %1771 = vmatpush1.bf16.xpose.msra.mxu0 0
        %1772 = vmatprep.subr.bf16.mxu0 0
        %1773 = vmatpush1.bf16.xpose.msra.mxu0 0
        %1774 = vmatprep.subr.bf16.mxu0 0
        %1775 = vmatpush1.bf16.xpose.msra.mxu0 0
        %1776 = vmatprep.subr.bf16.mxu0 0
        %1777 = vmatpush1.bf16.xpose.msra.mxu0 0
        %1778 = vmatprep.subr.bf16.mxu0 0
        %1779 = vmatpush1.bf16.xpose.msra.mxu0 0
        %1780 = vmatprep.subr.bf16.mxu0 0
        %1781 = vmatpush1.bf16.xpose.msra.mxu0 %v1764
        %1782 = vmatprep.subr.bf16.mxu0 0
        %1783 = vmatpush2.bf16.xpose.msra.mxu0 0
        %1784 = vmatprep.subr.bf16.mxu0 0
        %1785 = vmatpush2.bf16.xpose.msra.mxu0 0
        %1786 = vmatprep.subr.bf16.mxu0 0
        %1787 = vmatpush2.bf16.xpose.msra.mxu0 0
        %1788 = vmatprep.subr.bf16.mxu0 0
        %1789 = vmatpush2.bf16.xpose.msra.mxu0 0
        %1790 = vmatprep.subr.bf16.mxu0 0
        %1791 = vmatpush2.bf16.xpose.msra.mxu0 0
        %1792 = vmatprep.subr.bf16.mxu0 0
        %1793 = vmatpush2.bf16.xpose.msra.mxu0 0
        %1794 = vmatprep.subr.bf16.mxu0 0
        %1795 = vmatpush2.bf16.xpose.msra.mxu0 0
        %1796 = vmatprep.subr.bf16.mxu0 0
        %1797 = vmatpush2.bf16.xpose.msra.mxu0 0
        %1798 = vmatprep.mubr.bf16.mxu0 0
        %1799 = vmatmul.mubr.bf16.gmra.mxu0 %v1761
        %v1800 = vpop.f32.mrf.mxu0
        %v1801 = vadd.f32 0.0, %v1800
        %v1802 = vpop.f32.mrf.mxu0
        %v1803 = vpop.f32.mrf.mxu0
        %v1804 = vpop.f32.mrf.mxu0
        %1805 = vdwg.mxu0
        %v1807 = vsel %vm1062, %v1710, 0
        %v1810 = vsel %vm1062, %v1294, 0
        %1812 = vmatprep.subr.bf16.mxu0 0
        %1813 = vmatpush1.bf16.xpose.msra.mxu0 0
        %1814 = vmatprep.subr.bf16.mxu0 0
        %1815 = vmatpush1.bf16.xpose.msra.mxu0 0
        %1816 = vmatprep.subr.bf16.mxu0 0
        %1817 = vmatpush1.bf16.xpose.msra.mxu0 0
        %1818 = vmatprep.subr.bf16.mxu0 0
        %1819 = vmatpush1.bf16.xpose.msra.mxu0 0
        %1820 = vmatprep.subr.bf16.mxu0 0
        %1821 = vmatpush1.bf16.xpose.msra.mxu0 0
        %1822 = vmatprep.subr.bf16.mxu0 0
        %1823 = vmatpush1.bf16.xpose.msra.mxu0 0
        %1824 = vmatprep.subr.bf16.mxu0 0
        %1825 = vmatpush1.bf16.xpose.msra.mxu0 0
        %1826 = vmatprep.subr.bf16.mxu0 0
        %1827 = vmatpush1.bf16.xpose.msra.mxu0 %v1810
        %1828 = vmatprep.subr.bf16.mxu0 0
        %1829 = vmatpush2.bf16.xpose.msra.mxu0 0
        %1830 = vmatprep.subr.bf16.mxu0 0
        %1831 = vmatpush2.bf16.xpose.msra.mxu0 0
        %1832 = vmatprep.subr.bf16.mxu0 0
        %1833 = vmatpush2.bf16.xpose.msra.mxu0 0
        %1834 = vmatprep.subr.bf16.mxu0 0
        %1835 = vmatpush2.bf16.xpose.msra.mxu0 0
        %1836 = vmatprep.subr.bf16.mxu0 0
        %1837 = vmatpush2.bf16.xpose.msra.mxu0 0
        %1838 = vmatprep.subr.bf16.mxu0 0
        %1839 = vmatpush2.bf16.xpose.msra.mxu0 0
        %1840 = vmatprep.subr.bf16.mxu0 0
        %1841 = vmatpush2.bf16.xpose.msra.mxu0 0
        %1842 = vmatprep.subr.bf16.mxu0 0
        %1843 = vmatpush2.bf16.xpose.msra.mxu0 0
        %1844 = vmatprep.mubr.bf16.mxu0 0
        %1845 = vmatmul.mubr.bf16.gmra.mxu0 %v1807
        %v1846 = vpop.f32.mrf.mxu0
        %v1847 = vadd.f32 0.0, %v1846
        %v1848 = vpop.f32.mrf.mxu0
        %v1849 = vpop.f32.mrf.mxu0
        %v1850 = vpop.f32.mrf.mxu0
        %1851 = vdwg.mxu0
        %v1853 = vsel %vm1062, %v1713, 0
        %v1856 = vsel %vm1062, %v1295, 0
        %1858 = vmatprep.subr.bf16.mxu0 0
        %1859 = vmatpush1.bf16.xpose.msra.mxu0 0
        %1860 = vmatprep.subr.bf16.mxu0 0
        %1861 = vmatpush1.bf16.xpose.msra.mxu0 0
        %1862 = vmatprep.subr.bf16.mxu0 0
        %1863 = vmatpush1.bf16.xpose.msra.mxu0 0
        %1864 = vmatprep.subr.bf16.mxu0 0
        %1865 = vmatpush1.bf16.xpose.msra.mxu0 0
        %1866 = vmatprep.subr.bf16.mxu0 0
        %1867 = vmatpush1.bf16.xpose.msra.mxu0 0
        %1868 = vmatprep.subr.bf16.mxu0 0
        %1869 = vmatpush1.bf16.xpose.msra.mxu0 0
        %1870 = vmatprep.subr.bf16.mxu0 0
        %1871 = vmatpush1.bf16.xpose.msra.mxu0 0
        %1872 = vmatprep.subr.bf16.mxu0 0
        %1873 = vmatpush1.bf16.xpose.msra.mxu0 %v1856
        %1874 = vmatprep.subr.bf16.mxu0 0
        %1875 = vmatpush2.bf16.xpose.msra.mxu0 0
        %1876 = vmatprep.subr.bf16.mxu0 0
        %1877 = vmatpush2.bf16.xpose.msra.mxu0 0
        %1878 = vmatprep.subr.bf16.mxu0 0
        %1879 = vmatpush2.bf16.xpose.msra.mxu0 0
        %1880 = vmatprep.subr.bf16.mxu0 0
        %1881 = vmatpush2.bf16.xpose.msra.mxu0 0
        %1882 = vmatprep.subr.bf16.mxu0 0
        %1883 = vmatpush2.bf16.xpose.msra.mxu0 0
        %1884 = vmatprep.subr.bf16.mxu0 0
        %1885 = vmatpush2.bf16.xpose.msra.mxu0 0
        %1886 = vmatprep.subr.bf16.mxu0 0
        %1887 = vmatpush2.bf16.xpose.msra.mxu0 0
        %1888 = vmatprep.subr.bf16.mxu0 0
        %1889 = vmatpush2.bf16.xpose.msra.mxu0 0
        %1890 = vmatprep.mubr.bf16.mxu0 0
        %1891 = vmatmul.mubr.bf16.gmra.mxu0 %v1853
        %v1892 = vpop.f32.mrf.mxu0
        %v1893 = vadd.f32 0.0, %v1892
        %v1894 = vpop.f32.mrf.mxu0
        %v1895 = vpop.f32.mrf.mxu0
        %v1896 = vpop.f32.mrf.mxu0
        %1897 = vdwg.mxu0
        %1898 = vxpose.xlu0.b32.start [1/16] %v1755, 128
        %1899 = vxpose.xlu0.b32.cont [2/16] 0.0, 128
        %1900 = vxpose.xlu0.b32.cont [3/16] 0.0, 128
        %1901 = vxpose.xlu0.b32.cont [4/16] 0.0, 128
        %1902 = vxpose.xlu0.b32.cont [5/16] 0.0, 128
        %1903 = vxpose.xlu0.b32.cont [6/16] 0.0, 128
        %1904 = vxpose.xlu0.b32.cont [7/16] 0.0, 128
        %1905 = vxpose.xlu0.b32.cont [8/16] 0.0, 128
        %1906 = vxpose.xlu0.b32.cont [9/16] 0.0, 128
        %1907 = vxpose.xlu0.b32.cont [10/16] 0.0, 128
        %1908 = vxpose.xlu0.b32.cont [11/16] 0.0, 128
        %1909 = vxpose.xlu0.b32.cont [12/16] 0.0, 128
        %1910 = vxpose.xlu0.b32.cont [13/16] 0.0, 128
        %1911 = vxpose.xlu0.b32.cont [14/16] 0.0, 128
        %1912 = vxpose.xlu0.b32.cont [15/16] 0.0, 128
        %1913 = vxpose.xlu0.b32.end [16/16] 0.0, 128
        %v1914 = vpop.trf.xlu0
        %v1915 = vpop.trf.xlu0
        %v1916 = vpop.trf.xlu0
        %v1917 = vpop.trf.xlu0
        %v1918 = vpop.trf.xlu0
        %v1919 = vpop.trf.xlu0
        %v1920 = vpop.trf.xlu0
        %v1921 = vpop.trf.xlu0
        %v1922 = vpop.trf.xlu0
        %v1923 = vpop.trf.xlu0
        %v1924 = vpop.trf.xlu0
        %v1925 = vpop.trf.xlu0
        %v1926 = vpop.trf.xlu0
        %v1927 = vpop.trf.xlu0
        %v1928 = vpop.trf.xlu0
        %v1929 = vpop.trf.xlu0
        %1930 = vxpose.xlu0.b32.start [1/16] %v1801, 128
        %1931 = vxpose.xlu0.b32.cont [2/16] 0.0, 128
        %1932 = vxpose.xlu0.b32.cont [3/16] 0.0, 128
        %1933 = vxpose.xlu0.b32.cont [4/16] 0.0, 128
        %1934 = vxpose.xlu0.b32.cont [5/16] 0.0, 128
        %1935 = vxpose.xlu0.b32.cont [6/16] 0.0, 128
        %1936 = vxpose.xlu0.b32.cont [7/16] 0.0, 128
        %1937 = vxpose.xlu0.b32.cont [8/16] 0.0, 128
        %1938 = vxpose.xlu0.b32.cont [9/16] 0.0, 128
        %1939 = vxpose.xlu0.b32.cont [10/16] 0.0, 128
        %1940 = vxpose.xlu0.b32.cont [11/16] 0.0, 128
        %1941 = vxpose.xlu0.b32.cont [12/16] 0.0, 128
        %1942 = vxpose.xlu0.b32.cont [13/16] 0.0, 128
        %1943 = vxpose.xlu0.b32.cont [14/16] 0.0, 128
        %1944 = vxpose.xlu0.b32.cont [15/16] 0.0, 128
        %1945 = vxpose.xlu0.b32.end [16/16] 0.0, 128
        %v1946 = vpop.trf.xlu0
        %v1947 = vpop.trf.xlu0
        %v1948 = vpop.trf.xlu0
        %v1949 = vpop.trf.xlu0
        %v1950 = vpop.trf.xlu0
        %v1951 = vpop.trf.xlu0
        %v1952 = vpop.trf.xlu0
        %v1953 = vpop.trf.xlu0
        %v1954 = vpop.trf.xlu0
        %v1955 = vpop.trf.xlu0
        %v1956 = vpop.trf.xlu0
        %v1957 = vpop.trf.xlu0
        %v1958 = vpop.trf.xlu0
        %v1959 = vpop.trf.xlu0
        %v1960 = vpop.trf.xlu0
        %v1961 = vpop.trf.xlu0
        %1962 = vxpose.xlu0.b32.start [1/16] %v1847, 128
        %1963 = vxpose.xlu0.b32.cont [2/16] 0.0, 128
        %1964 = vxpose.xlu0.b32.cont [3/16] 0.0, 128
        %1965 = vxpose.xlu0.b32.cont [4/16] 0.0, 128
        %1966 = vxpose.xlu0.b32.cont [5/16] 0.0, 128
        %1967 = vxpose.xlu0.b32.cont [6/16] 0.0, 128
        %1968 = vxpose.xlu0.b32.cont [7/16] 0.0, 128
        %1969 = vxpose.xlu0.b32.cont [8/16] 0.0, 128
        %1970 = vxpose.xlu0.b32.cont [9/16] 0.0, 128
        %1971 = vxpose.xlu0.b32.cont [10/16] 0.0, 128
        %1972 = vxpose.xlu0.b32.cont [11/16] 0.0, 128
        %1973 = vxpose.xlu0.b32.cont [12/16] 0.0, 128
        %1974 = vxpose.xlu0.b32.cont [13/16] 0.0, 128
        %1975 = vxpose.xlu0.b32.cont [14/16] 0.0, 128
        %1976 = vxpose.xlu0.b32.cont [15/16] 0.0, 128
        %1977 = vxpose.xlu0.b32.end [16/16] 0.0, 128
        %v1978 = vpop.trf.xlu0
        %v1979 = vpop.trf.xlu0
        %v1980 = vpop.trf.xlu0
        %v1981 = vpop.trf.xlu0
        %v1982 = vpop.trf.xlu0
        %v1983 = vpop.trf.xlu0
        %v1984 = vpop.trf.xlu0
        %v1985 = vpop.trf.xlu0
        %v1986 = vpop.trf.xlu0
        %v1987 = vpop.trf.xlu0
        %v1988 = vpop.trf.xlu0
        %v1989 = vpop.trf.xlu0
        %v1990 = vpop.trf.xlu0
        %v1991 = vpop.trf.xlu0
        %v1992 = vpop.trf.xlu0
        %v1993 = vpop.trf.xlu0
        %1994 = vxpose.xlu0.b32.start [1/16] %v1893, 128
        %1995 = vxpose.xlu0.b32.cont [2/16] 0.0, 128
        %1996 = vxpose.xlu0.b32.cont [3/16] 0.0, 128
        %1997 = vxpose.xlu0.b32.cont [4/16] 0.0, 128
        %1998 = vxpose.xlu0.b32.cont [5/16] 0.0, 128
        %1999 = vxpose.xlu0.b32.cont [6/16] 0.0, 128
        %2000 = vxpose.xlu0.b32.cont [7/16] 0.0, 128
        %2001 = vxpose.xlu0.b32.cont [8/16] 0.0, 128
        %2002 = vxpose.xlu0.b32.cont [9/16] 0.0, 128
        %2003 = vxpose.xlu0.b32.cont [10/16] 0.0, 128
        %2004 = vxpose.xlu0.b32.cont [11/16] 0.0, 128
        %2005 = vxpose.xlu0.b32.cont [12/16] 0.0, 128
        %2006 = vxpose.xlu0.b32.cont [13/16] 0.0, 128
        %2007 = vxpose.xlu0.b32.cont [14/16] 0.0, 128
        %2008 = vxpose.xlu0.b32.cont [15/16] 0.0, 128
        %2009 = vxpose.xlu0.b32.end [16/16] 0.0, 128
        %v2010 = vpop.trf.xlu0
        %v2011 = vpop.trf.xlu0
        %v2012 = vpop.trf.xlu0
        %v2013 = vpop.trf.xlu0
        %v2014 = vpop.trf.xlu0
        %v2015 = vpop.trf.xlu0
        %v2016 = vpop.trf.xlu0
        %v2017 = vpop.trf.xlu0
        %v2018 = vpop.trf.xlu0
        %v2019 = vpop.trf.xlu0
        %v2020 = vpop.trf.xlu0
        %v2021 = vpop.trf.xlu0
        %v2022 = vpop.trf.xlu0
        %v2023 = vpop.trf.xlu0
        %v2024 = vpop.trf.xlu0
        %v2025 = vpop.trf.xlu0
        %v2026 = vcombine.low %v1914, %v1978
        %v2027 = vcombine.high %v1914, %v1978
        %v2029 = vunpack.c.l.s4 1983009808
        %v2030 = vunpack.c.0.s8 %v2029
        %v2031 = vlaneseq
        %v2032 = vshrl.u32 %v2031, 7
        %v2033 = vsub.s32 %v2030, %v2032
        %v2034 = vrot.slane %v2026, %v2033
        %v2036 = vunpack.c.l.s4 1983009808
        %v2037 = vunpack.c.0.s8 %v2036
        %v2038 = vlaneseq
        %v2039 = vshrl.u32 %v2038, 7
        %v2040 = vsub.s32 %v2037, %v2039
        %v2041 = vrot.slane %v2027, %v2040
        %v2042 = vcombine.low %v1946, %v2010
        %v2043 = vcombine.high %v1946, %v2010
        %v2045 = vunpack.c.l.s4 1983009808
        %v2046 = vunpack.c.0.s8 %v2045
        %v2047 = vlaneseq
        %v2048 = vshrl.u32 %v2047, 7
        %v2049 = vsub.s32 %v2046, %v2048
        %v2050 = vrot.slane %v2042, %v2049
        %v2052 = vunpack.c.l.s4 1983009808
        %v2053 = vunpack.c.0.s8 %v2052
        %v2054 = vlaneseq
        %v2055 = vshrl.u32 %v2054, 7
        %v2056 = vsub.s32 %v2053, %v2055
        %v2057 = vrot.slane %v2043, %v2056
        %v2058 = vcombine.low %v2034, %v2050
        %v2059 = vcombine.high %v2034, %v2050
        %v2061 = vunpack.c.l.s4 1934713408
        %v2062 = vunpack.c.0.s8 %v2061
        %v2063 = vlaneseq
        %v2064 = vshrl.u32 %v2063, 7
        %v2065 = vsub.s32 %v2062, %v2064
        %v2066 = vrot.slane %v2058, %v2065
        %v2068 = vunpack.c.l.s4 1934713408
        %v2069 = vunpack.c.0.s8 %v2068
        %v2070 = vlaneseq
        %v2071 = vshrl.u32 %v2070, 7
        %v2072 = vsub.s32 %v2069, %v2071
        %v2073 = vrot.slane %v2059, %v2072
        %v2074 = vcombine.low %v2041, %v2057
        %v2075 = vcombine.high %v2041, %v2057
        %v2077 = vunpack.c.l.s4 1934713408
        %v2078 = vunpack.c.0.s8 %v2077
        %v2079 = vlaneseq
        %v2080 = vshrl.u32 %v2079, 7
        %v2081 = vsub.s32 %v2078, %v2080
        %v2082 = vrot.slane %v2074, %v2081
        %v2084 = vunpack.c.l.s4 1934713408
        %v2085 = vunpack.c.0.s8 %v2084
        %v2086 = vlaneseq
        %v2087 = vshrl.u32 %v2086, 7
        %v2088 = vsub.s32 %v2085, %v2087
        %v2089 = vrot.slane %v2075, %v2088
        %v2090 = vcombine.high %v2066, 0.0
        %v2091 = vcombine.high %v2073, 0.0
        %v2092 = vcombine.high %v2082, 0.0
        %v2093 = vcombine.high %v2089, 0.0
        %v2094 = vcombine.low %v2066, %v2073
        %v2096 = vunpack.c.l.s4 1983009808
        %v2097 = vunpack.c.0.s8 %v2096
        %v2098 = vlaneseq
        %v2099 = vshrl.u32 %v2098, 7
        %v2100 = vsub.s32 %v2097, %v2099
        %v2101 = vrot.slane %v2094, %v2100
        %v2102 = vcombine.low %v2090, %v2091
        %v2104 = vunpack.c.l.s4 1983009808
        %v2105 = vunpack.c.0.s8 %v2104
        %v2106 = vlaneseq
        %v2107 = vshrl.u32 %v2106, 7
        %v2108 = vsub.s32 %v2105, %v2107
        %v2109 = vrot.slane %v2102, %v2108
        %v2110 = vcombine.low %v2082, %v2089
        %v2112 = vunpack.c.l.s4 1983009808
        %v2113 = vunpack.c.0.s8 %v2112
        %v2114 = vlaneseq
        %v2115 = vshrl.u32 %v2114, 7
        %v2116 = vsub.s32 %v2113, %v2115
        %v2117 = vrot.slane %v2110, %v2116
        %v2118 = vcombine.low %v2092, %v2093
        %v2120 = vunpack.c.l.s4 1983009808
        %v2121 = vunpack.c.0.s8 %v2120
        %v2122 = vlaneseq
        %v2123 = vshrl.u32 %v2122, 7
        %v2124 = vsub.s32 %v2121, %v2123
        %v2125 = vrot.slane %v2118, %v2124
        %v2126 = vcombine.low %v2101, %v2109
        %v2127 = vcombine.high %v2101, %v2109
        %v2129 = vunpack.c.l.s4 1934713408
        %v2130 = vunpack.c.0.s8 %v2129
        %v2131 = vlaneseq
        %v2132 = vshrl.u32 %v2131, 7
        %v2133 = vsub.s32 %v2130, %v2132
        %v2134 = vrot.slane %v2126, %v2133
        %v2136 = vunpack.c.l.s4 1934713408
        %v2137 = vunpack.c.0.s8 %v2136
        %v2138 = vlaneseq
        %v2139 = vshrl.u32 %v2138, 7
        %v2140 = vsub.s32 %v2137, %v2139
        %v2141 = vrot.slane %v2127, %v2140
        %v2142 = vcombine.low %v2117, %v2125
        %v2143 = vcombine.high %v2117, %v2125
        %v2145 = vunpack.c.l.s4 1934713408
        %v2146 = vunpack.c.0.s8 %v2145
        %v2147 = vlaneseq
        %v2148 = vshrl.u32 %v2147, 7
        %v2149 = vsub.s32 %v2146, %v2148
        %v2150 = vrot.slane %v2142, %v2149
        %v2152 = vunpack.c.l.s4 1934713408
        %v2153 = vunpack.c.0.s8 %v2152
        %v2154 = vlaneseq
        %v2155 = vshrl.u32 %v2154, 7
        %v2156 = vsub.s32 %v2153, %v2155
        %v2157 = vrot.slane %v2143, %v2156
        %v2158 = vcombine.low %v2134, %v2150
        %v2159 = vcombine.high %v2134, %v2150
        %v2160 = vcombine.low %v2141, %v2157
        %v2161 = vcombine.high %v2141, %v2157
        %2163 = vrot.lane.b32.xlu0 %v2159, 8
        %v2164 = vpop.permute.xlu0 %2163
        %2167 = vrot.lane.b32.xlu0 %v2160, 16
        %v2168 = vpop.permute.xlu0 %2167
        %2171 = vrot.lane.b32.xlu0 %v2161, 24
        %v2172 = vpop.permute.xlu0 %2171
        %v2174 = vsel %vm1062, %v2158, %v2164
        %vm2175 = vcmask 130048
        %v2176 = vsel %vm2175, %v2174, %v2168
        %vm2177 = vcmask 195584
        %v2178 = vsel %vm2177, %v2176, %v2172
        %v2179 = vpack.c.bf16 %v2178, %v2178
        %v2180 = vlaneseq
        %v2181 = vshrl.u32 %v2180, 7
        %v2182 = vsub.s32 0, %v2181
        %v2183 = vrot.slane %v246, %v2182
        %v2188 = vunpack.c.l.b16 %v229
        %v2189 = vunpack.c.l.b16 %v230
        %v2190 = vunpack.c.l.b16 %v231
        %v2191 = vunpack.c.l.b16 %v232
        %v2192 = vpack.c.b16 %v2189, %v2188
        %v2193 = vpack.c.b16 %v2191, %v2190
        %v2197 = vsel %vm270, %v2179, 0
        %2199 = vmatprep.subr.bf16.mxu0 0
        %2200 = vmatpush1.bf16.msra.mxu0 0
        %2201 = vmatprep.subr.bf16.mxu0 0
        %2202 = vmatpush1.bf16.msra.mxu0 0
        %2203 = vmatprep.subr.bf16.mxu0 0
        %2204 = vmatpush1.bf16.msra.mxu0 0
        %2205 = vmatprep.subr.bf16.mxu0 0
        %2206 = vmatpush1.bf16.msra.mxu0 0
        %2207 = vmatprep.subr.bf16.mxu0 0
        %2208 = vmatpush1.bf16.msra.mxu0 0
        %2209 = vmatprep.subr.bf16.mxu0 0
        %2210 = vmatpush1.bf16.msra.mxu0 0
        %2211 = vmatprep.subr.bf16.mxu0 0
        %2212 = vmatpush1.bf16.msra.mxu0 %v2193
        %2213 = vmatprep.subr.bf16.mxu0 0
        %2214 = vmatpush1.bf16.msra.mxu0 %v2192
        %2215 = vmatprep.subr.bf16.mxu0 0
        %2216 = vmatpush2.bf16.msra.mxu0 0
        %2217 = vmatprep.subr.bf16.mxu0 0
        %2218 = vmatpush2.bf16.msra.mxu0 0
        %2219 = vmatprep.subr.bf16.mxu0 0
        %2220 = vmatpush2.bf16.msra.mxu0 0
        %2221 = vmatprep.subr.bf16.mxu0 0
        %2222 = vmatpush2.bf16.msra.mxu0 0
        %2223 = vmatprep.subr.bf16.mxu0 0
        %2224 = vmatpush2.bf16.msra.mxu0 0
        %2225 = vmatprep.subr.bf16.mxu0 0
        %2226 = vmatpush2.bf16.msra.mxu0 0
        %2227 = vmatprep.subr.bf16.mxu0 0
        %2228 = vmatpush2.bf16.msra.mxu0 0
        %2229 = vmatprep.subr.bf16.mxu0 0
        %2230 = vmatpush2.bf16.msra.mxu0 0
        %2231 = vmatprep.mubr.bf16.mxu0 0
        %2232 = vmatmul.mubr.bf16.gmra.mxu0 %v2197
        %v2233 = vpop.f32.mrf.mxu0
        %v2234 = vadd.f32 %v2183, %v2233
        %v2235 = vpop.f32.mrf.mxu0
        %v2236 = vpop.f32.mrf.mxu0
        %v2237 = vpop.f32.mrf.mxu0
        %2238 = vdwg.mxu0
        %v2239 = vadd.f32 %v223, %v2234
        %v2240 = vsel %vm270, %v2239, 0.0
        %2241 = vadd.xlane.f32.xlu0 %v2240
        %v2242 = vpop.xlane.xlu0 %2241
        %v2243 = vrcp.pop 32.0
        %v2244 = vmul.f32 %v2242, %v2243
        %v2245 = vsub.f32 %v2239, %v2244
        %v2246 = vmul.f32 %v2245, %v2245
        %v2247 = vsel %vm270, %v2246, 0.0
        %2248 = vadd.xlane.f32.xlu0 %v2247
        %v2249 = vpop.xlane.xlu0 %2248
        %v2250 = vmul.f32 %v2249, %v2243
        %v2251 = vadd.f32 %v2250, 1e-12
        %v2252 = vrsqrt.pop %v2251
        %v2253 = vmul.f32 %v2245, %v2252
        %v2254 = vlaneseq
        %v2255 = vshrl.u32 %v2254, 7
        %v2256 = vsub.s32 0, %v2255
        %v2257 = vrot.slane %v247, %v2256
        %v2258 = vmul.f32 %v2253, %v2257
        %v2259 = vlaneseq
        %v2260 = vshrl.u32 %v2259, 7
        %v2261 = vsub.s32 0, %v2260
        %v2262 = vrot.slane %v248, %v2261
        %v2263 = vadd.f32 %v2258, %v2262
        %v2264 = vpack.c.bf16 %v2263, %v2263
        %v2265 = vlaneseq
        %v2266 = vshrl.u32 %v2265, 7
        %v2267 = vsub.s32 0, %v2266
        %v2268 = vrot.slane %v249, %v2267
        %v2273 = vunpack.c.l.b16 %v233
        %v2274 = vunpack.c.l.b16 %v234
        %v2275 = vunpack.c.l.b16 %v235
        %v2276 = vunpack.c.l.b16 %v236
        %v2277 = vpack.c.b16 %v2274, %v2273
        %v2278 = vpack.c.b16 %v2276, %v2275
        %v2282 = vsel %vm270, %v2264, 0
        %2284 = vmatprep.subr.bf16.mxu0 0
        %2285 = vmatpush1.bf16.msra.mxu0 0
        %2286 = vmatprep.subr.bf16.mxu0 0
        %2287 = vmatpush1.bf16.msra.mxu0 0
        %2288 = vmatprep.subr.bf16.mxu0 0
        %2289 = vmatpush1.bf16.msra.mxu0 0
        %2290 = vmatprep.subr.bf16.mxu0 0
        %2291 = vmatpush1.bf16.msra.mxu0 0
        %2292 = vmatprep.subr.bf16.mxu0 0
        %2293 = vmatpush1.bf16.msra.mxu0 0
        %2294 = vmatprep.subr.bf16.mxu0 0
        %2295 = vmatpush1.bf16.msra.mxu0 0
        %2296 = vmatprep.subr.bf16.mxu0 0
        %2297 = vmatpush1.bf16.msra.mxu0 %v2278
        %2298 = vmatprep.subr.bf16.mxu0 0
        %2299 = vmatpush1.bf16.msra.mxu0 %v2277
        %2300 = vmatprep.subr.bf16.mxu0 0
        %2301 = vmatpush2.bf16.msra.mxu0 0
        %2302 = vmatprep.subr.bf16.mxu0 0
        %2303 = vmatpush2.bf16.msra.mxu0 0
        %2304 = vmatprep.subr.bf16.mxu0 0
        %2305 = vmatpush2.bf16.msra.mxu0 0
        %2306 = vmatprep.subr.bf16.mxu0 0
        %2307 = vmatpush2.bf16.msra.mxu0 0
        %2308 = vmatprep.subr.bf16.mxu0 0
        %2309 = vmatpush2.bf16.msra.mxu0 0
        %2310 = vmatprep.subr.bf16.mxu0 0
        %2311 = vmatpush2.bf16.msra.mxu0 0
        %2312 = vmatprep.subr.bf16.mxu0 0
        %2313 = vmatpush2.bf16.msra.mxu0 0
        %2314 = vmatprep.subr.bf16.mxu0 0
        %2315 = vmatpush2.bf16.msra.mxu0 0
        %2316 = vmatprep.mubr.bf16.mxu0 0
        %2317 = vmatmul.mubr.bf16.gmra.mxu0 %v2282
        %v2318 = vpop.f32.mrf.mxu0
        %v2319 = vadd.f32 %v2268, %v2318
        %v2320 = vpop.f32.mrf.mxu0
        %v2321 = vpop.f32.mrf.mxu0
        %v2322 = vpop.f32.mrf.mxu0
        %2323 = vdwg.mxu0
        %v2324 = vmul.f32 %v2319, %v2319
        %v2325 = vmul.f32 %v2319, %v2324
        %v2326 = vmul.f32 %v2325, 0.044715
        %v2327 = vadd.f32 %v2319, %v2326
        %v2328 = vmul.f32 %v2327, 0.7978846
        %v2329 = vtanh.pop %v2328
        %v2330 = vadd.f32 %v2329, 1.0
        %v2331 = vmul.f32 %v2330, 0.5
        %v2332 = vmul.f32 %v2319, %v2331
        %v2333 = vpack.c.bf16 %v2332, %v2332
        %v2334 = vlaneseq
        %v2335 = vshrl.u32 %v2334, 7
        %v2336 = vsub.s32 0, %v2335
        %v2337 = vrot.slane %v250, %v2336
        %v2346 = vunpack.c.l.b16 %v237
        %v2347 = vunpack.c.l.b16 %v238
        %v2348 = vunpack.c.l.b16 %v239
        %v2349 = vunpack.c.l.b16 %v240
        %v2350 = vunpack.c.l.b16 %v241
        %v2351 = vunpack.c.l.b16 %v242
        %v2352 = vunpack.c.l.b16 %v243
        %v2353 = vunpack.c.l.b16 %v244
        %v2354 = vpack.c.b16 %v2347, %v2346
        %v2355 = vpack.c.b16 %v2349, %v2348
        %v2356 = vpack.c.b16 %v2351, %v2350
        %v2357 = vpack.c.b16 %v2353, %v2352
        %vm2362 = vcmask 523264
        %v2364 = vsel %vm2362, %v2333, 0
        %2366 = vmatprep.subr.bf16.mxu0 0
        %2367 = vmatpush1.bf16.msra.mxu0 0
        %2368 = vmatprep.subr.bf16.mxu0 0
        %2369 = vmatpush1.bf16.msra.mxu0 0
        %2370 = vmatprep.subr.bf16.mxu0 0
        %2371 = vmatpush1.bf16.msra.mxu0 0
        %2372 = vmatprep.subr.bf16.mxu0 0
        %2373 = vmatpush1.bf16.msra.mxu0 0
        %2374 = vmatprep.subr.bf16.mxu0 0
        %2375 = vmatpush1.bf16.msra.mxu0 %v2357
        %2376 = vmatprep.subr.bf16.mxu0 0
        %2377 = vmatpush1.bf16.msra.mxu0 %v2356
        %2378 = vmatprep.subr.bf16.mxu0 0
        %2379 = vmatpush1.bf16.msra.mxu0 %v2355
        %2380 = vmatprep.subr.bf16.mxu0 0
        %2381 = vmatpush1.bf16.msra.mxu0 %v2354
        %2382 = vmatprep.subr.bf16.mxu0 0
        %2383 = vmatpush2.bf16.msra.mxu0 0
        %2384 = vmatprep.subr.bf16.mxu0 0
        %2385 = vmatpush2.bf16.msra.mxu0 0
        %2386 = vmatprep.subr.bf16.mxu0 0
        %2387 = vmatpush2.bf16.msra.mxu0 0
        %2388 = vmatprep.subr.bf16.mxu0 0
        %2389 = vmatpush2.bf16.msra.mxu0 0
        %2390 = vmatprep.subr.bf16.mxu0 0
        %2391 = vmatpush2.bf16.msra.mxu0 0
        %2392 = vmatprep.subr.bf16.mxu0 0
        %2393 = vmatpush2.bf16.msra.mxu0 0
        %2394 = vmatprep.subr.bf16.mxu0 0
        %2395 = vmatpush2.bf16.msra.mxu0 0
        %2396 = vmatprep.subr.bf16.mxu0 0
        %2397 = vmatpush2.bf16.msra.mxu0 0
        %2398 = vmatprep.mubr.bf16.mxu0 0
        %2399 = vmatmul.mubr.bf16.gmra.mxu0 %v2364
        %v2400 = vpop.f32.mrf.mxu0
        %v2401 = vadd.f32 %v2337, %v2400
        %v2402 = vpop.f32.mrf.mxu0
        %v2403 = vpop.f32.mrf.mxu0
        %v2404 = vpop.f32.mrf.mxu0
        %2405 = vdwg.mxu0
        %v2406 = vadd.f32 %v2263, %v2401
        %v2407 = vsel %vm270, %v2406, 0.0
        %2408 = vadd.xlane.f32.xlu0 %v2407
        %v2409 = vpop.xlane.xlu0 %2408
        %v2410 = vmul.f32 %v2409, %v2243
        %v2411 = vsub.f32 %v2406, %v2410
        %v2412 = vmul.f32 %v2411, %v2411
        %v2413 = vsel %vm270, %v2412, 0.0
        %2414 = vadd.xlane.f32.xlu0 %v2413
        %v2415 = vpop.xlane.xlu0 %2414
        %v2416 = vmul.f32 %v2415, %v2243
        %v2417 = vadd.f32 %v2416, 1e-12
        %v2418 = vrsqrt.pop %v2417
        %v2419 = vmul.f32 %v2411, %v2418
        %v2420 = vlaneseq
        %v2421 = vshrl.u32 %v2420, 7
        %v2422 = vsub.s32 0, %v2421
        %v2423 = vrot.slane %v251, %v2422
        %v2424 = vmul.f32 %v2419, %v2423
        %v2425 = vlaneseq
        %v2426 = vshrl.u32 %v2425, 7
        %v2427 = vsub.s32 0, %v2426
        %v2428 = vrot.slane %v252, %v2427
        %v2429 = vadd.f32 %v2424, %v2428
        %s2430 = scalar_lea.vmem [#allocation2], 128
        %v2431 = vld [vmem:[%s2430] sm:$0xf]
        %v2432 = vld [vmem:[%s2430 + $0x10] sm:$0xf]
        %v2433 = vld [vmem:[%s2430 + $0x20] sm:$0xf]
        %v2434 = vld [vmem:[%s2430 + $0x30] sm:$0xf]
        %v2435 = vld [vmem:[%s2430 + $0x4] sm:$0xf]
        %v2436 = vld [vmem:[%s2430 + $0x14] sm:$0xf]
        %v2437 = vld [vmem:[%s2430 + $0x24] sm:$0xf]
        %v2438 = vld [vmem:[%s2430 + $0x34] sm:$0xf]
        %v2439 = vld [vmem:[%s2430 + $0x8] sm:$0xf]
        %v2440 = vld [vmem:[%s2430 + $0x18] sm:$0xf]
        %v2441 = vld [vmem:[%s2430 + $0x28] sm:$0xf]
        %v2442 = vld [vmem:[%s2430 + $0x38] sm:$0xf]
        %v2443 = vld [vmem:[%s2430 + $0xc] sm:$0xf]
        %v2444 = vld [vmem:[%s2430 + $0x1c] sm:$0xf]
        %v2445 = vld [vmem:[%s2430 + $0x2c] sm:$0xf]
        %v2446 = vld [vmem:[%s2430 + $0x3c] sm:$0xf]
        %v2447 = vld [vmem:[%s2430 + $0x4c] sm:$0xf]
        %v2448 = vld [vmem:[%s2430 + $0x5c] sm:$0xf]
        %v2449 = vld [vmem:[%s2430 + $0x6c] sm:$0xf]
        %v2450 = vld [vmem:[%s2430 + $0x7c] sm:$0xf]
        %s2451 = scalar_lea.vmem %s3, 8
        %v2452 = vld [vmem:[%s2451] sm:$0x1]
        %v2453 = vld [vmem:[%s2451 + $0x1] sm:$0x1]
        %v2454 = vld [vmem:[%s2451 + $0x2] sm:$0x1]
        %v2455 = vld [vmem:[%s2451 + $0x3] sm:$0x1]
        %v2456 = vld [vmem:[%s2451 + $0x4] sm:$0x1]
        %v2457 = vld [vmem:[%s2451 + $0x5] sm:$0x1]
        %v2458 = vld [vmem:[%s2451 + $0x6] sm:$0x1]
        %v2459 = vld [vmem:[%s2451 + $0x7] sm:$0x1]
        %v2460 = vpack.c.bf16 %v2429, %v2429
        %v2461 = vlaneseq
        %v2462 = vshrl.u32 %v2461, 7
        %v2463 = vsub.s32 0, %v2462
        %v2464 = vrot.slane %v2452, %v2463
        %v2469 = vunpack.c.l.b16 %v2431
        %v2470 = vunpack.c.l.b16 %v2432
        %v2471 = vunpack.c.l.b16 %v2433
        %v2472 = vunpack.c.l.b16 %v2434
        %v2473 = vpack.c.b16 %v2470, %v2469
        %v2474 = vpack.c.b16 %v2472, %v2471
        %v2478 = vsel %vm270, %v2460, 0
        %2480 = vmatprep.subr.bf16.mxu0 0
        %2481 = vmatpush1.bf16.msra.mxu0 0
        %2482 = vmatprep.subr.bf16.mxu0 0
        %2483 = vmatpush1.bf16.msra.mxu0 0
        %2484 = vmatprep.subr.bf16.mxu0 0
        %2485 = vmatpush1.bf16.msra.mxu0 0
        %2486 = vmatprep.subr.bf16.mxu0 0
        %2487 = vmatpush1.bf16.msra.mxu0 0
        %2488 = vmatprep.subr.bf16.mxu0 0
        %2489 = vmatpush1.bf16.msra.mxu0 0
        %2490 = vmatprep.subr.bf16.mxu0 0
        %2491 = vmatpush1.bf16.msra.mxu0 0
        %2492 = vmatprep.subr.bf16.mxu0 0
        %2493 = vmatpush1.bf16.msra.mxu0 %v2474
        %2494 = vmatprep.subr.bf16.mxu0 0
        %2495 = vmatpush1.bf16.msra.mxu0 %v2473
        %2496 = vmatprep.subr.bf16.mxu0 0
        %2497 = vmatpush2.bf16.msra.mxu0 0
        %2498 = vmatprep.subr.bf16.mxu0 0
        %2499 = vmatpush2.bf16.msra.mxu0 0
        %2500 = vmatprep.subr.bf16.mxu0 0
        %2501 = vmatpush2.bf16.msra.mxu0 0
        %2502 = vmatprep.subr.bf16.mxu0 0
        %2503 = vmatpush2.bf16.msra.mxu0 0
        %2504 = vmatprep.subr.bf16.mxu0 0
        %2505 = vmatpush2.bf16.msra.mxu0 0
        %2506 = vmatprep.subr.bf16.mxu0 0
        %2507 = vmatpush2.bf16.msra.mxu0 0
        %2508 = vmatprep.subr.bf16.mxu0 0
        %2509 = vmatpush2.bf16.msra.mxu0 0
        %2510 = vmatprep.subr.bf16.mxu0 0
        %2511 = vmatpush2.bf16.msra.mxu0 0
        %2512 = vmatprep.mubr.bf16.mxu0 0
        %2513 = vmatmul.mubr.bf16.gmra.mxu0 %v2478
        %v2514 = vpop.f32.mrf.mxu0
        %v2515 = vadd.f32 %v2464, %v2514
        %v2516 = vpop.f32.mrf.mxu0
        %v2517 = vpop.f32.mrf.mxu0
        %v2518 = vpop.f32.mrf.mxu0
        %2519 = vdwg.mxu0
        %2521 = vrot.lane.b32.xlu0 %v2515, 120
        %v2522 = vpop.permute.xlu0 %2521
        %2524 = vrot.lane.b32.xlu0 %v2515, 112
        %v2525 = vpop.permute.xlu0 %2524
        %2527 = vrot.lane.b32.xlu0 %v2515, 104
        %v2528 = vpop.permute.xlu0 %2527
        %v2530 = vcombine.low %v2515, %v2525
        %v2531 = vcombine.high %v2515, %v2525
        %v2533 = vunpack.c.l.s4 1983009808
        %v2534 = vunpack.c.0.s8 %v2533
        %v2535 = vlaneseq
        %v2536 = vshrl.u32 %v2535, 7
        %v2537 = vsub.s32 %v2534, %v2536
        %v2538 = vrot.slane %v2530, %v2537
        %v2540 = vunpack.c.l.s4 1983009808
        %v2541 = vunpack.c.0.s8 %v2540
        %v2542 = vlaneseq
        %v2543 = vshrl.u32 %v2542, 7
        %v2544 = vsub.s32 %v2541, %v2543
        %v2545 = vrot.slane %v2531, %v2544
        %v2546 = vcombine.low %v2522, %v2528
        %v2547 = vcombine.high %v2522, %v2528
        %v2549 = vunpack.c.l.s4 1983009808
        %v2550 = vunpack.c.0.s8 %v2549
        %v2551 = vlaneseq
        %v2552 = vshrl.u32 %v2551, 7
        %v2553 = vsub.s32 %v2550, %v2552
        %v2554 = vrot.slane %v2546, %v2553
        %v2556 = vunpack.c.l.s4 1983009808
        %v2557 = vunpack.c.0.s8 %v2556
        %v2558 = vlaneseq
        %v2559 = vshrl.u32 %v2558, 7
        %v2560 = vsub.s32 %v2557, %v2559
        %v2561 = vrot.slane %v2547, %v2560
        %v2562 = vcombine.low %v2538, %v2554
        %v2563 = vcombine.high %v2538, %v2554
        %v2565 = vunpack.c.l.s4 1934713408
        %v2566 = vunpack.c.0.s8 %v2565
        %v2567 = vlaneseq
        %v2568 = vshrl.u32 %v2567, 7
        %v2569 = vsub.s32 %v2566, %v2568
        %v2570 = vrot.slane %v2562, %v2569
        %v2572 = vunpack.c.l.s4 1934713408
        %v2573 = vunpack.c.0.s8 %v2572
        %v2574 = vlaneseq
        %v2575 = vshrl.u32 %v2574, 7
        %v2576 = vsub.s32 %v2573, %v2575
        %v2577 = vrot.slane %v2563, %v2576
        %v2578 = vcombine.low %v2545, %v2561
        %v2579 = vcombine.high %v2545, %v2561
        %v2581 = vunpack.c.l.s4 1934713408
        %v2582 = vunpack.c.0.s8 %v2581
        %v2583 = vlaneseq
        %v2584 = vshrl.u32 %v2583, 7
        %v2585 = vsub.s32 %v2582, %v2584
        %v2586 = vrot.slane %v2578, %v2585
        %v2588 = vunpack.c.l.s4 1934713408
        %v2589 = vunpack.c.0.s8 %v2588
        %v2590 = vlaneseq
        %v2591 = vshrl.u32 %v2590, 7
        %v2592 = vsub.s32 %v2589, %v2591
        %v2593 = vrot.slane %v2579, %v2592
        %v2594 = vcombine.high %v2570, 0.0
        %v2595 = vcombine.high %v2577, 0.0
        %v2596 = vcombine.high %v2586, 0.0
        %v2597 = vcombine.high %v2593, 0.0
        %v2598 = vpack.c.bf16 %v2570, %v2570
        %v2599 = vpack.c.bf16 %v2594, %v2594
        %v2600 = vpack.c.bf16 %v2577, %v2577
        %v2601 = vpack.c.bf16 %v2595, %v2595
        %v2602 = vpack.c.bf16 %v2586, %v2586
        %v2603 = vpack.c.bf16 %v2596, %v2596
        %v2604 = vpack.c.bf16 %v2593, %v2593
        %v2605 = vpack.c.bf16 %v2597, %v2597
        %2606 = vrot.lane.b32.xlu0 %v2515, 96
        %v2607 = vpop.permute.xlu0 %2606
        %2608 = vrot.lane.b32.xlu0 %v2522, 96
        %v2609 = vpop.permute.xlu0 %2608
        %2610 = vrot.lane.b32.xlu0 %v2525, 96
        %v2611 = vpop.permute.xlu0 %2610
        %2612 = vrot.lane.b32.xlu0 %v2528, 96
        %v2613 = vpop.permute.xlu0 %2612
        %v2618 = vcombine.low %v2607, %v2611
        %v2619 = vcombine.high %v2607, %v2611
        %v2621 = vunpack.c.l.s4 1983009808
        %v2622 = vunpack.c.0.s8 %v2621
        %v2623 = vlaneseq
        %v2624 = vshrl.u32 %v2623, 7
        %v2625 = vsub.s32 %v2622, %v2624
        %v2626 = vrot.slane %v2618, %v2625
        %v2628 = vunpack.c.l.s4 1983009808
        %v2629 = vunpack.c.0.s8 %v2628
        %v2630 = vlaneseq
        %v2631 = vshrl.u32 %v2630, 7
        %v2632 = vsub.s32 %v2629, %v2631
        %v2633 = vrot.slane %v2619, %v2632
        %v2634 = vcombine.low %v2609, %v2613
        %v2635 = vcombine.high %v2609, %v2613
        %v2637 = vunpack.c.l.s4 1983009808
        %v2638 = vunpack.c.0.s8 %v2637
        %v2639 = vlaneseq
        %v2640 = vshrl.u32 %v2639, 7
        %v2641 = vsub.s32 %v2638, %v2640
        %v2642 = vrot.slane %v2634, %v2641
        %v2644 = vunpack.c.l.s4 1983009808
        %v2645 = vunpack.c.0.s8 %v2644
        %v2646 = vlaneseq
        %v2647 = vshrl.u32 %v2646, 7
        %v2648 = vsub.s32 %v2645, %v2647
        %v2649 = vrot.slane %v2635, %v2648
        %v2650 = vcombine.low %v2626, %v2642
        %v2651 = vcombine.high %v2626, %v2642
        %v2653 = vunpack.c.l.s4 1934713408
        %v2654 = vunpack.c.0.s8 %v2653
        %v2655 = vlaneseq
        %v2656 = vshrl.u32 %v2655, 7
        %v2657 = vsub.s32 %v2654, %v2656
        %v2658 = vrot.slane %v2650, %v2657
        %v2660 = vunpack.c.l.s4 1934713408
        %v2661 = vunpack.c.0.s8 %v2660
        %v2662 = vlaneseq
        %v2663 = vshrl.u32 %v2662, 7
        %v2664 = vsub.s32 %v2661, %v2663
        %v2665 = vrot.slane %v2651, %v2664
        %v2666 = vcombine.low %v2633, %v2649
        %v2667 = vcombine.high %v2633, %v2649
        %v2669 = vunpack.c.l.s4 1934713408
        %v2670 = vunpack.c.0.s8 %v2669
        %v2671 = vlaneseq
        %v2672 = vshrl.u32 %v2671, 7
        %v2673 = vsub.s32 %v2670, %v2672
        %v2674 = vrot.slane %v2666, %v2673
        %v2676 = vunpack.c.l.s4 1934713408
        %v2677 = vunpack.c.0.s8 %v2676
        %v2678 = vlaneseq
        %v2679 = vshrl.u32 %v2678, 7
        %v2680 = vsub.s32 %v2677, %v2679
        %v2681 = vrot.slane %v2667, %v2680
        %v2682 = vcombine.high %v2658, 0.0
        %v2683 = vcombine.high %v2665, 0.0
        %v2684 = vcombine.high %v2674, 0.0
        %v2685 = vcombine.high %v2681, 0.0
        %v2686 = vpack.c.bf16 %v2658, %v2658
        %v2687 = vpack.c.bf16 %v2682, %v2682
        %v2688 = vpack.c.bf16 %v2665, %v2665
        %v2689 = vpack.c.bf16 %v2683, %v2683
        %v2690 = vpack.c.bf16 %v2674, %v2674
        %v2691 = vpack.c.bf16 %v2684, %v2684
        %v2692 = vpack.c.bf16 %v2681, %v2681
        %v2693 = vpack.c.bf16 %v2685, %v2685
        %2694 = vrot.lane.b32.xlu0 %v2515, 64
        %v2695 = vpop.permute.xlu0 %2694
        %2696 = vrot.lane.b32.xlu0 %v2522, 64
        %v2697 = vpop.permute.xlu0 %2696
        %2698 = vrot.lane.b32.xlu0 %v2525, 64
        %v2699 = vpop.permute.xlu0 %2698
        %2700 = vrot.lane.b32.xlu0 %v2528, 64
        %v2701 = vpop.permute.xlu0 %2700
        %v2706 = vcombine.low %v2695, %v2699
        %v2707 = vcombine.high %v2695, %v2699
        %v2709 = vunpack.c.l.s4 1983009808
        %v2710 = vunpack.c.0.s8 %v2709
        %v2711 = vlaneseq
        %v2712 = vshrl.u32 %v2711, 7
        %v2713 = vsub.s32 %v2710, %v2712
        %v2714 = vrot.slane %v2706, %v2713
        %v2716 = vunpack.c.l.s4 1983009808
        %v2717 = vunpack.c.0.s8 %v2716
        %v2718 = vlaneseq
        %v2719 = vshrl.u32 %v2718, 7
        %v2720 = vsub.s32 %v2717, %v2719
        %v2721 = vrot.slane %v2707, %v2720
        %v2722 = vcombine.low %v2697, %v2701
        %v2723 = vcombine.high %v2697, %v2701
        %v2725 = vunpack.c.l.s4 1983009808
        %v2726 = vunpack.c.0.s8 %v2725
        %v2727 = vlaneseq
        %v2728 = vshrl.u32 %v2727, 7
        %v2729 = vsub.s32 %v2726, %v2728
        %v2730 = vrot.slane %v2722, %v2729
        %v2732 = vunpack.c.l.s4 1983009808
        %v2733 = vunpack.c.0.s8 %v2732
        %v2734 = vlaneseq
        %v2735 = vshrl.u32 %v2734, 7
        %v2736 = vsub.s32 %v2733, %v2735
        %v2737 = vrot.slane %v2723, %v2736
        %v2738 = vcombine.low %v2714, %v2730
        %v2739 = vcombine.high %v2714, %v2730
        %v2741 = vunpack.c.l.s4 1934713408
        %v2742 = vunpack.c.0.s8 %v2741
        %v2743 = vlaneseq
        %v2744 = vshrl.u32 %v2743, 7
        %v2745 = vsub.s32 %v2742, %v2744
        %v2746 = vrot.slane %v2738, %v2745
        %v2748 = vunpack.c.l.s4 1934713408
        %v2749 = vunpack.c.0.s8 %v2748
        %v2750 = vlaneseq
        %v2751 = vshrl.u32 %v2750, 7
        %v2752 = vsub.s32 %v2749, %v2751
        %v2753 = vrot.slane %v2739, %v2752
        %v2754 = vcombine.low %v2721, %v2737
        %v2755 = vcombine.high %v2721, %v2737
        %v2757 = vunpack.c.l.s4 1934713408
        %v2758 = vunpack.c.0.s8 %v2757
        %v2759 = vlaneseq
        %v2760 = vshrl.u32 %v2759, 7
        %v2761 = vsub.s32 %v2758, %v2760
        %v2762 = vrot.slane %v2754, %v2761
        %v2764 = vunpack.c.l.s4 1934713408
        %v2765 = vunpack.c.0.s8 %v2764
        %v2766 = vlaneseq
        %v2767 = vshrl.u32 %v2766, 7
        %v2768 = vsub.s32 %v2765, %v2767
        %v2769 = vrot.slane %v2755, %v2768
        %v2770 = vcombine.high %v2746, 0.0
        %v2771 = vcombine.high %v2753, 0.0
        %v2772 = vcombine.high %v2762, 0.0
        %v2773 = vcombine.high %v2769, 0.0
        %v2774 = vpack.c.bf16 %v2746, %v2746
        %v2775 = vpack.c.bf16 %v2770, %v2770
        %v2776 = vpack.c.bf16 %v2753, %v2753
        %v2777 = vpack.c.bf16 %v2771, %v2771
        %v2778 = vpack.c.bf16 %v2762, %v2762
        %v2779 = vpack.c.bf16 %v2772, %v2772
        %v2780 = vpack.c.bf16 %v2769, %v2769
        %v2781 = vpack.c.bf16 %v2773, %v2773
        %v2782 = vcombine.low %v2598, %v2602
        %v2784 = vunpack.c.l.s4 1983009808
        %v2785 = vunpack.c.0.s8 %v2784
        %v2786 = vlaneseq
        %v2787 = vshrl.u32 %v2786, 7
        %v2788 = vsub.s32 %v2785, %v2787
        %v2789 = vrot.slane %v2782, %v2788
        %v2790 = vcombine.low %v2600, %v2604
        %v2792 = vunpack.c.l.s4 1983009808
        %v2793 = vunpack.c.0.s8 %v2792
        %v2794 = vlaneseq
        %v2795 = vshrl.u32 %v2794, 7
        %v2796 = vsub.s32 %v2793, %v2795
        %v2797 = vrot.slane %v2790, %v2796
        %v2798 = vcombine.low %v2789, %v2797
        %v2800 = vunpack.c.l.s4 1934713408
        %v2801 = vunpack.c.0.s8 %v2800
        %v2802 = vlaneseq
        %v2803 = vshrl.u32 %v2802, 7
        %v2804 = vsub.s32 %v2801, %v2803
        %v2805 = vrot.slane %v2798, %v2804
        %v2806 = vcombine.high %v2805, 0
        %v2807 = vcombine.low %v2599, %v2603
        %v2809 = vunpack.c.l.s4 1983009808
        %v2810 = vunpack.c.0.s8 %v2809
        %v2811 = vlaneseq
        %v2812 = vshrl.u32 %v2811, 7
        %v2813 = vsub.s32 %v2810, %v2812
        %v2814 = vrot.slane %v2807, %v2813
        %v2815 = vcombine.low %v2601, %v2605
        %v2817 = vunpack.c.l.s4 1983009808
        %v2818 = vunpack.c.0.s8 %v2817
        %v2819 = vlaneseq
        %v2820 = vshrl.u32 %v2819, 7
        %v2821 = vsub.s32 %v2818, %v2820
        %v2822 = vrot.slane %v2815, %v2821
        %v2823 = vcombine.low %v2814, %v2822
        %v2825 = vunpack.c.l.s4 1934713408
        %v2826 = vunpack.c.0.s8 %v2825
        %v2827 = vlaneseq
        %v2828 = vshrl.u32 %v2827, 7
        %v2829 = vsub.s32 %v2826, %v2828
        %v2830 = vrot.slane %v2823, %v2829
        %v2831 = vcombine.high %v2830, 0
        %v2834 = vpack.i.b16 %v2830, %v2805
        %v2835 = vshrl.u32 %v2805, 16
        %v2836 = vshrl.u32 %v2830, 16
        %v2837 = vpack.i.b16 %v2836, %v2835
        %v2840 = vpack.i.b16 %v2831, %v2806
        %v2841 = vshrl.u32 %v2806, 16
        %v2842 = vshrl.u32 %v2831, 16
        %v2843 = vpack.i.b16 %v2842, %v2841
        %2844 = vxpose.xlu0.c.b16.start [1/8] %v2686, 128
        %2845 = vxpose.xlu0.c.b16.cont [2/8] 0, 128
        %2846 = vxpose.xlu0.c.b16.cont [3/8] 0, 128
        %2847 = vxpose.xlu0.c.b16.cont [4/8] 0, 128
        %2848 = vxpose.xlu0.c.b16.cont [5/8] 0, 128
        %2849 = vxpose.xlu0.c.b16.cont [6/8] 0, 128
        %2850 = vxpose.xlu0.c.b16.cont [7/8] 0, 128
        %2851 = vxpose.xlu0.c.b16.end [8/8] 0, 128
        %v2852 = vpop.trf.xlu0
        %v2853 = vpop.trf.xlu0
        %v2854 = vpop.trf.xlu0
        %v2855 = vpop.trf.xlu0
        %v2856 = vpop.trf.xlu0
        %v2857 = vpop.trf.xlu0
        %v2858 = vpop.trf.xlu0
        %v2859 = vpop.trf.xlu0
        %2860 = vxpose.xlu0.c.b16.start [1/8] %v2687, 128
        %2861 = vxpose.xlu0.c.b16.cont [2/8] 0, 128
        %2862 = vxpose.xlu0.c.b16.cont [3/8] 0, 128
        %2863 = vxpose.xlu0.c.b16.cont [4/8] 0, 128
        %2864 = vxpose.xlu0.c.b16.cont [5/8] 0, 128
        %2865 = vxpose.xlu0.c.b16.cont [6/8] 0, 128
        %2866 = vxpose.xlu0.c.b16.cont [7/8] 0, 128
        %2867 = vxpose.xlu0.c.b16.end [8/8] 0, 128
        %v2868 = vpop.trf.xlu0
        %v2869 = vpop.trf.xlu0
        %v2870 = vpop.trf.xlu0
        %v2871 = vpop.trf.xlu0
        %v2872 = vpop.trf.xlu0
        %v2873 = vpop.trf.xlu0
        %v2874 = vpop.trf.xlu0
        %v2875 = vpop.trf.xlu0
        %2876 = vxpose.xlu0.c.b16.start [1/8] %v2688, 128
        %2877 = vxpose.xlu0.c.b16.cont [2/8] 0, 128
        %2878 = vxpose.xlu0.c.b16.cont [3/8] 0, 128
        %2879 = vxpose.xlu0.c.b16.cont [4/8] 0, 128
        %2880 = vxpose.xlu0.c.b16.cont [5/8] 0, 128
        %2881 = vxpose.xlu0.c.b16.cont [6/8] 0, 128
        %2882 = vxpose.xlu0.c.b16.cont [7/8] 0, 128
        %2883 = vxpose.xlu0.c.b16.end [8/8] 0, 128
        %v2884 = vpop.trf.xlu0
        %v2885 = vpop.trf.xlu0
        %v2886 = vpop.trf.xlu0
        %v2887 = vpop.trf.xlu0
        %v2888 = vpop.trf.xlu0
        %v2889 = vpop.trf.xlu0
        %v2890 = vpop.trf.xlu0
        %v2891 = vpop.trf.xlu0
        %2892 = vxpose.xlu0.c.b16.start [1/8] %v2689, 128
        %2893 = vxpose.xlu0.c.b16.cont [2/8] 0, 128
        %2894 = vxpose.xlu0.c.b16.cont [3/8] 0, 128
        %2895 = vxpose.xlu0.c.b16.cont [4/8] 0, 128
        %2896 = vxpose.xlu0.c.b16.cont [5/8] 0, 128
        %2897 = vxpose.xlu0.c.b16.cont [6/8] 0, 128
        %2898 = vxpose.xlu0.c.b16.cont [7/8] 0, 128
        %2899 = vxpose.xlu0.c.b16.end [8/8] 0, 128
        %v2900 = vpop.trf.xlu0
        %v2901 = vpop.trf.xlu0
        %v2902 = vpop.trf.xlu0
        %v2903 = vpop.trf.xlu0
        %v2904 = vpop.trf.xlu0
        %v2905 = vpop.trf.xlu0
        %v2906 = vpop.trf.xlu0
        %v2907 = vpop.trf.xlu0
        %2908 = vxpose.xlu0.c.b16.start [1/8] %v2690, 128
        %2909 = vxpose.xlu0.c.b16.cont [2/8] 0, 128
        %2910 = vxpose.xlu0.c.b16.cont [3/8] 0, 128
        %2911 = vxpose.xlu0.c.b16.cont [4/8] 0, 128
        %2912 = vxpose.xlu0.c.b16.cont [5/8] 0, 128
        %2913 = vxpose.xlu0.c.b16.cont [6/8] 0, 128
        %2914 = vxpose.xlu0.c.b16.cont [7/8] 0, 128
        %2915 = vxpose.xlu0.c.b16.end [8/8] 0, 128
        %v2916 = vpop.trf.xlu0
        %v2917 = vpop.trf.xlu0
        %v2918 = vpop.trf.xlu0
        %v2919 = vpop.trf.xlu0
        %v2920 = vpop.trf.xlu0
        %v2921 = vpop.trf.xlu0
        %v2922 = vpop.trf.xlu0
        %v2923 = vpop.trf.xlu0
        %2924 = vxpose.xlu0.c.b16.start [1/8] %v2691, 128
        %2925 = vxpose.xlu0.c.b16.cont [2/8] 0, 128
        %2926 = vxpose.xlu0.c.b16.cont [3/8] 0, 128
        %2927 = vxpose.xlu0.c.b16.cont [4/8] 0, 128
        %2928 = vxpose.xlu0.c.b16.cont [5/8] 0, 128
        %2929 = vxpose.xlu0.c.b16.cont [6/8] 0, 128
        %2930 = vxpose.xlu0.c.b16.cont [7/8] 0, 128
        %2931 = vxpose.xlu0.c.b16.end [8/8] 0, 128
        %v2932 = vpop.trf.xlu0
        %v2933 = vpop.trf.xlu0
        %v2934 = vpop.trf.xlu0
        %v2935 = vpop.trf.xlu0
        %v2936 = vpop.trf.xlu0
        %v2937 = vpop.trf.xlu0
        %v2938 = vpop.trf.xlu0
        %v2939 = vpop.trf.xlu0
        %2940 = vxpose.xlu0.c.b16.start [1/8] %v2692, 128
        %2941 = vxpose.xlu0.c.b16.cont [2/8] 0, 128
        %2942 = vxpose.xlu0.c.b16.cont [3/8] 0, 128
        %2943 = vxpose.xlu0.c.b16.cont [4/8] 0, 128
        %2944 = vxpose.xlu0.c.b16.cont [5/8] 0, 128
        %2945 = vxpose.xlu0.c.b16.cont [6/8] 0, 128
        %2946 = vxpose.xlu0.c.b16.cont [7/8] 0, 128
        %2947 = vxpose.xlu0.c.b16.end [8/8] 0, 128
        %v2948 = vpop.trf.xlu0
        %v2949 = vpop.trf.xlu0
        %v2950 = vpop.trf.xlu0
        %v2951 = vpop.trf.xlu0
        %v2952 = vpop.trf.xlu0
        %v2953 = vpop.trf.xlu0
        %v2954 = vpop.trf.xlu0
        %v2955 = vpop.trf.xlu0
        %2956 = vxpose.xlu0.c.b16.start [1/8] %v2693, 128
        %2957 = vxpose.xlu0.c.b16.cont [2/8] 0, 128
        %2958 = vxpose.xlu0.c.b16.cont [3/8] 0, 128
        %2959 = vxpose.xlu0.c.b16.cont [4/8] 0, 128
        %2960 = vxpose.xlu0.c.b16.cont [5/8] 0, 128
        %2961 = vxpose.xlu0.c.b16.cont [6/8] 0, 128
        %2962 = vxpose.xlu0.c.b16.cont [7/8] 0, 128
        %2963 = vxpose.xlu0.c.b16.end [8/8] 0, 128
        %v2964 = vpop.trf.xlu0
        %v2965 = vpop.trf.xlu0
        %v2966 = vpop.trf.xlu0
        %v2967 = vpop.trf.xlu0
        %v2968 = vpop.trf.xlu0
        %v2969 = vpop.trf.xlu0
        %v2970 = vpop.trf.xlu0
        %v2971 = vpop.trf.xlu0
        %v2972 = vcombine.low %v2852, %v2916
        %v2974 = vunpack.c.l.s4 1983009808
        %v2975 = vunpack.c.0.s8 %v2974
        %v2976 = vlaneseq
        %v2977 = vshrl.u32 %v2976, 7
        %v2978 = vsub.s32 %v2975, %v2977
        %v2979 = vrot.slane %v2972, %v2978
        %v2980 = vcombine.low %v2884, %v2948
        %v2982 = vunpack.c.l.s4 1983009808
        %v2983 = vunpack.c.0.s8 %v2982
        %v2984 = vlaneseq
        %v2985 = vshrl.u32 %v2984, 7
        %v2986 = vsub.s32 %v2983, %v2985
        %v2987 = vrot.slane %v2980, %v2986
        %v2988 = vcombine.low %v2979, %v2987
        %v2989 = vcombine.high %v2979, %v2987
        %v2991 = vunpack.c.l.s4 1934713408
        %v2992 = vunpack.c.0.s8 %v2991
        %v2993 = vlaneseq
        %v2994 = vshrl.u32 %v2993, 7
        %v2995 = vsub.s32 %v2992, %v2994
        %v2996 = vrot.slane %v2988, %v2995
        %v2998 = vunpack.c.l.s4 1934713408
        %v2999 = vunpack.c.0.s8 %v2998
        %v3000 = vlaneseq
        %v3001 = vshrl.u32 %v3000, 7
        %v3002 = vsub.s32 %v2999, %v3001
        %v3003 = vrot.slane %v2989, %v3002
        %v3004 = vcombine.high %v2996, 0
        %v3005 = vcombine.high %v3003, 0
        %v3006 = vcombine.low %v2868, %v2932
        %v3008 = vunpack.c.l.s4 1983009808
        %v3009 = vunpack.c.0.s8 %v3008
        %v3010 = vlaneseq
        %v3011 = vshrl.u32 %v3010, 7
        %v3012 = vsub.s32 %v3009, %v3011
        %v3013 = vrot.slane %v3006, %v3012
        %v3014 = vcombine.low %v2900, %v2964
        %v3016 = vunpack.c.l.s4 1983009808
        %v3017 = vunpack.c.0.s8 %v3016
        %v3018 = vlaneseq
        %v3019 = vshrl.u32 %v3018, 7
        %v3020 = vsub.s32 %v3017, %v3019
        %v3021 = vrot.slane %v3014, %v3020
        %v3022 = vcombine.low %v3013, %v3021
        %v3023 = vcombine.high %v3013, %v3021
        %v3025 = vunpack.c.l.s4 1934713408
        %v3026 = vunpack.c.0.s8 %v3025
        %v3027 = vlaneseq
        %v3028 = vshrl.u32 %v3027, 7
        %v3029 = vsub.s32 %v3026, %v3028
        %v3030 = vrot.slane %v3022, %v3029
        %v3032 = vunpack.c.l.s4 1934713408
        %v3033 = vunpack.c.0.s8 %v3032
        %v3034 = vlaneseq
        %v3035 = vshrl.u32 %v3034, 7
        %v3036 = vsub.s32 %v3033, %v3035
        %v3037 = vrot.slane %v3023, %v3036
        %v3038 = vcombine.high %v3030, 0
        %v3039 = vcombine.high %v3037, 0
        %v3042 = vpack.i.b16 %v3030, %v2996
        %v3044 = vshrl.u32 %v2996, 16
        %v3045 = vshrl.u32 %v3030, 16
        %v3046 = vpack.i.b16 %v3045, %v3044
        %v3050 = vpack.i.b16 %v3038, %v3004
        %v3052 = vshrl.u32 %v3004, 16
        %v3053 = vshrl.u32 %v3038, 16
        %v3054 = vpack.i.b16 %v3053, %v3052
        %v3058 = vpack.i.b16 %v3037, %v3003
        %v3060 = vshrl.u32 %v3003, 16
        %v3061 = vshrl.u32 %v3037, 16
        %v3062 = vpack.i.b16 %v3061, %v3060
        %v3066 = vpack.i.b16 %v3039, %v3005
        %v3068 = vshrl.u32 %v3005, 16
        %v3069 = vshrl.u32 %v3039, 16
        %v3070 = vpack.i.b16 %v3069, %v3068
        %3072 = vxpose.xlu0.c.b16.start [1/8] %v3042, 128
        %3073 = vxpose.xlu0.c.b16.cont [2/8] 0, 128
        %3074 = vxpose.xlu0.c.b16.cont [3/8] 0, 128
        %3075 = vxpose.xlu0.c.b16.cont [4/8] 0, 128
        %3076 = vxpose.xlu0.c.b16.cont [5/8] 0, 128
        %3077 = vxpose.xlu0.c.b16.cont [6/8] 0, 128
        %3078 = vxpose.xlu0.c.b16.cont [7/8] 0, 128
        %3079 = vxpose.xlu0.c.b16.end [8/8] 0, 128
        %v3080 = vpop.trf.xlu0
        %v3081 = vpop.trf.xlu0
        %v3082 = vpop.trf.xlu0
        %v3083 = vpop.trf.xlu0
        %v3084 = vpop.trf.xlu0
        %v3085 = vpop.trf.xlu0
        %v3086 = vpop.trf.xlu0
        %v3087 = vpop.trf.xlu0
        %3088 = vxpose.xlu0.c.b16.start [1/8] %v3046, 128
        %3089 = vxpose.xlu0.c.b16.cont [2/8] 0, 128
        %3090 = vxpose.xlu0.c.b16.cont [3/8] 0, 128
        %3091 = vxpose.xlu0.c.b16.cont [4/8] 0, 128
        %3092 = vxpose.xlu0.c.b16.cont [5/8] 0, 128
        %3093 = vxpose.xlu0.c.b16.cont [6/8] 0, 128
        %3094 = vxpose.xlu0.c.b16.cont [7/8] 0, 128
        %3095 = vxpose.xlu0.c.b16.end [8/8] 0, 128
        %v3096 = vpop.trf.xlu0
        %v3097 = vpop.trf.xlu0
        %v3098 = vpop.trf.xlu0
        %v3099 = vpop.trf.xlu0
        %v3100 = vpop.trf.xlu0
        %v3101 = vpop.trf.xlu0
        %v3102 = vpop.trf.xlu0
        %v3103 = vpop.trf.xlu0
        %3104 = vxpose.xlu0.c.b16.start [1/8] %v3050, 128
        %3105 = vxpose.xlu0.c.b16.cont [2/8] 0, 128
        %3106 = vxpose.xlu0.c.b16.cont [3/8] 0, 128
        %3107 = vxpose.xlu0.c.b16.cont [4/8] 0, 128
        %3108 = vxpose.xlu0.c.b16.cont [5/8] 0, 128
        %3109 = vxpose.xlu0.c.b16.cont [6/8] 0, 128
        %3110 = vxpose.xlu0.c.b16.cont [7/8] 0, 128
        %3111 = vxpose.xlu0.c.b16.end [8/8] 0, 128
        %v3112 = vpop.trf.xlu0
        %v3113 = vpop.trf.xlu0
        %v3114 = vpop.trf.xlu0
        %v3115 = vpop.trf.xlu0
        %v3116 = vpop.trf.xlu0
        %v3117 = vpop.trf.xlu0
        %v3118 = vpop.trf.xlu0
        %v3119 = vpop.trf.xlu0
        %3120 = vxpose.xlu0.c.b16.start [1/8] %v3054, 128
        %3121 = vxpose.xlu0.c.b16.cont [2/8] 0, 128
        %3122 = vxpose.xlu0.c.b16.cont [3/8] 0, 128
        %3123 = vxpose.xlu0.c.b16.cont [4/8] 0, 128
        %3124 = vxpose.xlu0.c.b16.cont [5/8] 0, 128
        %3125 = vxpose.xlu0.c.b16.cont [6/8] 0, 128
        %3126 = vxpose.xlu0.c.b16.cont [7/8] 0, 128
        %3127 = vxpose.xlu0.c.b16.end [8/8] 0, 128
        %v3128 = vpop.trf.xlu0
        %v3129 = vpop.trf.xlu0
        %v3130 = vpop.trf.xlu0
        %v3131 = vpop.trf.xlu0
        %v3132 = vpop.trf.xlu0
        %v3133 = vpop.trf.xlu0
        %v3134 = vpop.trf.xlu0
        %v3135 = vpop.trf.xlu0
        %3136 = vxpose.xlu0.c.b16.start [1/8] %v3058, 128
        %3137 = vxpose.xlu0.c.b16.cont [2/8] 0, 128
        %3138 = vxpose.xlu0.c.b16.cont [3/8] 0, 128
        %3139 = vxpose.xlu0.c.b16.cont [4/8] 0, 128
        %3140 = vxpose.xlu0.c.b16.cont [5/8] 0, 128
        %3141 = vxpose.xlu0.c.b16.cont [6/8] 0, 128
        %3142 = vxpose.xlu0.c.b16.cont [7/8] 0, 128
        %3143 = vxpose.xlu0.c.b16.end [8/8] 0, 128
        %v3144 = vpop.trf.xlu0
        %v3145 = vpop.trf.xlu0
        %v3146 = vpop.trf.xlu0
        %v3147 = vpop.trf.xlu0
        %v3148 = vpop.trf.xlu0
        %v3149 = vpop.trf.xlu0
        %v3150 = vpop.trf.xlu0
        %v3151 = vpop.trf.xlu0
        %3152 = vxpose.xlu0.c.b16.start [1/8] %v3062, 128
        %3153 = vxpose.xlu0.c.b16.cont [2/8] 0, 128
        %3154 = vxpose.xlu0.c.b16.cont [3/8] 0, 128
        %3155 = vxpose.xlu0.c.b16.cont [4/8] 0, 128
        %3156 = vxpose.xlu0.c.b16.cont [5/8] 0, 128
        %3157 = vxpose.xlu0.c.b16.cont [6/8] 0, 128
        %3158 = vxpose.xlu0.c.b16.cont [7/8] 0, 128
        %3159 = vxpose.xlu0.c.b16.end [8/8] 0, 128
        %v3160 = vpop.trf.xlu0
        %v3161 = vpop.trf.xlu0
        %v3162 = vpop.trf.xlu0
        %v3163 = vpop.trf.xlu0
        %v3164 = vpop.trf.xlu0
        %v3165 = vpop.trf.xlu0
        %v3166 = vpop.trf.xlu0
        %v3167 = vpop.trf.xlu0
        %3168 = vxpose.xlu0.c.b16.start [1/8] %v3066, 128
        %3169 = vxpose.xlu0.c.b16.cont [2/8] 0, 128
        %3170 = vxpose.xlu0.c.b16.cont [3/8] 0, 128
        %3171 = vxpose.xlu0.c.b16.cont [4/8] 0, 128
        %3172 = vxpose.xlu0.c.b16.cont [5/8] 0, 128
        %3173 = vxpose.xlu0.c.b16.cont [6/8] 0, 128
        %3174 = vxpose.xlu0.c.b16.cont [7/8] 0, 128
        %3175 = vxpose.xlu0.c.b16.end [8/8] 0, 128
        %v3176 = vpop.trf.xlu0
        %v3177 = vpop.trf.xlu0
        %v3178 = vpop.trf.xlu0
        %v3179 = vpop.trf.xlu0
        %v3180 = vpop.trf.xlu0
        %v3181 = vpop.trf.xlu0
        %v3182 = vpop.trf.xlu0
        %v3183 = vpop.trf.xlu0
        %3184 = vxpose.xlu0.c.b16.start [1/8] %v3070, 128
        %3185 = vxpose.xlu0.c.b16.cont [2/8] 0, 128
        %3186 = vxpose.xlu0.c.b16.cont [3/8] 0, 128
        %3187 = vxpose.xlu0.c.b16.cont [4/8] 0, 128
        %3188 = vxpose.xlu0.c.b16.cont [5/8] 0, 128
        %3189 = vxpose.xlu0.c.b16.cont [6/8] 0, 128
        %3190 = vxpose.xlu0.c.b16.cont [7/8] 0, 128
        %3191 = vxpose.xlu0.c.b16.end [8/8] 0, 128
        %v3192 = vpop.trf.xlu0
        %v3193 = vpop.trf.xlu0
        %v3194 = vpop.trf.xlu0
        %v3195 = vpop.trf.xlu0
        %v3196 = vpop.trf.xlu0
        %v3197 = vpop.trf.xlu0
        %v3198 = vpop.trf.xlu0
        %v3199 = vpop.trf.xlu0
        %v3200 = vcombine.low %v3080, %v3144
        %v3202 = vunpack.c.l.s4 1983009808
        %v3203 = vunpack.c.0.s8 %v3202
        %v3204 = vlaneseq
        %v3205 = vshrl.u32 %v3204, 7
        %v3206 = vsub.s32 %v3203, %v3205
        %v3207 = vrot.slane %v3200, %v3206
        %v3208 = vcombine.low %v3112, %v3176
        %v3210 = vunpack.c.l.s4 1983009808
        %v3211 = vunpack.c.0.s8 %v3210
        %v3212 = vlaneseq
        %v3213 = vshrl.u32 %v3212, 7
        %v3214 = vsub.s32 %v3211, %v3213
        %v3215 = vrot.slane %v3208, %v3214
        %v3216 = vcombine.low %v3207, %v3215
        %v3218 = vunpack.c.l.s4 1934713408
        %v3219 = vunpack.c.0.s8 %v3218
        %v3220 = vlaneseq
        %v3221 = vshrl.u32 %v3220, 7
        %v3222 = vsub.s32 %v3219, %v3221
        %v3223 = vrot.slane %v3216, %v3222
        %v3224 = vcombine.high %v3223, 0
        %v3225 = vcombine.low %v3096, %v3160
        %v3227 = vunpack.c.l.s4 1983009808
        %v3228 = vunpack.c.0.s8 %v3227
        %v3229 = vlaneseq
        %v3230 = vshrl.u32 %v3229, 7
        %v3231 = vsub.s32 %v3228, %v3230
        %v3232 = vrot.slane %v3225, %v3231
        %v3233 = vcombine.low %v3128, %v3192
        %v3235 = vunpack.c.l.s4 1983009808
        %v3236 = vunpack.c.0.s8 %v3235
        %v3237 = vlaneseq
        %v3238 = vshrl.u32 %v3237, 7
        %v3239 = vsub.s32 %v3236, %v3238
        %v3240 = vrot.slane %v3233, %v3239
        %v3241 = vcombine.low %v3232, %v3240
        %v3243 = vunpack.c.l.s4 1934713408
        %v3244 = vunpack.c.0.s8 %v3243
        %v3245 = vlaneseq
        %v3246 = vshrl.u32 %v3245, 7
        %v3247 = vsub.s32 %v3244, %v3246
        %v3248 = vrot.slane %v3241, %v3247
        %v3249 = vcombine.high %v3248, 0
        %v3252 = vpack.i.b16 %v3248, %v3223
        %v3253 = vshrl.u32 %v3223, 16
        %v3254 = vshrl.u32 %v3248, 16
        %v3255 = vpack.i.b16 %v3254, %v3253
        %v3258 = vpack.i.b16 %v3249, %v3224
        %v3259 = vshrl.u32 %v3224, 16
        %v3260 = vshrl.u32 %v3249, 16
        %v3261 = vpack.i.b16 %v3260, %v3259
        %v3263 = vsel %vm1062, %v2834, 0
        %v3266 = vsel %vm1066, %v3252, 0
        %3268 = vmatprep.subr.bf16.mxu0 0
        %3269 = vmatpush1.bf16.msra.mxu0 0
        %3270 = vmatprep.subr.bf16.mxu0 0
        %3271 = vmatpush1.bf16.msra.mxu0 0
        %3272 = vmatprep.subr.bf16.mxu0 0
        %3273 = vmatpush1.bf16.msra.mxu0 0
        %3274 = vmatprep.subr.bf16.mxu0 0
        %3275 = vmatpush1.bf16.msra.mxu0 0
        %3276 = vmatprep.subr.bf16.mxu0 0
        %3277 = vmatpush1.bf16.msra.mxu0 0
        %3278 = vmatprep.subr.bf16.mxu0 0
        %3279 = vmatpush1.bf16.msra.mxu0 0
        %3280 = vmatprep.subr.bf16.mxu0 0
        %3281 = vmatpush1.bf16.msra.mxu0 0
        %3282 = vmatprep.subr.bf16.mxu0 0
        %3283 = vmatpush1.bf16.msra.mxu0 %v3266
        %3284 = vmatprep.subr.bf16.mxu0 0
        %3285 = vmatpush2.bf16.msra.mxu0 0
        %3286 = vmatprep.subr.bf16.mxu0 0
        %3287 = vmatpush2.bf16.msra.mxu0 0
        %3288 = vmatprep.subr.bf16.mxu0 0
        %3289 = vmatpush2.bf16.msra.mxu0 0
        %3290 = vmatprep.subr.bf16.mxu0 0
        %3291 = vmatpush2.bf16.msra.mxu0 0
        %3292 = vmatprep.subr.bf16.mxu0 0
        %3293 = vmatpush2.bf16.msra.mxu0 0
        %3294 = vmatprep.subr.bf16.mxu0 0
        %3295 = vmatpush2.bf16.msra.mxu0 0
        %3296 = vmatprep.subr.bf16.mxu0 0
        %3297 = vmatpush2.bf16.msra.mxu0 0
        %3298 = vmatprep.subr.bf16.mxu0 0
        %3299 = vmatpush2.bf16.msra.mxu0 0
        %3300 = vmatprep.mubr.bf16.mxu0 0
        %3301 = vmatmul.mubr.bf16.gmra.mxu0 %v3263
        %v3302 = vpop.f32.mrf.mxu0
        %v3303 = vadd.f32 %v580, %v3302
        %v3304 = vpop.f32.mrf.mxu0
        %v3305 = vpop.f32.mrf.mxu0
        %v3306 = vpop.f32.mrf.mxu0
        %3307 = vdwg.mxu0
        %v3309 = vsel %vm1062, %v2837, 0
        %v3312 = vsel %vm1066, %v3255, 0
        %3314 = vmatprep.subr.bf16.mxu0 0
        %3315 = vmatpush1.bf16.msra.mxu0 0
        %3316 = vmatprep.subr.bf16.mxu0 0
        %3317 = vmatpush1.bf16.msra.mxu0 0
        %3318 = vmatprep.subr.bf16.mxu0 0
        %3319 = vmatpush1.bf16.msra.mxu0 0
        %3320 = vmatprep.subr.bf16.mxu0 0
        %3321 = vmatpush1.bf16.msra.mxu0 0
        %3322 = vmatprep.subr.bf16.mxu0 0
        %3323 = vmatpush1.bf16.msra.mxu0 0
        %3324 = vmatprep.subr.bf16.mxu0 0
        %3325 = vmatpush1.bf16.msra.mxu0 0
        %3326 = vmatprep.subr.bf16.mxu0 0
        %3327 = vmatpush1.bf16.msra.mxu0 0
        %3328 = vmatprep.subr.bf16.mxu0 0
        %3329 = vmatpush1.bf16.msra.mxu0 %v3312
        %3330 = vmatprep.subr.bf16.mxu0 0
        %3331 = vmatpush2.bf16.msra.mxu0 0
        %3332 = vmatprep.subr.bf16.mxu0 0
        %3333 = vmatpush2.bf16.msra.mxu0 0
        %3334 = vmatprep.subr.bf16.mxu0 0
        %3335 = vmatpush2.bf16.msra.mxu0 0
        %3336 = vmatprep.subr.bf16.mxu0 0
        %3337 = vmatpush2.bf16.msra.mxu0 0
        %3338 = vmatprep.subr.bf16.mxu0 0
        %3339 = vmatpush2.bf16.msra.mxu0 0
        %3340 = vmatprep.subr.bf16.mxu0 0
        %3341 = vmatpush2.bf16.msra.mxu0 0
        %3342 = vmatprep.subr.bf16.mxu0 0
        %3343 = vmatpush2.bf16.msra.mxu0 0
        %3344 = vmatprep.subr.bf16.mxu0 0
        %3345 = vmatpush2.bf16.msra.mxu0 0
        %3346 = vmatprep.mubr.bf16.mxu0 0
        %3347 = vmatmul.mubr.bf16.gmra.mxu0 %v3309
        %v3348 = vpop.f32.mrf.mxu0
        %v3349 = vadd.f32 %v580, %v3348
        %v3350 = vpop.f32.mrf.mxu0
        %v3351 = vpop.f32.mrf.mxu0
        %v3352 = vpop.f32.mrf.mxu0
        %3353 = vdwg.mxu0
        %v3355 = vsel %vm1062, %v2840, 0
        %v3358 = vsel %vm1066, %v3258, 0
        %3360 = vmatprep.subr.bf16.mxu0 0
        %3361 = vmatpush1.bf16.msra.mxu0 0
        %3362 = vmatprep.subr.bf16.mxu0 0
        %3363 = vmatpush1.bf16.msra.mxu0 0
        %3364 = vmatprep.subr.bf16.mxu0 0
        %3365 = vmatpush1.bf16.msra.mxu0 0
        %3366 = vmatprep.subr.bf16.mxu0 0
        %3367 = vmatpush1.bf16.msra.mxu0 0
        %3368 = vmatprep.subr.bf16.mxu0 0
        %3369 = vmatpush1.bf16.msra.mxu0 0
        %3370 = vmatprep.subr.bf16.mxu0 0
        %3371 = vmatpush1.bf16.msra.mxu0 0
        %3372 = vmatprep.subr.bf16.mxu0 0
        %3373 = vmatpush1.bf16.msra.mxu0 0
        %3374 = vmatprep.subr.bf16.mxu0 0
        %3375 = vmatpush1.bf16.msra.mxu0 %v3358
        %3376 = vmatprep.subr.bf16.mxu0 0
        %3377 = vmatpush2.bf16.msra.mxu0 0
        %3378 = vmatprep.subr.bf16.mxu0 0
        %3379 = vmatpush2.bf16.msra.mxu0 0
        %3380 = vmatprep.subr.bf16.mxu0 0
        %3381 = vmatpush2.bf16.msra.mxu0 0
        %3382 = vmatprep.subr.bf16.mxu0 0
        %3383 = vmatpush2.bf16.msra.mxu0 0
        %3384 = vmatprep.subr.bf16.mxu0 0
        %3385 = vmatpush2.bf16.msra.mxu0 0
        %3386 = vmatprep.subr.bf16.mxu0 0
        %3387 = vmatpush2.bf16.msra.mxu0 0
        %3388 = vmatprep.subr.bf16.mxu0 0
        %3389 = vmatpush2.bf16.msra.mxu0 0
        %3390 = vmatprep.subr.bf16.mxu0 0
        %3391 = vmatpush2.bf16.msra.mxu0 0
        %3392 = vmatprep.mubr.bf16.mxu0 0
        %3393 = vmatmul.mubr.bf16.gmra.mxu0 %v3355
        %v3394 = vpop.f32.mrf.mxu0
        %v3395 = vadd.f32 %v580, %v3394
        %v3396 = vpop.f32.mrf.mxu0
        %v3397 = vpop.f32.mrf.mxu0
        %v3398 = vpop.f32.mrf.mxu0
        %3399 = vdwg.mxu0
        %v3401 = vsel %vm1062, %v2843, 0
        %v3404 = vsel %vm1066, %v3261, 0
        %3406 = vmatprep.subr.bf16.mxu0 0
        %3407 = vmatpush1.bf16.msra.mxu0 0
        %3408 = vmatprep.subr.bf16.mxu0 0
        %3409 = vmatpush1.bf16.msra.mxu0 0
        %3410 = vmatprep.subr.bf16.mxu0 0
        %3411 = vmatpush1.bf16.msra.mxu0 0
        %3412 = vmatprep.subr.bf16.mxu0 0
        %3413 = vmatpush1.bf16.msra.mxu0 0
        %3414 = vmatprep.subr.bf16.mxu0 0
        %3415 = vmatpush1.bf16.msra.mxu0 0
        %3416 = vmatprep.subr.bf16.mxu0 0
        %3417 = vmatpush1.bf16.msra.mxu0 0
        %3418 = vmatprep.subr.bf16.mxu0 0
        %3419 = vmatpush1.bf16.msra.mxu0 0
        %3420 = vmatprep.subr.bf16.mxu0 0
        %3421 = vmatpush1.bf16.msra.mxu0 %v3404
        %3422 = vmatprep.subr.bf16.mxu0 0
        %3423 = vmatpush2.bf16.msra.mxu0 0
        %3424 = vmatprep.subr.bf16.mxu0 0
        %3425 = vmatpush2.bf16.msra.mxu0 0
        %3426 = vmatprep.subr.bf16.mxu0 0
        %3427 = vmatpush2.bf16.msra.mxu0 0
        %3428 = vmatprep.subr.bf16.mxu0 0
        %3429 = vmatpush2.bf16.msra.mxu0 0
        %3430 = vmatprep.subr.bf16.mxu0 0
        %3431 = vmatpush2.bf16.msra.mxu0 0
        %3432 = vmatprep.subr.bf16.mxu0 0
        %3433 = vmatpush2.bf16.msra.mxu0 0
        %3434 = vmatprep.subr.bf16.mxu0 0
        %3435 = vmatpush2.bf16.msra.mxu0 0
        %3436 = vmatprep.subr.bf16.mxu0 0
        %3437 = vmatpush2.bf16.msra.mxu0 0
        %3438 = vmatprep.mubr.bf16.mxu0 0
        %3439 = vmatmul.mubr.bf16.gmra.mxu0 %v3401
        %v3440 = vpop.f32.mrf.mxu0
        %v3441 = vadd.f32 %v580, %v3440
        %v3442 = vpop.f32.mrf.mxu0
        %v3443 = vpop.f32.mrf.mxu0
        %v3444 = vpop.f32.mrf.mxu0
        %3445 = vdwg.mxu0
        %v3446 = vsel %vm1062, %v3303, -inf
        %3447 = vmax.xlane.f32.xlu0 %v3446
        %v3448 = vpop.xlane.xlu0 %3447
        %v3449 = vsel %vm1062, %v3349, -inf
        %3450 = vmax.xlane.f32.xlu0 %v3449
        %v3451 = vpop.xlane.xlu0 %3450
        %v3452 = vsel %vm1062, %v3395, -inf
        %3453 = vmax.xlane.f32.xlu0 %v3452
        %v3454 = vpop.xlane.xlu0 %3453
        %v3455 = vsel %vm1062, %v3441, -inf
        %3456 = vmax.xlane.f32.xlu0 %v3455
        %v3457 = vpop.xlane.xlu0 %3456
        %v3458 = vsub.f32 %v3303, %v3448
        %v3459 = vsub.f32 %v3349, %v3451
        %v3460 = vsub.f32 %v3395, %v3454
        %v3461 = vsub.f32 %v3441, %v3457
        %v3462 = vmul.f32 %v3458, 1.442695
        %v3463 = vpow.pop %v3462
        %v3464 = vmul.f32 %v3459, 1.442695
        %v3465 = vpow.pop %v3464
        %v3466 = vmul.f32 %v3460, 1.442695
        %v3467 = vpow.pop %v3466
        %v3468 = vmul.f32 %v3461, 1.442695
        %v3469 = vpow.pop %v3468
        %v3470 = vsel %vm1062, %v3463, 0.0
        %3471 = vadd.xlane.f32.xlu0 %v3470
        %v3472 = vpop.xlane.xlu0 %3471
        %v3473 = vsel %vm1062, %v3465, 0.0
        %3474 = vadd.xlane.f32.xlu0 %v3473
        %v3475 = vpop.xlane.xlu0 %3474
        %v3476 = vsel %vm1062, %v3467, 0.0
        %3477 = vadd.xlane.f32.xlu0 %v3476
        %v3478 = vpop.xlane.xlu0 %3477
        %v3479 = vsel %vm1062, %v3469, 0.0
        %3480 = vadd.xlane.f32.xlu0 %v3479
        %v3481 = vpop.xlane.xlu0 %3480
        %v3482 = vrcp.pop %v3472
        %v3483 = vrcp.pop %v3475
        %v3484 = vrcp.pop %v3478
        %v3485 = vrcp.pop %v3481
        %v3486 = vmul.f32 %v3463, %v3482
        %v3487 = vmul.f32 %v3465, %v3483
        %v3488 = vmul.f32 %v3467, %v3484
        %v3489 = vmul.f32 %v3469, %v3485
        %v3490 = vpack.c.bf16 %v3486, %v3486
        %v3491 = vpack.c.bf16 %v3487, %v3487
        %v3492 = vpack.c.bf16 %v3488, %v3488
        %v3493 = vpack.c.bf16 %v3489, %v3489
        %3494 = vxpose.xlu0.c.b16.start [1/8] %v2774, 128
        %3495 = vxpose.xlu0.c.b16.cont [2/8] 0, 128
        %3496 = vxpose.xlu0.c.b16.cont [3/8] 0, 128
        %3497 = vxpose.xlu0.c.b16.cont [4/8] 0, 128
        %3498 = vxpose.xlu0.c.b16.cont [5/8] 0, 128
        %3499 = vxpose.xlu0.c.b16.cont [6/8] 0, 128
        %3500 = vxpose.xlu0.c.b16.cont [7/8] 0, 128
        %3501 = vxpose.xlu0.c.b16.end [8/8] 0, 128
        %v3502 = vpop.trf.xlu0
        %v3503 = vpop.trf.xlu0
        %v3504 = vpop.trf.xlu0
        %v3505 = vpop.trf.xlu0
        %v3506 = vpop.trf.xlu0
        %v3507 = vpop.trf.xlu0
        %v3508 = vpop.trf.xlu0
        %v3509 = vpop.trf.xlu0
        %3510 = vxpose.xlu0.c.b16.start [1/8] %v2775, 128
        %3511 = vxpose.xlu0.c.b16.cont [2/8] 0, 128
        %3512 = vxpose.xlu0.c.b16.cont [3/8] 0, 128
        %3513 = vxpose.xlu0.c.b16.cont [4/8] 0, 128
        %3514 = vxpose.xlu0.c.b16.cont [5/8] 0, 128
        %3515 = vxpose.xlu0.c.b16.cont [6/8] 0, 128
        %3516 = vxpose.xlu0.c.b16.cont [7/8] 0, 128
        %3517 = vxpose.xlu0.c.b16.end [8/8] 0, 128
        %v3518 = vpop.trf.xlu0
        %v3519 = vpop.trf.xlu0
        %v3520 = vpop.trf.xlu0
        %v3521 = vpop.trf.xlu0
        %v3522 = vpop.trf.xlu0
        %v3523 = vpop.trf.xlu0
        %v3524 = vpop.trf.xlu0
        %v3525 = vpop.trf.xlu0
        %3526 = vxpose.xlu0.c.b16.start [1/8] %v2776, 128
        %3527 = vxpose.xlu0.c.b16.cont [2/8] 0, 128
        %3528 = vxpose.xlu0.c.b16.cont [3/8] 0, 128
        %3529 = vxpose.xlu0.c.b16.cont [4/8] 0, 128
        %3530 = vxpose.xlu0.c.b16.cont [5/8] 0, 128
        %3531 = vxpose.xlu0.c.b16.cont [6/8] 0, 128
        %3532 = vxpose.xlu0.c.b16.cont [7/8] 0, 128
        %3533 = vxpose.xlu0.c.b16.end [8/8] 0, 128
        %v3534 = vpop.trf.xlu0
        %v3535 = vpop.trf.xlu0
        %v3536 = vpop.trf.xlu0
        %v3537 = vpop.trf.xlu0
        %v3538 = vpop.trf.xlu0
        %v3539 = vpop.trf.xlu0
        %v3540 = vpop.trf.xlu0
        %v3541 = vpop.trf.xlu0
        %3542 = vxpose.xlu0.c.b16.start [1/8] %v2777, 128
        %3543 = vxpose.xlu0.c.b16.cont [2/8] 0, 128
        %3544 = vxpose.xlu0.c.b16.cont [3/8] 0, 128
        %3545 = vxpose.xlu0.c.b16.cont [4/8] 0, 128
        %3546 = vxpose.xlu0.c.b16.cont [5/8] 0, 128
        %3547 = vxpose.xlu0.c.b16.cont [6/8] 0, 128
        %3548 = vxpose.xlu0.c.b16.cont [7/8] 0, 128
        %3549 = vxpose.xlu0.c.b16.end [8/8] 0, 128
        %v3550 = vpop.trf.xlu0
        %v3551 = vpop.trf.xlu0
        %v3552 = vpop.trf.xlu0
        %v3553 = vpop.trf.xlu0
        %v3554 = vpop.trf.xlu0
        %v3555 = vpop.trf.xlu0
        %v3556 = vpop.trf.xlu0
        %v3557 = vpop.trf.xlu0
        %3558 = vxpose.xlu0.c.b16.start [1/8] %v2778, 128
        %3559 = vxpose.xlu0.c.b16.cont [2/8] 0, 128
        %3560 = vxpose.xlu0.c.b16.cont [3/8] 0, 128
        %3561 = vxpose.xlu0.c.b16.cont [4/8] 0, 128
        %3562 = vxpose.xlu0.c.b16.cont [5/8] 0, 128
        %3563 = vxpose.xlu0.c.b16.cont [6/8] 0, 128
        %3564 = vxpose.xlu0.c.b16.cont [7/8] 0, 128
        %3565 = vxpose.xlu0.c.b16.end [8/8] 0, 128
        %v3566 = vpop.trf.xlu0
        %v3567 = vpop.trf.xlu0
        %v3568 = vpop.trf.xlu0
        %v3569 = vpop.trf.xlu0
        %v3570 = vpop.trf.xlu0
        %v3571 = vpop.trf.xlu0
        %v3572 = vpop.trf.xlu0
        %v3573 = vpop.trf.xlu0
        %3574 = vxpose.xlu0.c.b16.start [1/8] %v2779, 128
        %3575 = vxpose.xlu0.c.b16.cont [2/8] 0, 128
        %3576 = vxpose.xlu0.c.b16.cont [3/8] 0, 128
        %3577 = vxpose.xlu0.c.b16.cont [4/8] 0, 128
        %3578 = vxpose.xlu0.c.b16.cont [5/8] 0, 128
        %3579 = vxpose.xlu0.c.b16.cont [6/8] 0, 128
        %3580 = vxpose.xlu0.c.b16.cont [7/8] 0, 128
        %3581 = vxpose.xlu0.c.b16.end [8/8] 0, 128
        %v3582 = vpop.trf.xlu0
        %v3583 = vpop.trf.xlu0
        %v3584 = vpop.trf.xlu0
        %v3585 = vpop.trf.xlu0
        %v3586 = vpop.trf.xlu0
        %v3587 = vpop.trf.xlu0
        %v3588 = vpop.trf.xlu0
        %v3589 = vpop.trf.xlu0
        %3590 = vxpose.xlu0.c.b16.start [1/8] %v2780, 128
        %3591 = vxpose.xlu0.c.b16.cont [2/8] 0, 128
        %3592 = vxpose.xlu0.c.b16.cont [3/8] 0, 128
        %3593 = vxpose.xlu0.c.b16.cont [4/8] 0, 128
        %3594 = vxpose.xlu0.c.b16.cont [5/8] 0, 128
        %3595 = vxpose.xlu0.c.b16.cont [6/8] 0, 128
        %3596 = vxpose.xlu0.c.b16.cont [7/8] 0, 128
        %3597 = vxpose.xlu0.c.b16.end [8/8] 0, 128
        %v3598 = vpop.trf.xlu0
        %v3599 = vpop.trf.xlu0
        %v3600 = vpop.trf.xlu0
        %v3601 = vpop.trf.xlu0
        %v3602 = vpop.trf.xlu0
        %v3603 = vpop.trf.xlu0
        %v3604 = vpop.trf.xlu0
        %v3605 = vpop.trf.xlu0
        %3606 = vxpose.xlu0.c.b16.start [1/8] %v2781, 128
        %3607 = vxpose.xlu0.c.b16.cont [2/8] 0, 128
        %3608 = vxpose.xlu0.c.b16.cont [3/8] 0, 128
        %3609 = vxpose.xlu0.c.b16.cont [4/8] 0, 128
        %3610 = vxpose.xlu0.c.b16.cont [5/8] 0, 128
        %3611 = vxpose.xlu0.c.b16.cont [6/8] 0, 128
        %3612 = vxpose.xlu0.c.b16.cont [7/8] 0, 128
        %3613 = vxpose.xlu0.c.b16.end [8/8] 0, 128
        %v3614 = vpop.trf.xlu0
        %v3615 = vpop.trf.xlu0
        %v3616 = vpop.trf.xlu0
        %v3617 = vpop.trf.xlu0
        %v3618 = vpop.trf.xlu0
        %v3619 = vpop.trf.xlu0
        %v3620 = vpop.trf.xlu0
        %v3621 = vpop.trf.xlu0
        %v3622 = vcombine.low %v3502, %v3566
        %v3624 = vunpack.c.l.s4 1983009808
        %v3625 = vunpack.c.0.s8 %v3624
        %v3626 = vlaneseq
        %v3627 = vshrl.u32 %v3626, 7
        %v3628 = vsub.s32 %v3625, %v3627
        %v3629 = vrot.slane %v3622, %v3628
        %v3630 = vcombine.low %v3534, %v3598
        %v3632 = vunpack.c.l.s4 1983009808
        %v3633 = vunpack.c.0.s8 %v3632
        %v3634 = vlaneseq
        %v3635 = vshrl.u32 %v3634, 7
        %v3636 = vsub.s32 %v3633, %v3635
        %v3637 = vrot.slane %v3630, %v3636
        %v3638 = vcombine.low %v3629, %v3637
        %v3639 = vcombine.high %v3629, %v3637
        %v3641 = vunpack.c.l.s4 1934713408
        %v3642 = vunpack.c.0.s8 %v3641
        %v3643 = vlaneseq
        %v3644 = vshrl.u32 %v3643, 7
        %v3645 = vsub.s32 %v3642, %v3644
        %v3646 = vrot.slane %v3638, %v3645
        %v3648 = vunpack.c.l.s4 1934713408
        %v3649 = vunpack.c.0.s8 %v3648
        %v3650 = vlaneseq
        %v3651 = vshrl.u32 %v3650, 7
        %v3652 = vsub.s32 %v3649, %v3651
        %v3653 = vrot.slane %v3639, %v3652
        %v3654 = vcombine.high %v3646, 0
        %v3655 = vcombine.high %v3653, 0
        %v3656 = vcombine.low %v3518, %v3582
        %v3658 = vunpack.c.l.s4 1983009808
        %v3659 = vunpack.c.0.s8 %v3658
        %v3660 = vlaneseq
        %v3661 = vshrl.u32 %v3660, 7
        %v3662 = vsub.s32 %v3659, %v3661
        %v3663 = vrot.slane %v3656, %v3662
        %v3664 = vcombine.low %v3550, %v3614
        %v3666 = vunpack.c.l.s4 1983009808
        %v3667 = vunpack.c.0.s8 %v3666
        %v3668 = vlaneseq
        %v3669 = vshrl.u32 %v3668, 7
        %v3670 = vsub.s32 %v3667, %v3669
        %v3671 = vrot.slane %v3664, %v3670
        %v3672 = vcombine.low %v3663, %v3671
        %v3673 = vcombine.high %v3663, %v3671
        %v3675 = vunpack.c.l.s4 1934713408
        %v3676 = vunpack.c.0.s8 %v3675
        %v3677 = vlaneseq
        %v3678 = vshrl.u32 %v3677, 7
        %v3679 = vsub.s32 %v3676, %v3678
        %v3680 = vrot.slane %v3672, %v3679
        %v3682 = vunpack.c.l.s4 1934713408
        %v3683 = vunpack.c.0.s8 %v3682
        %v3684 = vlaneseq
        %v3685 = vshrl.u32 %v3684, 7
        %v3686 = vsub.s32 %v3683, %v3685
        %v3687 = vrot.slane %v3673, %v3686
        %v3688 = vcombine.high %v3680, 0
        %v3689 = vcombine.high %v3687, 0
        %v3692 = vpack.i.b16 %v3680, %v3646
        %v3694 = vshrl.u32 %v3646, 16
        %v3695 = vshrl.u32 %v3680, 16
        %v3696 = vpack.i.b16 %v3695, %v3694
        %v3700 = vpack.i.b16 %v3688, %v3654
        %v3702 = vshrl.u32 %v3654, 16
        %v3703 = vshrl.u32 %v3688, 16
        %v3704 = vpack.i.b16 %v3703, %v3702
        %v3708 = vpack.i.b16 %v3687, %v3653
        %v3710 = vshrl.u32 %v3653, 16
        %v3711 = vshrl.u32 %v3687, 16
        %v3712 = vpack.i.b16 %v3711, %v3710
        %v3716 = vpack.i.b16 %v3689, %v3655
        %v3718 = vshrl.u32 %v3655, 16
        %v3719 = vshrl.u32 %v3689, 16
        %v3720 = vpack.i.b16 %v3719, %v3718
        %3722 = vxpose.xlu0.c.b16.start [1/8] %v3692, 128
        %3723 = vxpose.xlu0.c.b16.cont [2/8] 0, 128
        %3724 = vxpose.xlu0.c.b16.cont [3/8] 0, 128
        %3725 = vxpose.xlu0.c.b16.cont [4/8] 0, 128
        %3726 = vxpose.xlu0.c.b16.cont [5/8] 0, 128
        %3727 = vxpose.xlu0.c.b16.cont [6/8] 0, 128
        %3728 = vxpose.xlu0.c.b16.cont [7/8] 0, 128
        %3729 = vxpose.xlu0.c.b16.end [8/8] 0, 128
        %v3730 = vpop.trf.xlu0
        %v3731 = vpop.trf.xlu0
        %v3732 = vpop.trf.xlu0
        %v3733 = vpop.trf.xlu0
        %v3734 = vpop.trf.xlu0
        %v3735 = vpop.trf.xlu0
        %v3736 = vpop.trf.xlu0
        %v3737 = vpop.trf.xlu0
        %3738 = vxpose.xlu0.c.b16.start [1/8] %v3696, 128
        %3739 = vxpose.xlu0.c.b16.cont [2/8] 0, 128
        %3740 = vxpose.xlu0.c.b16.cont [3/8] 0, 128
        %3741 = vxpose.xlu0.c.b16.cont [4/8] 0, 128
        %3742 = vxpose.xlu0.c.b16.cont [5/8] 0, 128
        %3743 = vxpose.xlu0.c.b16.cont [6/8] 0, 128
        %3744 = vxpose.xlu0.c.b16.cont [7/8] 0, 128
        %3745 = vxpose.xlu0.c.b16.end [8/8] 0, 128
        %v3746 = vpop.trf.xlu0
        %v3747 = vpop.trf.xlu0
        %v3748 = vpop.trf.xlu0
        %v3749 = vpop.trf.xlu0
        %v3750 = vpop.trf.xlu0
        %v3751 = vpop.trf.xlu0
        %v3752 = vpop.trf.xlu0
        %v3753 = vpop.trf.xlu0
        %3754 = vxpose.xlu0.c.b16.start [1/8] %v3700, 128
        %3755 = vxpose.xlu0.c.b16.cont [2/8] 0, 128
        %3756 = vxpose.xlu0.c.b16.cont [3/8] 0, 128
        %3757 = vxpose.xlu0.c.b16.cont [4/8] 0, 128
        %3758 = vxpose.xlu0.c.b16.cont [5/8] 0, 128
        %3759 = vxpose.xlu0.c.b16.cont [6/8] 0, 128
        %3760 = vxpose.xlu0.c.b16.cont [7/8] 0, 128
        %3761 = vxpose.xlu0.c.b16.end [8/8] 0, 128
        %v3762 = vpop.trf.xlu0
        %v3763 = vpop.trf.xlu0
        %v3764 = vpop.trf.xlu0
        %v3765 = vpop.trf.xlu0
        %v3766 = vpop.trf.xlu0
        %v3767 = vpop.trf.xlu0
        %v3768 = vpop.trf.xlu0
        %v3769 = vpop.trf.xlu0
        %3770 = vxpose.xlu0.c.b16.start [1/8] %v3704, 128
        %3771 = vxpose.xlu0.c.b16.cont [2/8] 0, 128
        %3772 = vxpose.xlu0.c.b16.cont [3/8] 0, 128
        %3773 = vxpose.xlu0.c.b16.cont [4/8] 0, 128
        %3774 = vxpose.xlu0.c.b16.cont [5/8] 0, 128
        %3775 = vxpose.xlu0.c.b16.cont [6/8] 0, 128
        %3776 = vxpose.xlu0.c.b16.cont [7/8] 0, 128
        %3777 = vxpose.xlu0.c.b16.end [8/8] 0, 128
        %v3778 = vpop.trf.xlu0
        %v3779 = vpop.trf.xlu0
        %v3780 = vpop.trf.xlu0
        %v3781 = vpop.trf.xlu0
        %v3782 = vpop.trf.xlu0
        %v3783 = vpop.trf.xlu0
        %v3784 = vpop.trf.xlu0
        %v3785 = vpop.trf.xlu0
        %3786 = vxpose.xlu0.c.b16.start [1/8] %v3708, 128
        %3787 = vxpose.xlu0.c.b16.cont [2/8] 0, 128
        %3788 = vxpose.xlu0.c.b16.cont [3/8] 0, 128
        %3789 = vxpose.xlu0.c.b16.cont [4/8] 0, 128
        %3790 = vxpose.xlu0.c.b16.cont [5/8] 0, 128
        %3791 = vxpose.xlu0.c.b16.cont [6/8] 0, 128
        %3792 = vxpose.xlu0.c.b16.cont [7/8] 0, 128
        %3793 = vxpose.xlu0.c.b16.end [8/8] 0, 128
        %v3794 = vpop.trf.xlu0
        %v3795 = vpop.trf.xlu0
        %v3796 = vpop.trf.xlu0
        %v3797 = vpop.trf.xlu0
        %v3798 = vpop.trf.xlu0
        %v3799 = vpop.trf.xlu0
        %v3800 = vpop.trf.xlu0
        %v3801 = vpop.trf.xlu0
        %3802 = vxpose.xlu0.c.b16.start [1/8] %v3712, 128
        %3803 = vxpose.xlu0.c.b16.cont [2/8] 0, 128
        %3804 = vxpose.xlu0.c.b16.cont [3/8] 0, 128
        %3805 = vxpose.xlu0.c.b16.cont [4/8] 0, 128
        %3806 = vxpose.xlu0.c.b16.cont [5/8] 0, 128
        %3807 = vxpose.xlu0.c.b16.cont [6/8] 0, 128
        %3808 = vxpose.xlu0.c.b16.cont [7/8] 0, 128
        %3809 = vxpose.xlu0.c.b16.end [8/8] 0, 128
        %v3810 = vpop.trf.xlu0
        %v3811 = vpop.trf.xlu0
        %v3812 = vpop.trf.xlu0
        %v3813 = vpop.trf.xlu0
        %v3814 = vpop.trf.xlu0
        %v3815 = vpop.trf.xlu0
        %v3816 = vpop.trf.xlu0
        %v3817 = vpop.trf.xlu0
        %3818 = vxpose.xlu0.c.b16.start [1/8] %v3716, 128
        %3819 = vxpose.xlu0.c.b16.cont [2/8] 0, 128
        %3820 = vxpose.xlu0.c.b16.cont [3/8] 0, 128
        %3821 = vxpose.xlu0.c.b16.cont [4/8] 0, 128
        %3822 = vxpose.xlu0.c.b16.cont [5/8] 0, 128
        %3823 = vxpose.xlu0.c.b16.cont [6/8] 0, 128
        %3824 = vxpose.xlu0.c.b16.cont [7/8] 0, 128
        %3825 = vxpose.xlu0.c.b16.end [8/8] 0, 128
        %v3826 = vpop.trf.xlu0
        %v3827 = vpop.trf.xlu0
        %v3828 = vpop.trf.xlu0
        %v3829 = vpop.trf.xlu0
        %v3830 = vpop.trf.xlu0
        %v3831 = vpop.trf.xlu0
        %v3832 = vpop.trf.xlu0
        %v3833 = vpop.trf.xlu0
        %3834 = vxpose.xlu0.c.b16.start [1/8] %v3720, 128
        %3835 = vxpose.xlu0.c.b16.cont [2/8] 0, 128
        %3836 = vxpose.xlu0.c.b16.cont [3/8] 0, 128
        %3837 = vxpose.xlu0.c.b16.cont [4/8] 0, 128
        %3838 = vxpose.xlu0.c.b16.cont [5/8] 0, 128
        %3839 = vxpose.xlu0.c.b16.cont [6/8] 0, 128
        %3840 = vxpose.xlu0.c.b16.cont [7/8] 0, 128
        %3841 = vxpose.xlu0.c.b16.end [8/8] 0, 128
        %v3842 = vpop.trf.xlu0
        %v3843 = vpop.trf.xlu0
        %v3844 = vpop.trf.xlu0
        %v3845 = vpop.trf.xlu0
        %v3846 = vpop.trf.xlu0
        %v3847 = vpop.trf.xlu0
        %v3848 = vpop.trf.xlu0
        %v3849 = vpop.trf.xlu0
        %v3850 = vcombine.low %v3730, %v3794
        %v3852 = vunpack.c.l.s4 1983009808
        %v3853 = vunpack.c.0.s8 %v3852
        %v3854 = vlaneseq
        %v3855 = vshrl.u32 %v3854, 7
        %v3856 = vsub.s32 %v3853, %v3855
        %v3857 = vrot.slane %v3850, %v3856
        %v3858 = vcombine.low %v3762, %v3826
        %v3860 = vunpack.c.l.s4 1983009808
        %v3861 = vunpack.c.0.s8 %v3860
        %v3862 = vlaneseq
        %v3863 = vshrl.u32 %v3862, 7
        %v3864 = vsub.s32 %v3861, %v3863
        %v3865 = vrot.slane %v3858, %v3864
        %v3866 = vcombine.low %v3857, %v3865
        %v3868 = vunpack.c.l.s4 1934713408
        %v3869 = vunpack.c.0.s8 %v3868
        %v3870 = vlaneseq
        %v3871 = vshrl.u32 %v3870, 7
        %v3872 = vsub.s32 %v3869, %v3871
        %v3873 = vrot.slane %v3866, %v3872
        %v3874 = vcombine.high %v3873, 0
        %v3875 = vcombine.low %v3746, %v3810
        %v3877 = vunpack.c.l.s4 1983009808
        %v3878 = vunpack.c.0.s8 %v3877
        %v3879 = vlaneseq
        %v3880 = vshrl.u32 %v3879, 7
        %v3881 = vsub.s32 %v3878, %v3880
        %v3882 = vrot.slane %v3875, %v3881
        %v3883 = vcombine.low %v3778, %v3842
        %v3885 = vunpack.c.l.s4 1983009808
        %v3886 = vunpack.c.0.s8 %v3885
        %v3887 = vlaneseq
        %v3888 = vshrl.u32 %v3887, 7
        %v3889 = vsub.s32 %v3886, %v3888
        %v3890 = vrot.slane %v3883, %v3889
        %v3891 = vcombine.low %v3882, %v3890
        %v3893 = vunpack.c.l.s4 1934713408
        %v3894 = vunpack.c.0.s8 %v3893
        %v3895 = vlaneseq
        %v3896 = vshrl.u32 %v3895, 7
        %v3897 = vsub.s32 %v3894, %v3896
        %v3898 = vrot.slane %v3891, %v3897
        %v3899 = vcombine.high %v3898, 0
        %v3902 = vpack.i.b16 %v3898, %v3873
        %v3903 = vshrl.u32 %v3873, 16
        %v3904 = vshrl.u32 %v3898, 16
        %v3905 = vpack.i.b16 %v3904, %v3903
        %v3908 = vpack.i.b16 %v3899, %v3874
        %v3909 = vshrl.u32 %v3874, 16
        %v3910 = vshrl.u32 %v3899, 16
        %v3911 = vpack.i.b16 %v3910, %v3909
        %v3913 = vsel %vm1062, %v3902, 0
        %v3916 = vsel %vm1062, %v3490, 0
        %3918 = vmatprep.subr.bf16.mxu0 0
        %3919 = vmatpush1.bf16.xpose.msra.mxu0 0
        %3920 = vmatprep.subr.bf16.mxu0 0
        %3921 = vmatpush1.bf16.xpose.msra.mxu0 0
        %3922 = vmatprep.subr.bf16.mxu0 0
        %3923 = vmatpush1.bf16.xpose.msra.mxu0 0
        %3924 = vmatprep.subr.bf16.mxu0 0
        %3925 = vmatpush1.bf16.xpose.msra.mxu0 0
        %3926 = vmatprep.subr.bf16.mxu0 0
        %3927 = vmatpush1.bf16.xpose.msra.mxu0 0
        %3928 = vmatprep.subr.bf16.mxu0 0
        %3929 = vmatpush1.bf16.xpose.msra.mxu0 0
        %3930 = vmatprep.subr.bf16.mxu0 0
        %3931 = vmatpush1.bf16.xpose.msra.mxu0 0
        %3932 = vmatprep.subr.bf16.mxu0 0
        %3933 = vmatpush1.bf16.xpose.msra.mxu0 %v3916
        %3934 = vmatprep.subr.bf16.mxu0 0
        %3935 = vmatpush2.bf16.xpose.msra.mxu0 0
        %3936 = vmatprep.subr.bf16.mxu0 0
        %3937 = vmatpush2.bf16.xpose.msra.mxu0 0
        %3938 = vmatprep.subr.bf16.mxu0 0
        %3939 = vmatpush2.bf16.xpose.msra.mxu0 0
        %3940 = vmatprep.subr.bf16.mxu0 0
        %3941 = vmatpush2.bf16.xpose.msra.mxu0 0
        %3942 = vmatprep.subr.bf16.mxu0 0
        %3943 = vmatpush2.bf16.xpose.msra.mxu0 0
        %3944 = vmatprep.subr.bf16.mxu0 0
        %3945 = vmatpush2.bf16.xpose.msra.mxu0 0
        %3946 = vmatprep.subr.bf16.mxu0 0
        %3947 = vmatpush2.bf16.xpose.msra.mxu0 0
        %3948 = vmatprep.subr.bf16.mxu0 0
        %3949 = vmatpush2.bf16.xpose.msra.mxu0 0
        %3950 = vmatprep.mubr.bf16.mxu0 0
        %3951 = vmatmul.mubr.bf16.gmra.mxu0 %v3913
        %v3952 = vpop.f32.mrf.mxu0
        %v3953 = vadd.f32 0.0, %v3952
        %v3954 = vpop.f32.mrf.mxu0
        %v3955 = vpop.f32.mrf.mxu0
        %v3956 = vpop.f32.mrf.mxu0
        %3957 = vdwg.mxu0
        %v3959 = vsel %vm1062, %v3905, 0
        %v3962 = vsel %vm1062, %v3491, 0
        %3964 = vmatprep.subr.bf16.mxu0 0
        %3965 = vmatpush1.bf16.xpose.msra.mxu0 0
        %3966 = vmatprep.subr.bf16.mxu0 0
        %3967 = vmatpush1.bf16.xpose.msra.mxu0 0
        %3968 = vmatprep.subr.bf16.mxu0 0
        %3969 = vmatpush1.bf16.xpose.msra.mxu0 0
        %3970 = vmatprep.subr.bf16.mxu0 0
        %3971 = vmatpush1.bf16.xpose.msra.mxu0 0
        %3972 = vmatprep.subr.bf16.mxu0 0
        %3973 = vmatpush1.bf16.xpose.msra.mxu0 0
        %3974 = vmatprep.subr.bf16.mxu0 0
        %3975 = vmatpush1.bf16.xpose.msra.mxu0 0
        %3976 = vmatprep.subr.bf16.mxu0 0
        %3977 = vmatpush1.bf16.xpose.msra.mxu0 0
        %3978 = vmatprep.subr.bf16.mxu0 0
        %3979 = vmatpush1.bf16.xpose.msra.mxu0 %v3962
        %3980 = vmatprep.subr.bf16.mxu0 0
        %3981 = vmatpush2.bf16.xpose.msra.mxu0 0
        %3982 = vmatprep.subr.bf16.mxu0 0
        %3983 = vmatpush2.bf16.xpose.msra.mxu0 0
        %3984 = vmatprep.subr.bf16.mxu0 0
        %3985 = vmatpush2.bf16.xpose.msra.mxu0 0
        %3986 = vmatprep.subr.bf16.mxu0 0
        %3987 = vmatpush2.bf16.xpose.msra.mxu0 0
        %3988 = vmatprep.subr.bf16.mxu0 0
        %3989 = vmatpush2.bf16.xpose.msra.mxu0 0
        %3990 = vmatprep.subr.bf16.mxu0 0
        %3991 = vmatpush2.bf16.xpose.msra.mxu0 0
        %3992 = vmatprep.subr.bf16.mxu0 0
        %3993 = vmatpush2.bf16.xpose.msra.mxu0 0
        %3994 = vmatprep.subr.bf16.mxu0 0
        %3995 = vmatpush2.bf16.xpose.msra.mxu0 0
        %3996 = vmatprep.mubr.bf16.mxu0 0
        %3997 = vmatmul.mubr.bf16.gmra.mxu0 %v3959
        %v3998 = vpop.f32.mrf.mxu0
        %v3999 = vadd.f32 0.0, %v3998
        %v4000 = vpop.f32.mrf.mxu0
        %v4001 = vpop.f32.mrf.mxu0
        %v4002 = vpop.f32.mrf.mxu0
        %4003 = vdwg.mxu0
        %v4005 = vsel %vm1062, %v3908, 0
        %v4008 = vsel %vm1062, %v3492, 0
        %4010 = vmatprep.subr.bf16.mxu0 0
        %4011 = vmatpush1.bf16.xpose.msra.mxu0 0
        %4012 = vmatprep.subr.bf16.mxu0 0
        %4013 = vmatpush1.bf16.xpose.msra.mxu0 0
        %4014 = vmatprep.subr.bf16.mxu0 0
        %4015 = vmatpush1.bf16.xpose.msra.mxu0 0
        %4016 = vmatprep.subr.bf16.mxu0 0
        %4017 = vmatpush1.bf16.xpose.msra.mxu0 0
        %4018 = vmatprep.subr.bf16.mxu0 0
        %4019 = vmatpush1.bf16.xpose.msra.mxu0 0
        %4020 = vmatprep.subr.bf16.mxu0 0
        %4021 = vmatpush1.bf16.xpose.msra.mxu0 0
        %4022 = vmatprep.subr.bf16.mxu0 0
        %4023 = vmatpush1.bf16.xpose.msra.mxu0 0
        %4024 = vmatprep.subr.bf16.mxu0 0
        %4025 = vmatpush1.bf16.xpose.msra.mxu0 %v4008
        %4026 = vmatprep.subr.bf16.mxu0 0
        %4027 = vmatpush2.bf16.xpose.msra.mxu0 0
        %4028 = vmatprep.subr.bf16.mxu0 0
        %4029 = vmatpush2.bf16.xpose.msra.mxu0 0
        %4030 = vmatprep.subr.bf16.mxu0 0
        %4031 = vmatpush2.bf16.xpose.msra.mxu0 0
        %4032 = vmatprep.subr.bf16.mxu0 0
        %4033 = vmatpush2.bf16.xpose.msra.mxu0 0
        %4034 = vmatprep.subr.bf16.mxu0 0
        %4035 = vmatpush2.bf16.xpose.msra.mxu0 0
        %4036 = vmatprep.subr.bf16.mxu0 0
        %4037 = vmatpush2.bf16.xpose.msra.mxu0 0
        %4038 = vmatprep.subr.bf16.mxu0 0
        %4039 = vmatpush2.bf16.xpose.msra.mxu0 0
        %4040 = vmatprep.subr.bf16.mxu0 0
        %4041 = vmatpush2.bf16.xpose.msra.mxu0 0
        %4042 = vmatprep.mubr.bf16.mxu0 0
        %4043 = vmatmul.mubr.bf16.gmra.mxu0 %v4005
        %v4044 = vpop.f32.mrf.mxu0
        %v4045 = vadd.f32 0.0, %v4044
        %v4046 = vpop.f32.mrf.mxu0
        %v4047 = vpop.f32.mrf.mxu0
        %v4048 = vpop.f32.mrf.mxu0
        %4049 = vdwg.mxu0
        %v4051 = vsel %vm1062, %v3911, 0
        %v4054 = vsel %vm1062, %v3493, 0
        %4056 = vmatprep.subr.bf16.mxu0 0
        %4057 = vmatpush1.bf16.xpose.msra.mxu0 0
        %4058 = vmatprep.subr.bf16.mxu0 0
        %4059 = vmatpush1.bf16.xpose.msra.mxu0 0
        %4060 = vmatprep.subr.bf16.mxu0 0
        %4061 = vmatpush1.bf16.xpose.msra.mxu0 0
        %4062 = vmatprep.subr.bf16.mxu0 0
        %4063 = vmatpush1.bf16.xpose.msra.mxu0 0
        %4064 = vmatprep.subr.bf16.mxu0 0
        %4065 = vmatpush1.bf16.xpose.msra.mxu0 0
        %4066 = vmatprep.subr.bf16.mxu0 0
        %4067 = vmatpush1.bf16.xpose.msra.mxu0 0
        %4068 = vmatprep.subr.bf16.mxu0 0
        %4069 = vmatpush1.bf16.xpose.msra.mxu0 0
        %4070 = vmatprep.subr.bf16.mxu0 0
        %4071 = vmatpush1.bf16.xpose.msra.mxu0 %v4054
        %4072 = vmatprep.subr.bf16.mxu0 0
        %4073 = vmatpush2.bf16.xpose.msra.mxu0 0
        %4074 = vmatprep.subr.bf16.mxu0 0
        %4075 = vmatpush2.bf16.xpose.msra.mxu0 0
        %4076 = vmatprep.subr.bf16.mxu0 0
        %4077 = vmatpush2.bf16.xpose.msra.mxu0 0
        %4078 = vmatprep.subr.bf16.mxu0 0
        %4079 = vmatpush2.bf16.xpose.msra.mxu0 0
        %4080 = vmatprep.subr.bf16.mxu0 0
        %4081 = vmatpush2.bf16.xpose.msra.mxu0 0
        %4082 = vmatprep.subr.bf16.mxu0 0
        %4083 = vmatpush2.bf16.xpose.msra.mxu0 0
        %4084 = vmatprep.subr.bf16.mxu0 0
        %4085 = vmatpush2.bf16.xpose.msra.mxu0 0
        %4086 = vmatprep.subr.bf16.mxu0 0
        %4087 = vmatpush2.bf16.xpose.msra.mxu0 0
        %4088 = vmatprep.mubr.bf16.mxu0 0
        %4089 = vmatmul.mubr.bf16.gmra.mxu0 %v4051
        %v4090 = vpop.f32.mrf.mxu0
        %v4091 = vadd.f32 0.0, %v4090
        %v4092 = vpop.f32.mrf.mxu0
        %v4093 = vpop.f32.mrf.mxu0
        %v4094 = vpop.f32.mrf.mxu0
        %4095 = vdwg.mxu0
        %4096 = vxpose.xlu0.b32.start [1/16] %v3953, 128
        %4097 = vxpose.xlu0.b32.cont [2/16] 0.0, 128
        %4098 = vxpose.xlu0.b32.cont [3/16] 0.0, 128
        %4099 = vxpose.xlu0.b32.cont [4/16] 0.0, 128
        %4100 = vxpose.xlu0.b32.cont [5/16] 0.0, 128
        %4101 = vxpose.xlu0.b32.cont [6/16] 0.0, 128
        %4102 = vxpose.xlu0.b32.cont [7/16] 0.0, 128
        %4103 = vxpose.xlu0.b32.cont [8/16] 0.0, 128
        %4104 = vxpose.xlu0.b32.cont [9/16] 0.0, 128
        %4105 = vxpose.xlu0.b32.cont [10/16] 0.0, 128
        %4106 = vxpose.xlu0.b32.cont [11/16] 0.0, 128
        %4107 = vxpose.xlu0.b32.cont [12/16] 0.0, 128
        %4108 = vxpose.xlu0.b32.cont [13/16] 0.0, 128
        %4109 = vxpose.xlu0.b32.cont [14/16] 0.0, 128
        %4110 = vxpose.xlu0.b32.cont [15/16] 0.0, 128
        %4111 = vxpose.xlu0.b32.end [16/16] 0.0, 128
        %v4112 = vpop.trf.xlu0
        %v4113 = vpop.trf.xlu0
        %v4114 = vpop.trf.xlu0
        %v4115 = vpop.trf.xlu0
        %v4116 = vpop.trf.xlu0
        %v4117 = vpop.trf.xlu0
        %v4118 = vpop.trf.xlu0
        %v4119 = vpop.trf.xlu0
        %v4120 = vpop.trf.xlu0
        %v4121 = vpop.trf.xlu0
        %v4122 = vpop.trf.xlu0
        %v4123 = vpop.trf.xlu0
        %v4124 = vpop.trf.xlu0
        %v4125 = vpop.trf.xlu0
        %v4126 = vpop.trf.xlu0
        %v4127 = vpop.trf.xlu0
        %4128 = vxpose.xlu0.b32.start [1/16] %v3999, 128
        %4129 = vxpose.xlu0.b32.cont [2/16] 0.0, 128
        %4130 = vxpose.xlu0.b32.cont [3/16] 0.0, 128
        %4131 = vxpose.xlu0.b32.cont [4/16] 0.0, 128
        %4132 = vxpose.xlu0.b32.cont [5/16] 0.0, 128
        %4133 = vxpose.xlu0.b32.cont [6/16] 0.0, 128
        %4134 = vxpose.xlu0.b32.cont [7/16] 0.0, 128
        %4135 = vxpose.xlu0.b32.cont [8/16] 0.0, 128
        %4136 = vxpose.xlu0.b32.cont [9/16] 0.0, 128
        %4137 = vxpose.xlu0.b32.cont [10/16] 0.0, 128
        %4138 = vxpose.xlu0.b32.cont [11/16] 0.0, 128
        %4139 = vxpose.xlu0.b32.cont [12/16] 0.0, 128
        %4140 = vxpose.xlu0.b32.cont [13/16] 0.0, 128
        %4141 = vxpose.xlu0.b32.cont [14/16] 0.0, 128
        %4142 = vxpose.xlu0.b32.cont [15/16] 0.0, 128
        %4143 = vxpose.xlu0.b32.end [16/16] 0.0, 128
        %v4144 = vpop.trf.xlu0
        %v4145 = vpop.trf.xlu0
        %v4146 = vpop.trf.xlu0
        %v4147 = vpop.trf.xlu0
        %v4148 = vpop.trf.xlu0
        %v4149 = vpop.trf.xlu0
        %v4150 = vpop.trf.xlu0
        %v4151 = vpop.trf.xlu0
        %v4152 = vpop.trf.xlu0
        %v4153 = vpop.trf.xlu0
        %v4154 = vpop.trf.xlu0
        %v4155 = vpop.trf.xlu0
        %v4156 = vpop.trf.xlu0
        %v4157 = vpop.trf.xlu0
        %v4158 = vpop.trf.xlu0
        %v4159 = vpop.trf.xlu0
        %4160 = vxpose.xlu0.b32.start [1/16] %v4045, 128
        %4161 = vxpose.xlu0.b32.cont [2/16] 0.0, 128
        %4162 = vxpose.xlu0.b32.cont [3/16] 0.0, 128
        %4163 = vxpose.xlu0.b32.cont [4/16] 0.0, 128
        %4164 = vxpose.xlu0.b32.cont [5/16] 0.0, 128
        %4165 = vxpose.xlu0.b32.cont [6/16] 0.0, 128
        %4166 = vxpose.xlu0.b32.cont [7/16] 0.0, 128
        %4167 = vxpose.xlu0.b32.cont [8/16] 0.0, 128
        %4168 = vxpose.xlu0.b32.cont [9/16] 0.0, 128
        %4169 = vxpose.xlu0.b32.cont [10/16] 0.0, 128
        %4170 = vxpose.xlu0.b32.cont [11/16] 0.0, 128
        %4171 = vxpose.xlu0.b32.cont [12/16] 0.0, 128
        %4172 = vxpose.xlu0.b32.cont [13/16] 0.0, 128
        %4173 = vxpose.xlu0.b32.cont [14/16] 0.0, 128
        %4174 = vxpose.xlu0.b32.cont [15/16] 0.0, 128
        %4175 = vxpose.xlu0.b32.end [16/16] 0.0, 128
        %v4176 = vpop.trf.xlu0
        %v4177 = vpop.trf.xlu0
        %v4178 = vpop.trf.xlu0
        %v4179 = vpop.trf.xlu0
        %v4180 = vpop.trf.xlu0
        %v4181 = vpop.trf.xlu0
        %v4182 = vpop.trf.xlu0
        %v4183 = vpop.trf.xlu0
        %v4184 = vpop.trf.xlu0
        %v4185 = vpop.trf.xlu0
        %v4186 = vpop.trf.xlu0
        %v4187 = vpop.trf.xlu0
        %v4188 = vpop.trf.xlu0
        %v4189 = vpop.trf.xlu0
        %v4190 = vpop.trf.xlu0
        %v4191 = vpop.trf.xlu0
        %4192 = vxpose.xlu0.b32.start [1/16] %v4091, 128
        %4193 = vxpose.xlu0.b32.cont [2/16] 0.0, 128
        %4194 = vxpose.xlu0.b32.cont [3/16] 0.0, 128
        %4195 = vxpose.xlu0.b32.cont [4/16] 0.0, 128
        %4196 = vxpose.xlu0.b32.cont [5/16] 0.0, 128
        %4197 = vxpose.xlu0.b32.cont [6/16] 0.0, 128
        %4198 = vxpose.xlu0.b32.cont [7/16] 0.0, 128
        %4199 = vxpose.xlu0.b32.cont [8/16] 0.0, 128
        %4200 = vxpose.xlu0.b32.cont [9/16] 0.0, 128
        %4201 = vxpose.xlu0.b32.cont [10/16] 0.0, 128
        %4202 = vxpose.xlu0.b32.cont [11/16] 0.0, 128
        %4203 = vxpose.xlu0.b32.cont [12/16] 0.0, 128
        %4204 = vxpose.xlu0.b32.cont [13/16] 0.0, 128
        %4205 = vxpose.xlu0.b32.cont [14/16] 0.0, 128
        %4206 = vxpose.xlu0.b32.cont [15/16] 0.0, 128
        %4207 = vxpose.xlu0.b32.end [16/16] 0.0, 128
        %v4208 = vpop.trf.xlu0
        %v4209 = vpop.trf.xlu0
        %v4210 = vpop.trf.xlu0
        %v4211 = vpop.trf.xlu0
        %v4212 = vpop.trf.xlu0
        %v4213 = vpop.trf.xlu0
        %v4214 = vpop.trf.xlu0
        %v4215 = vpop.trf.xlu0
        %v4216 = vpop.trf.xlu0
        %v4217 = vpop.trf.xlu0
        %v4218 = vpop.trf.xlu0
        %v4219 = vpop.trf.xlu0
        %v4220 = vpop.trf.xlu0
        %v4221 = vpop.trf.xlu0
        %v4222 = vpop.trf.xlu0
        %v4223 = vpop.trf.xlu0
        %v4224 = vcombine.low %v4112, %v4176
        %v4225 = vcombine.high %v4112, %v4176
        %v4227 = vunpack.c.l.s4 1983009808
        %v4228 = vunpack.c.0.s8 %v4227
        %v4229 = vlaneseq
        %v4230 = vshrl.u32 %v4229, 7
        %v4231 = vsub.s32 %v4228, %v4230
        %v4232 = vrot.slane %v4224, %v4231
        %v4234 = vunpack.c.l.s4 1983009808
        %v4235 = vunpack.c.0.s8 %v4234
        %v4236 = vlaneseq
        %v4237 = vshrl.u32 %v4236, 7
        %v4238 = vsub.s32 %v4235, %v4237
        %v4239 = vrot.slane %v4225, %v4238
        %v4240 = vcombine.low %v4144, %v4208
        %v4241 = vcombine.high %v4144, %v4208
        %v4243 = vunpack.c.l.s4 1983009808
        %v4244 = vunpack.c.0.s8 %v4243
        %v4245 = vlaneseq
        %v4246 = vshrl.u32 %v4245, 7
        %v4247 = vsub.s32 %v4244, %v4246
        %v4248 = vrot.slane %v4240, %v4247
        %v4250 = vunpack.c.l.s4 1983009808
        %v4251 = vunpack.c.0.s8 %v4250
        %v4252 = vlaneseq
        %v4253 = vshrl.u32 %v4252, 7
        %v4254 = vsub.s32 %v4251, %v4253
        %v4255 = vrot.slane %v4241, %v4254
        %v4256 = vcombine.low %v4232, %v4248
        %v4257 = vcombine.high %v4232, %v4248
        %v4259 = vunpack.c.l.s4 1934713408
        %v4260 = vunpack.c.0.s8 %v4259
        %v4261 = vlaneseq
        %v4262 = vshrl.u32 %v4261, 7
        %v4263 = vsub.s32 %v4260, %v4262
        %v4264 = vrot.slane %v4256, %v4263
        %v4266 = vunpack.c.l.s4 1934713408
        %v4267 = vunpack.c.0.s8 %v4266
        %v4268 = vlaneseq
        %v4269 = vshrl.u32 %v4268, 7
        %v4270 = vsub.s32 %v4267, %v4269
        %v4271 = vrot.slane %v4257, %v4270
        %v4272 = vcombine.low %v4239, %v4255
        %v4273 = vcombine.high %v4239, %v4255
        %v4275 = vunpack.c.l.s4 1934713408
        %v4276 = vunpack.c.0.s8 %v4275
        %v4277 = vlaneseq
        %v4278 = vshrl.u32 %v4277, 7
        %v4279 = vsub.s32 %v4276, %v4278
        %v4280 = vrot.slane %v4272, %v4279
        %v4282 = vunpack.c.l.s4 1934713408
        %v4283 = vunpack.c.0.s8 %v4282
        %v4284 = vlaneseq
        %v4285 = vshrl.u32 %v4284, 7
        %v4286 = vsub.s32 %v4283, %v4285
        %v4287 = vrot.slane %v4273, %v4286
        %v4288 = vcombine.high %v4264, 0.0
        %v4289 = vcombine.high %v4271, 0.0
        %v4290 = vcombine.high %v4280, 0.0
        %v4291 = vcombine.high %v4287, 0.0
        %v4292 = vcombine.low %v4264, %v4271
        %v4294 = vunpack.c.l.s4 1983009808
        %v4295 = vunpack.c.0.s8 %v4294
        %v4296 = vlaneseq
        %v4297 = vshrl.u32 %v4296, 7
        %v4298 = vsub.s32 %v4295, %v4297
        %v4299 = vrot.slane %v4292, %v4298
        %v4300 = vcombine.low %v4288, %v4289
        %v4302 = vunpack.c.l.s4 1983009808
        %v4303 = vunpack.c.0.s8 %v4302
        %v4304 = vlaneseq
        %v4305 = vshrl.u32 %v4304, 7
        %v4306 = vsub.s32 %v4303, %v4305
        %v4307 = vrot.slane %v4300, %v4306
        %v4308 = vcombine.low %v4280, %v4287
        %v4310 = vunpack.c.l.s4 1983009808
        %v4311 = vunpack.c.0.s8 %v4310
        %v4312 = vlaneseq
        %v4313 = vshrl.u32 %v4312, 7
        %v4314 = vsub.s32 %v4311, %v4313
        %v4315 = vrot.slane %v4308, %v4314
        %v4316 = vcombine.low %v4290, %v4291
        %v4318 = vunpack.c.l.s4 1983009808
        %v4319 = vunpack.c.0.s8 %v4318
        %v4320 = vlaneseq
        %v4321 = vshrl.u32 %v4320, 7
        %v4322 = vsub.s32 %v4319, %v4321
        %v4323 = vrot.slane %v4316, %v4322
        %v4324 = vcombine.low %v4299, %v4307
        %v4325 = vcombine.high %v4299, %v4307
        %v4327 = vunpack.c.l.s4 1934713408
        %v4328 = vunpack.c.0.s8 %v4327
        %v4329 = vlaneseq
        %v4330 = vshrl.u32 %v4329, 7
        %v4331 = vsub.s32 %v4328, %v4330
        %v4332 = vrot.slane %v4324, %v4331
        %v4334 = vunpack.c.l.s4 1934713408
        %v4335 = vunpack.c.0.s8 %v4334
        %v4336 = vlaneseq
        %v4337 = vshrl.u32 %v4336, 7
        %v4338 = vsub.s32 %v4335, %v4337
        %v4339 = vrot.slane %v4325, %v4338
        %v4340 = vcombine.low %v4315, %v4323
        %v4341 = vcombine.high %v4315, %v4323
        %v4343 = vunpack.c.l.s4 1934713408
        %v4344 = vunpack.c.0.s8 %v4343
        %v4345 = vlaneseq
        %v4346 = vshrl.u32 %v4345, 7
        %v4347 = vsub.s32 %v4344, %v4346
        %v4348 = vrot.slane %v4340, %v4347
        %v4350 = vunpack.c.l.s4 1934713408
        %v4351 = vunpack.c.0.s8 %v4350
        %v4352 = vlaneseq
        %v4353 = vshrl.u32 %v4352, 7
        %v4354 = vsub.s32 %v4351, %v4353
        %v4355 = vrot.slane %v4341, %v4354
        %v4356 = vcombine.low %v4332, %v4348
        %v4357 = vcombine.high %v4332, %v4348
        %v4358 = vcombine.low %v4339, %v4355
        %v4359 = vcombine.high %v4339, %v4355
        %4361 = vrot.lane.b32.xlu0 %v4357, 8
        %v4362 = vpop.permute.xlu0 %4361
        %4365 = vrot.lane.b32.xlu0 %v4358, 16
        %v4366 = vpop.permute.xlu0 %4365
        %4369 = vrot.lane.b32.xlu0 %v4359, 24
        %v4370 = vpop.permute.xlu0 %4369
        %v4372 = vsel %vm1062, %v4356, %v4362
        %v4373 = vsel %vm2175, %v4372, %v4366
        %v4374 = vsel %vm2177, %v4373, %v4370
        %v4375 = vpack.c.bf16 %v4374, %v4374
        %v4376 = vlaneseq
        %v4377 = vshrl.u32 %v4376, 7
        %v4378 = vsub.s32 0, %v4377
        %v4379 = vrot.slane %v2453, %v4378
        %v4384 = vunpack.c.l.b16 %v2435
        %v4385 = vunpack.c.l.b16 %v2436
        %v4386 = vunpack.c.l.b16 %v2437
        %v4387 = vunpack.c.l.b16 %v2438
        %v4388 = vpack.c.b16 %v4385, %v4384
        %v4389 = vpack.c.b16 %v4387, %v4386
        %v4393 = vsel %vm270, %v4375, 0
        %4395 = vmatprep.subr.bf16.mxu0 0
        %4396 = vmatpush1.bf16.msra.mxu0 0
        %4397 = vmatprep.subr.bf16.mxu0 0
        %4398 = vmatpush1.bf16.msra.mxu0 0
        %4399 = vmatprep.subr.bf16.mxu0 0
        %4400 = vmatpush1.bf16.msra.mxu0 0
        %4401 = vmatprep.subr.bf16.mxu0 0
        %4402 = vmatpush1.bf16.msra.mxu0 0
        %4403 = vmatprep.subr.bf16.mxu0 0
        %4404 = vmatpush1.bf16.msra.mxu0 0
        %4405 = vmatprep.subr.bf16.mxu0 0
        %4406 = vmatpush1.bf16.msra.mxu0 0
        %4407 = vmatprep.subr.bf16.mxu0 0
        %4408 = vmatpush1.bf16.msra.mxu0 %v4389
        %4409 = vmatprep.subr.bf16.mxu0 0
        %4410 = vmatpush1.bf16.msra.mxu0 %v4388
        %4411 = vmatprep.subr.bf16.mxu0 0
        %4412 = vmatpush2.bf16.msra.mxu0 0
        %4413 = vmatprep.subr.bf16.mxu0 0
        %4414 = vmatpush2.bf16.msra.mxu0 0
        %4415 = vmatprep.subr.bf16.mxu0 0
        %4416 = vmatpush2.bf16.msra.mxu0 0
        %4417 = vmatprep.subr.bf16.mxu0 0
        %4418 = vmatpush2.bf16.msra.mxu0 0
        %4419 = vmatprep.subr.bf16.mxu0 0
        %4420 = vmatpush2.bf16.msra.mxu0 0
        %4421 = vmatprep.subr.bf16.mxu0 0
        %4422 = vmatpush2.bf16.msra.mxu0 0
        %4423 = vmatprep.subr.bf16.mxu0 0
        %4424 = vmatpush2.bf16.msra.mxu0 0
        %4425 = vmatprep.subr.bf16.mxu0 0
        %4426 = vmatpush2.bf16.msra.mxu0 0
        %4427 = vmatprep.mubr.bf16.mxu0 0
        %4428 = vmatmul.mubr.bf16.gmra.mxu0 %v4393
        %v4429 = vpop.f32.mrf.mxu0
        %v4430 = vadd.f32 %v4379, %v4429
        %v4431 = vpop.f32.mrf.mxu0
        %v4432 = vpop.f32.mrf.mxu0
        %v4433 = vpop.f32.mrf.mxu0
        %4434 = vdwg.mxu0
        %v4435 = vadd.f32 %v2429, %v4430
        %v4436 = vsel %vm270, %v4435, 0.0
        %4437 = vadd.xlane.f32.xlu0 %v4436
        %v4438 = vpop.xlane.xlu0 %4437
        %v4439 = vmul.f32 %v4438, %v2243
        %v4440 = vsub.f32 %v4435, %v4439
        %v4441 = vmul.f32 %v4440, %v4440
        %v4442 = vsel %vm270, %v4441, 0.0
        %4443 = vadd.xlane.f32.xlu0 %v4442
        %v4444 = vpop.xlane.xlu0 %4443
        %v4445 = vmul.f32 %v4444, %v2243
        %v4446 = vadd.f32 %v4445, 1e-12
        %v4447 = vrsqrt.pop %v4446
        %v4448 = vmul.f32 %v4440, %v4447
        %v4449 = vlaneseq
        %v4450 = vshrl.u32 %v4449, 7
        %v4451 = vsub.s32 0, %v4450
        %v4452 = vrot.slane %v2454, %v4451
        %v4453 = vmul.f32 %v4448, %v4452
        %v4454 = vlaneseq
        %v4455 = vshrl.u32 %v4454, 7
        %v4456 = vsub.s32 0, %v4455
        %v4457 = vrot.slane %v2455, %v4456
        %v4458 = vadd.f32 %v4453, %v4457
        %v4459 = vpack.c.bf16 %v4458, %v4458
        %v4460 = vlaneseq
        %v4461 = vshrl.u32 %v4460, 7
        %v4462 = vsub.s32 0, %v4461
        %v4463 = vrot.slane %v2456, %v4462
        %v4468 = vunpack.c.l.b16 %v2439
        %v4469 = vunpack.c.l.b16 %v2440
        %v4470 = vunpack.c.l.b16 %v2441
        %v4471 = vunpack.c.l.b16 %v2442
        %v4472 = vpack.c.b16 %v4469, %v4468
        %v4473 = vpack.c.b16 %v4471, %v4470
        %v4477 = vsel %vm270, %v4459, 0
        %4479 = vmatprep.subr.bf16.mxu0 0
        %4480 = vmatpush1.bf16.msra.mxu0 0
        %4481 = vmatprep.subr.bf16.mxu0 0
        %4482 = vmatpush1.bf16.msra.mxu0 0
        %4483 = vmatprep.subr.bf16.mxu0 0
        %4484 = vmatpush1.bf16.msra.mxu0 0
        %4485 = vmatprep.subr.bf16.mxu0 0
        %4486 = vmatpush1.bf16.msra.mxu0 0
        %4487 = vmatprep.subr.bf16.mxu0 0
        %4488 = vmatpush1.bf16.msra.mxu0 0
        %4489 = vmatprep.subr.bf16.mxu0 0
        %4490 = vmatpush1.bf16.msra.mxu0 0
        %4491 = vmatprep.subr.bf16.mxu0 0
        %4492 = vmatpush1.bf16.msra.mxu0 %v4473
        %4493 = vmatprep.subr.bf16.mxu0 0
        %4494 = vmatpush1.bf16.msra.mxu0 %v4472
        %4495 = vmatprep.subr.bf16.mxu0 0
        %4496 = vmatpush2.bf16.msra.mxu0 0
        %4497 = vmatprep.subr.bf16.mxu0 0
        %4498 = vmatpush2.bf16.msra.mxu0 0
        %4499 = vmatprep.subr.bf16.mxu0 0
        %4500 = vmatpush2.bf16.msra.mxu0 0
        %4501 = vmatprep.subr.bf16.mxu0 0
        %4502 = vmatpush2.bf16.msra.mxu0 0
        %4503 = vmatprep.subr.bf16.mxu0 0
        %4504 = vmatpush2.bf16.msra.mxu0 0
        %4505 = vmatprep.subr.bf16.mxu0 0
        %4506 = vmatpush2.bf16.msra.mxu0 0
        %4507 = vmatprep.subr.bf16.mxu0 0
        %4508 = vmatpush2.bf16.msra.mxu0 0
        %4509 = vmatprep.subr.bf16.mxu0 0
        %4510 = vmatpush2.bf16.msra.mxu0 0
        %4511 = vmatprep.mubr.bf16.mxu0 0
        %4512 = vmatmul.mubr.bf16.gmra.mxu0 %v4477
        %v4513 = vpop.f32.mrf.mxu0
        %v4514 = vadd.f32 %v4463, %v4513
        %v4515 = vpop.f32.mrf.mxu0
        %v4516 = vpop.f32.mrf.mxu0
        %v4517 = vpop.f32.mrf.mxu0
        %4518 = vdwg.mxu0
        %v4519 = vmul.f32 %v4514, %v4514
        %v4520 = vmul.f32 %v4514, %v4519
        %v4521 = vmul.f32 %v4520, 0.044715
        %v4522 = vadd.f32 %v4514, %v4521
        %v4523 = vmul.f32 %v4522, 0.7978846
        %v4524 = vtanh.pop %v4523
        %v4525 = vadd.f32 %v4524, 1.0
        %v4526 = vmul.f32 %v4525, 0.5
        %v4527 = vmul.f32 %v4514, %v4526
        %v4528 = vpack.c.bf16 %v4527, %v4527
        %v4529 = vlaneseq
        %v4530 = vshrl.u32 %v4529, 7
        %v4531 = vsub.s32 0, %v4530
        %v4532 = vrot.slane %v2457, %v4531
        %v4541 = vunpack.c.l.b16 %v2443
        %v4542 = vunpack.c.l.b16 %v2444
        %v4543 = vunpack.c.l.b16 %v2445
        %v4544 = vunpack.c.l.b16 %v2446
        %v4545 = vunpack.c.l.b16 %v2447
        %v4546 = vunpack.c.l.b16 %v2448
        %v4547 = vunpack.c.l.b16 %v2449
        %v4548 = vunpack.c.l.b16 %v2450
        %v4549 = vpack.c.b16 %v4542, %v4541
        %v4550 = vpack.c.b16 %v4544, %v4543
        %v4551 = vpack.c.b16 %v4546, %v4545
        %v4552 = vpack.c.b16 %v4548, %v4547
        %v4558 = vsel %vm2362, %v4528, 0
        %4560 = vmatprep.subr.bf16.mxu0 0
        %4561 = vmatpush1.bf16.msra.mxu0 0
        %4562 = vmatprep.subr.bf16.mxu0 0
        %4563 = vmatpush1.bf16.msra.mxu0 0
        %4564 = vmatprep.subr.bf16.mxu0 0
        %4565 = vmatpush1.bf16.msra.mxu0 0
        %4566 = vmatprep.subr.bf16.mxu0 0
        %4567 = vmatpush1.bf16.msra.mxu0 0
        %4568 = vmatprep.subr.bf16.mxu0 0
        %4569 = vmatpush1.bf16.msra.mxu0 %v4552
        %4570 = vmatprep.subr.bf16.mxu0 0
        %4571 = vmatpush1.bf16.msra.mxu0 %v4551
        %4572 = vmatprep.subr.bf16.mxu0 0
        %4573 = vmatpush1.bf16.msra.mxu0 %v4550
        %4574 = vmatprep.subr.bf16.mxu0 0
        %4575 = vmatpush1.bf16.msra.mxu0 %v4549
        %4576 = vmatprep.subr.bf16.mxu0 0
        %4577 = vmatpush2.bf16.msra.mxu0 0
        %4578 = vmatprep.subr.bf16.mxu0 0
        %4579 = vmatpush2.bf16.msra.mxu0 0
        %4580 = vmatprep.subr.bf16.mxu0 0
        %4581 = vmatpush2.bf16.msra.mxu0 0
        %4582 = vmatprep.subr.bf16.mxu0 0
        %4583 = vmatpush2.bf16.msra.mxu0 0
        %4584 = vmatprep.subr.bf16.mxu0 0
        %4585 = vmatpush2.bf16.msra.mxu0 0
        %4586 = vmatprep.subr.bf16.mxu0 0
        %4587 = vmatpush2.bf16.msra.mxu0 0
        %4588 = vmatprep.subr.bf16.mxu0 0
        %4589 = vmatpush2.bf16.msra.mxu0 0
        %4590 = vmatprep.subr.bf16.mxu0 0
        %4591 = vmatpush2.bf16.msra.mxu0 0
        %4592 = vmatprep.mubr.bf16.mxu0 0
        %4593 = vmatmul.mubr.bf16.gmra.mxu0 %v4558
        %v4594 = vpop.f32.mrf.mxu0
        %v4595 = vadd.f32 %v4532, %v4594
        %v4596 = vpop.f32.mrf.mxu0
        %v4597 = vpop.f32.mrf.mxu0
        %v4598 = vpop.f32.mrf.mxu0
        %4599 = vdwg.mxu0
        %v4600 = vadd.f32 %v4458, %v4595
        %v4601 = vsel %vm270, %v4600, 0.0
        %4602 = vadd.xlane.f32.xlu0 %v4601
        %v4603 = vpop.xlane.xlu0 %4602
        %v4604 = vmul.f32 %v4603, %v2243
        %v4605 = vsub.f32 %v4600, %v4604
        %v4606 = vmul.f32 %v4605, %v4605
        %v4607 = vsel %vm270, %v4606, 0.0
        %4608 = vadd.xlane.f32.xlu0 %v4607
        %v4609 = vpop.xlane.xlu0 %4608
        %v4610 = vmul.f32 %v4609, %v2243
        %v4611 = vadd.f32 %v4610, 1e-12
        %v4612 = vrsqrt.pop %v4611
        %v4613 = vmul.f32 %v4605, %v4612
        %v4614 = vlaneseq
        %v4615 = vshrl.u32 %v4614, 7
        %v4616 = vsub.s32 0, %v4615
        %v4617 = vrot.slane %v2458, %v4616
        %v4618 = vmul.f32 %v4613, %v4617
        %v4619 = vlaneseq
        %v4620 = vshrl.u32 %v4619, 7
        %v4621 = vsub.s32 0, %v4620
        %v4622 = vrot.slane %v2459, %v4621
        %v4623 = vadd.f32 %v4618, %v4622
        %s4624 = scalar_lea.vmem [#allocation2], 256
        %v4625 = vld [vmem:[%s4624] sm:$0xf]
        %v4626 = vld [vmem:[%s4624 + $0x10] sm:$0xf]
        %v4627 = vld [vmem:[%s4624 + $0x20] sm:$0xf]
        %v4628 = vld [vmem:[%s4624 + $0x30] sm:$0xf]
        %v4629 = vld [vmem:[%s4624 + $0x4] sm:$0xf]
        %v4630 = vld [vmem:[%s4624 + $0x14] sm:$0xf]
        %v4631 = vld [vmem:[%s4624 + $0x24] sm:$0xf]
        %v4632 = vld [vmem:[%s4624 + $0x34] sm:$0xf]
        %s4633 = scalar_lea.vmem %s3, 16
        %v4634 = vld [vmem:[%s4633] sm:$0x1]
        %v4635 = vld [vmem:[%s4633 + $0x1] sm:$0x1]
        %v4636 = vpack.c.bf16 %v4623, %v4623
        %v4641 = vunpack.c.l.b16 %v4629
        %v4642 = vunpack.c.l.b16 %v4630
        %v4643 = vunpack.c.l.b16 %v4631
        %v4644 = vunpack.c.l.b16 %v4632
        %v4645 = vpack.c.b16 %v4642, %v4641
        %v4646 = vpack.c.b16 %v4644, %v4643
        %v4650 = vsel %vm270, %v4636, 0
        %4652 = vmatprep.subr.bf16.mxu0 0
        %4653 = vmatpush1.bf16.msra.mxu0 0
        %4654 = vmatprep.subr.bf16.mxu0 0
        %4655 = vmatpush1.bf16.msra.mxu0 0
        %4656 = vmatprep.subr.bf16.mxu0 0
        %4657 = vmatpush1.bf16.msra.mxu0 0
        %4658 = vmatprep.subr.bf16.mxu0 0
        %4659 = vmatpush1.bf16.msra.mxu0 0
        %4660 = vmatprep.subr.bf16.mxu0 0
        %4661 = vmatpush1.bf16.msra.mxu0 0
        %4662 = vmatprep.subr.bf16.mxu0 0
        %4663 = vmatpush1.bf16.msra.mxu0 0
        %4664 = vmatprep.subr.bf16.mxu0 0
        %4665 = vmatpush1.bf16.msra.mxu0 %v4646
        %4666 = vmatprep.subr.bf16.mxu0 0
        %4667 = vmatpush1.bf16.msra.mxu0 %v4645
        %4668 = vmatprep.subr.bf16.mxu0 0
        %4669 = vmatpush2.bf16.msra.mxu0 0
        %4670 = vmatprep.subr.bf16.mxu0 0
        %4671 = vmatpush2.bf16.msra.mxu0 0
        %4672 = vmatprep.subr.bf16.mxu0 0
        %4673 = vmatpush2.bf16.msra.mxu0 0
        %4674 = vmatprep.subr.bf16.mxu0 0
        %4675 = vmatpush2.bf16.msra.mxu0 0
        %4676 = vmatprep.subr.bf16.mxu0 0
        %4677 = vmatpush2.bf16.msra.mxu0 0
        %4678 = vmatprep.subr.bf16.mxu0 0
        %4679 = vmatpush2.bf16.msra.mxu0 0
        %4680 = vmatprep.subr.bf16.mxu0 0
        %4681 = vmatpush2.bf16.msra.mxu0 0
        %4682 = vmatprep.subr.bf16.mxu0 0
        %4683 = vmatpush2.bf16.msra.mxu0 0
        %4684 = vmatprep.mubr.bf16.mxu0 0
        %4685 = vmatmul.mubr.bf16.gmra.mxu0 %v4650
        %v4686 = vpop.f32.mrf.mxu0
        %v4687 = vadd.f32 %v4634, %v4686
        %v4688 = vpop.f32.mrf.mxu0
        %v4689 = vpop.f32.mrf.mxu0
        %v4690 = vpop.f32.mrf.mxu0
        %4691 = vdwg.mxu0
        %v4692 = vxor.u32 %v4687, 2147483648
        %v4693 = vmul.f32 %v4692, 1.442695
        %v4694 = vpow.pop %v4693
        %v4695 = vadd.f32 %v4694, 1.0
        %v4696 = vrcp.pop %v4695
        %v4697 = vmul.f32 1.0, %v4696
        %v4698 = vpack.c.bf16 %v4697, %v4697
        %v4703 = vunpack.c.l.b16 %v4625
        %v4704 = vunpack.c.l.b16 %v4626
        %v4705 = vunpack.c.l.b16 %v4627
        %v4706 = vunpack.c.l.b16 %v4628
        %v4707 = vpack.c.b16 %v4704, %v4703
        %v4708 = vpack.c.b16 %v4706, %v4705
        %v4712 = vsel %vm270, %v4698, 0
        %4714 = vmatprep.subr.bf16.mxu0 0
        %4715 = vmatpush1.bf16.msra.mxu0 0
        %4716 = vmatprep.subr.bf16.mxu0 0
        %4717 = vmatpush1.bf16.msra.mxu0 0
        %4718 = vmatprep.subr.bf16.mxu0 0
        %4719 = vmatpush1.bf16.msra.mxu0 0
        %4720 = vmatprep.subr.bf16.mxu0 0
        %4721 = vmatpush1.bf16.msra.mxu0 0
        %4722 = vmatprep.subr.bf16.mxu0 0
        %4723 = vmatpush1.bf16.msra.mxu0 0
        %4724 = vmatprep.subr.bf16.mxu0 0
        %4725 = vmatpush1.bf16.msra.mxu0 0
        %4726 = vmatprep.subr.bf16.mxu0 0
        %4727 = vmatpush1.bf16.msra.mxu0 %v4708
        %4728 = vmatprep.subr.bf16.mxu0 0
        %4729 = vmatpush1.bf16.msra.mxu0 %v4707
        %4730 = vmatprep.subr.bf16.mxu0 0
        %4731 = vmatpush2.bf16.msra.mxu0 0
        %4732 = vmatprep.subr.bf16.mxu0 0
        %4733 = vmatpush2.bf16.msra.mxu0 0
        %4734 = vmatprep.subr.bf16.mxu0 0
        %4735 = vmatpush2.bf16.msra.mxu0 0
        %4736 = vmatprep.subr.bf16.mxu0 0
        %4737 = vmatpush2.bf16.msra.mxu0 0
        %4738 = vmatprep.subr.bf16.mxu0 0
        %4739 = vmatpush2.bf16.msra.mxu0 0
        %4740 = vmatprep.subr.bf16.mxu0 0
        %4741 = vmatpush2.bf16.msra.mxu0 0
        %4742 = vmatprep.subr.bf16.mxu0 0
        %4743 = vmatpush2.bf16.msra.mxu0 0
        %4744 = vmatprep.subr.bf16.mxu0 0
        %4745 = vmatpush2.bf16.msra.mxu0 0
        %4746 = vmatprep.mubr.bf16.mxu0 0
        %4747 = vmatmul.mubr.bf16.gmra.mxu0 %v4712
        %v4748 = vpop.f32.mrf.mxu0
        %v4749 = vadd.f32 %v4635, %v4748
        %v4750 = vpop.f32.mrf.mxu0
        %v4751 = vpop.f32.mrf.mxu0
        %v4752 = vpop.f32.mrf.mxu0
        %4753 = vdwg.mxu0
        %v4754 = vlaneseq
        %v4755 = vshrl.u32 %v4754, 7
        %v4756 = vsub.s32 0, %v4755
        %v4757 = vrot.slane %v4749, %v4756
        %4758 = vst [vmem:[%s221] sm:$0xff] %v4757
        %p4759 = scmp.lt.s32.totalorder %s16, 1
        %s4760 = scalar_select %p4759, %s16, 1
        %s4761 = smul.addr %s4760, 8
        %s4762 = scalar_lea.vmem %s4, %s4761
        // Predicated region
        $region41: #{flaubert_class_forward.1} parent=35 // pred_check
          %p4763 = pneg %p128
        $region42: #{flaubert_class_forward.1} parent=35 // pred_check_branch
          %4765 = sbr.rel (%p4763) target = $region44
        $region43: #{flaubert_class_forward.1} parent=35 // pred_region
          _
        $region44: #{flaubert_class_forward.1} parent=35 // pred_fallthru
          _
      $region36: #{flaubert_class_forward.1} parent=5 // pred_fallthru
        _
      %p4766 = scmp.le.s32.totalorder 2, %s11
      // Predicated region
      $region45: #{flaubert_class_forward.1} parent=5 // pred_check
        %p4767 = pneg %p4766
      $region46: #{flaubert_class_forward.1} parent=5 // pred_check_branch
        %4769 = sbr.rel (%p4767) target = $region48
      $region47: #{flaubert_class_forward.1} parent=5 // pred_region
        %s4770 = ssub.s32 %s11, 2
        // Predicated region
        $region49: #{flaubert_class_forward.1} parent=47 // pred_check
          %p4771 = pneg %p134
        $region50: #{flaubert_class_forward.1} parent=47 // pred_check_branch
          %4773 = sbr.rel (%p4771) target = $region52
        $region51: #{flaubert_class_forward.1} parent=47 // pred_region
          %p4774 = scmp.lt.s32.totalorder %s17, 1
          %s4775 = scalar_select %p4774, %s17, 1
          %s4776 = smul.addr %s4775, 8
          %s4777 = scalar_lea.vmem %s4, %s4776
        $region52: #{flaubert_class_forward.1} parent=47 // pred_fallthru
          _
      $region48: #{flaubert_class_forward.1} parent=5 // pred_fallthru
        _
    $region6: #{flaubert_class_forward.1} parent=1 // loop_footer
      %s15 = sadd.s32 1, %s11
    $region7: #{flaubert_class_forward.1} parent=1 // loop_footer_branch
      %10 = sbr.rel target = $region3
    $region8: #{flaubert_class_forward.1} parent=1 // loop_exit
      _
    %4778 = vsyncpa [#allocation3], 1
    %s4779 = scalar_lea.sflag [#allocation3], 1
    %4780 = vsyncpa %s4779, 1

</llo_original>
